<compile_context>
chip_gen: v7x
topology: tpu7x:2x2x1
jax: 0.10.0
libtpu: 0.0.40
codegen_flags: <defaults>
</compile_context>

<pallas_src>
import math

import jax
import jax.numpy as jnp
from jax import lax
from jax.experimental import pallas as pl
from jax.experimental.pallas import tpu as pltpu
import numpy as np

K = 9            # kernel_size
P = K // 2       # padding
BN_EPS = 1e-5
LANE = 128
NCHAIN = 3       # independent accumulator chains per lane tile in the tap loop


# --------------------------------- kernel ------------------------------------

def _make_kernel(N, C, S):
    """Build the kernel for static dims N (batch), C (bn_ch), S (spatial)."""
    NC = N * C
    O = S + 2 * P                      # 24 : padded spatial extent
    SO = S * O                         # 384: output frame width (S rows, stride O)
    OO = O * O                         # 576: flattened padded frame (stride O)
    FRAME = pl.cdiv(OO, LANE) * LANE   # 640: lane-tile aligned container
    NT = SO // LANE                    # 3  : lane tiles in the output frame
    assert SO % LANE == 0
    GELU_C = math.sqrt(2.0 / math.pi)

    def kernel(xflat_ref, xframe_ref, bfused_ref, biasf_ref,
               mask1_ref, mask2_ref, mask3_ref, w3b_ref, pp_ref, o_ref):
        f32 = jnp.float32
        pp = pp_ref[...]                          # (NC, 6): g1, be1, g2, be2, g3, be3

        def channel_sum(v):
            # v: (NC, 1) per-row sums -> per-channel sums (rows n*C+c share channel c).
            # Summing over all cyclic sublane shifts by multiples of C is
            # direction-agnostic, so no transposes / tiny matmuls needed.
            out = v
            for t in range(1, N):
                out = out + pltpu.roll(v, t * C, axis=0)
            return out

        def bn_scale_shift(t, count, gamma, beta, mask=None):
            # nn.BatchNorm2d training mode: batch stats, biased variance.
            # One-pass stats: sum and sum-of-squares, var = E[x^2] - mean^2.
            tm = t if mask is None else t * mask
            s1 = channel_sum(jnp.sum(tm, axis=1, keepdims=True))
            s2 = channel_sum(jnp.sum(tm * tm, axis=1, keepdims=True))
            inv = 1.0 / float(count)
            mean = s1 * inv
            var = s2 * inv - mean * mean
            scale = gamma * lax.rsqrt(var + BN_EPS)
            shift = beta - mean * scale
            return scale, shift

        # ---- branches 1 & 2 fused: ONE single-pass bf16 MXU matmul whose
        #      structured weight applies both 1x1 convs AND drops each result
        #      directly onto its zero-padded position in the flat (24x24) frame.
        t12 = jnp.dot(xflat_ref[...], bfused_ref[...],
                      preferred_element_type=f32) + biasf_ref[...]   # (NC, 2*FRAME) f32
        t1 = t12[:, :FRAME]                       # branch 1 (128-aligned slice)
        t2 = t12[:, FRAME:]                       # branch 2

        sc1, sh1 = bn_scale_shift(t1, N * S * O, pp[:, 0:1], pp[:, 1:2])
        pad1 = t1 * sc1 + sh1 * mask1_ref[...]    # pad lanes stay exactly zero
        sc2, sh2 = bn_scale_shift(t2, N * O * S, pp[:, 2:3], pp[:, 3:4])
        pad2 = t2 * sc2 + sh2 * mask2_ref[...]

        # F.pad(branch1,(0,0,P,P)) + F.pad(branch2,(P,P)) in the flat frame
        # (lane m = i*O + j holds padded[n, c, i, j]); kept in registers.
        padded = pad1 + pad2                      # (NC, FRAME)

        # ---- depthwise KxK conv (groups = C, valid): 81 taps.
        #   * row band a: lane-roll of the full frame (XLU)          [see NOTE]
        #   * col shift b: lane-roll of the (NC, SO) band (XLU)
        #   * tap weight: one aligned (NC,128) vld from the lane-replicated
        #     table, reused for all 3 lane tiles -> no lane broadcasts
        #   * NT x NCHAIN independent accumulator chains, tree-summed.
        # NOTE: reading row bands from a VMEM scratch would trade XLU vrot for
        # lane-UNALIGNED loads (a*O is not a multiple of 128); keep the rolls
        # unless a bundle dump shows the XLU slot saturating.
        accs = [[None] * NCHAIN for _ in range(NT)]
        for a in range(K):
            band = (padded[:, :SO] if a == 0
                    else pltpu.roll(padded, FRAME - a * O, axis=1)[:, :SO])
            for b in range(K):
                t = a * K + b
                sh = band if b == 0 else pltpu.roll(band, SO - b, axis=1)
                tap = w3b_ref[:, t * LANE:(t + 1) * LANE]            # (NC, 128)
                ch = t % NCHAIN
                for lt in range(NT):
                    term = tap * sh[:, lt * LANE:(lt + 1) * LANE]
                    accs[lt][ch] = (term if accs[lt][ch] is None
                                    else accs[lt][ch] + term)
        tiles = []
        for lt in range(NT):
            s = accs[lt][0]
            for ch in range(1, NCHAIN):
                s = s + accs[lt][ch]
            tiles.append(s)
        acc = jnp.concatenate(tiles, axis=1)      # (NC, SO), lane-aligned concat
        # conv3 bias b3 omitted on purpose: a per-channel constant is removed
        # exactly by training-mode BN3's mean subtraction (output unchanged).

        # ---- BN3 + shortcut + GELU on the lane-dense (NC, S*O) output frame.
        # (columns w >= S are junk and masked out of the BN3 statistics.)
        sc3, sh3 = bn_scale_shift(acc, N * S * S, pp[:, 4:5], pp[:, 5:6],
                                  mask=mask3_ref[...])
        y = acc * sc3 + sh3 + xframe_ref[...]
        # tanh GELU (EUP); |err| vs exact erf-GELU < 1e-3, well inside tolerance.
        o_ref[...] = 0.5 * y * (1.0 + jnp.tanh(GELU_C * (y + 0.044715 * (y * y * y))))

    return kernel, O, SO, OO, FRAME


# ------------------------- parameter glue (hoisted) ---------------------------

def prepare_params(params, N, S):
    """Build kernel-side constant operands from the module parameters.

    Hoisted out of the per-call path: call once per weight update (inference:
    once).  This removes the per-call HBM write that materialised B1/B2 in the
    previous version, and bf16 storage halves the dominant weight DMA.
    """
    w1, b1, w2, b2, w3, b3, g1, be1, g2, be2, g3, be3 = params
    del b3  # cancels exactly under training-mode BN3 (see kernel comment)
    C = w3.shape[0]
    O = S + 2 * P
    OO = O * O
    SO = S * O
    FRAME = pl.cdiv(OO, LANE) * LANE
    f32 = jnp.float32

    # e[h, i] = 1 iff i == h + P : embeds a length-S index into the padded range.
    e = jnp.eye(S, O, k=P, dtype=f32)
    # B1[(h,w), i*O+o] = W1[o,w] * delta(i, h+P) : 1x1 conv over W + row padding.
    B1 = jnp.einsum('ow,hi->hwio', w1.astype(f32), e).reshape(S * S, OO)
    # B2[(h,w), o*O+j] = W2[o,h] * delta(j, w+P) : 1x1 conv over H + col padding.
    B2 = jnp.einsum('oh,wj->hwoj', w2.astype(f32), e).reshape(S * S, OO)
    pad_cols = ((0, 0), (0, FRAME - OO))
    B1 = jnp.pad(B1, pad_cols)
    B2 = jnp.pad(B2, pad_cols)
    # Fused, bf16 structured weight: one MXU push/drain, half the DMA bytes.
    BF = jnp.concatenate([B1, B2], axis=1).astype(jnp.bfloat16)      # (S*S, 2*FRAME)

    rowmask = jnp.zeros((O, 1), f32).at[P:P + S].set(1.0)      # valid padded rows
    colmask = jnp.zeros((1, O), f32).at[:, P:P + S].set(1.0)   # valid padded cols
    bias1 = jnp.pad((rowmask * b1[None, :]).reshape(1, OO), pad_cols)
    bias2 = jnp.pad((b2[:, None] * colmask).reshape(1, OO), pad_cols)
    biasF = jnp.concatenate([bias1, bias2], axis=1)                  # (1, 2*FRAME) f32
    mask1 = jnp.pad(jnp.broadcast_to(rowmask, (O, O)).reshape(1, OO), pad_cols)
    mask2 = jnp.pad(jnp.broadcast_to(colmask, (O, O)).reshape(1, OO), pad_cols)
    mask3 = jnp.pad(jnp.ones((S, S), f32), ((0, 0), (0, O - S))).reshape(1, SO)

    # Lane-replicated tap table: columns [t*128,(t+1)*128) hold tap t of that
    # row's channel replicated across 128 lanes -> one aligned vld per tap
    # inside the kernel, zero lane broadcasts.  Kept f32 (only ~324 KiB).
    w3_rows = jnp.tile(w3.reshape(C, K * K).astype(f32), (N, 1))     # (NC, 81)
    w3b = jnp.repeat(w3_rows, LANE, axis=1)                          # (NC, 81*128)

    def per_row(p):                                  # per-channel -> per-(n,c) row
        return jnp.tile(p.reshape(C, 1).astype(f32), (N, 1))

    pp = jnp.concatenate([per_row(g1), per_row(be1), per_row(g2), per_row(be2),
                          per_row(g3), per_row(be3)], axis=1)        # (NC, 6)

    return (BF, biasF, mask1, mask2, mask3, w3b, pp)


# --------------------------------- wrapper -----------------------------------

def shuffle_plug_padding2_forward(x, prepped):
    """x: (N, bn_ch, S, S) float32 with S == in_ch1 == out_ch1."""
    BF, biasF, mask1, mask2, mask3, w3b, pp = prepped
    N, C, S, S2 = x.shape
    assert S == S2
    kernel, O, SO, OO, FRAME = _make_kernel(N, C, S)
    NC = N * C

    # x-side operands: bf16 matmul operand + f32 lane-dense shortcut frame.
    x_flat = x.reshape(NC, S * S).astype(jnp.bfloat16)
    x_frame = jnp.pad(x, ((0, 0), (0, 0), (0, 0), (0, O - S))).reshape(NC, SO)

    vspec = pl.BlockSpec(memory_space=pltpu.MemorySpace.VMEM)
    # NOTE: gridless on purpose at these shapes (~1 MiB VMEM total).  A
    # channel-split grid with dimension_semantics=("parallel",) is exact (BN
    # stats are per-channel) but only pays off once N*C per tile stays >= 8
    # sublanes; with N*C == 8 it would halve sublane density and double vector
    # work on single-core chips.  If N/C scale up, add grid=(C//Ct,) and budget
    # double-buffered tiles against v7x's 64 MiB VMEM.
    out = pl.pallas_call(
        kernel,
        out_shape=jax.ShapeDtypeStruct((NC, SO), jnp.float32),
        in_specs=[vspec] * 9,
        out_specs=vspec,
    )(x_flat, x_frame, BF, biasF, mask1, mask2, mask3, w3b, pp)

    return out.reshape(N, C, S, O)[:, :, :, :S]


# ------------------------------ pure-JAX reference ----------------------------

def reference_forward(x, params):
    w1, b1, w2, b2, w3, b3, g1, be1, g2, be2, g3, be3 = params

    def bn(t, g, b):
        mu = jnp.mean(t, axis=(0, 2, 3), keepdims=True)
        var = jnp.mean((t - mu) ** 2, axis=(0, 2, 3), keepdims=True)
        return g.reshape(1, -1, 1, 1) * (t - mu) * lax.rsqrt(var + BN_EPS) + b.reshape(1, -1, 1, 1)

    t1 = jnp.einsum('nchw,ow->ncho', x, w1, precision=lax.Precision.HIGHEST) + b1[None, None, None, :]
    pad1 = jnp.pad(bn(t1, g1, be1), ((0, 0), (0, 0), (P, P), (0, 0)))
    t2 = jnp.einsum('nchw,oh->ncow', x, w2, precision=lax.Precision.HIGHEST) + b2[None, None, :, None]
    pad2 = jnp.pad(bn(t2, g2, be2), ((0, 0), (0, 0), (0, 0), (P, P)))
    s = pad1 + pad2
    dw = lax.conv_general_dilated(
        s, w3[:, None, :, :], window_strides=(1, 1), padding='VALID',
        dimension_numbers=('NCHW', 'OIHW', 'NCHW'),
        feature_group_count=s.shape[1], precision=lax.Precision.HIGHEST)
    dw = dw + b3[None, :, None, None]
    y = bn(dw, g3, be3) + x
    return jax.nn.gelu(y, approximate=False)


# ----------------------------------- main -------------------------------------

if __name__ == "__main__":
    # module shape constraints: in_ch1 == out_ch1 == spatial size, channels == bn_ch
    N, BN_CH, S = 2, 4, 16            # shuffle_plug_padding2(16, 16, bn_ch=4, kernel_size=9)
    O = S + 2 * P

    key = jax.random.PRNGKey(0)
    ks = jax.random.split(key, 13)
    x = jax.random.normal(ks[0], (N, BN_CH, S, S), jnp.float32)
    w1 = 0.1 * jax.random.normal(ks[1], (O, S), jnp.float32)         # conv1 weight (1x1)
    b1 = 0.1 * jax.random.normal(ks[2], (O,), jnp.float32)
    w2 = 0.1 * jax.random.normal(ks[3], (O, S), jnp.float32)         # conv2 weight (1x1)
    b2 = 0.1 * jax.random.normal(ks[4], (O,), jnp.float32)
    w3 = 0.1 * jax.random.normal(ks[5], (BN_CH, K, K), jnp.float32)  # conv3 depthwise weight
    b3 = 0.1 * jax.random.normal(ks[6], (BN_CH,), jnp.float32)
    g1 = 1.0 + 0.1 * jax.random.normal(ks[7], (BN_CH,), jnp.float32)
    be1 = 0.1 * jax.random.normal(ks[8], (BN_CH,), jnp.float32)
    g2 = 1.0 + 0.1 * jax.random.normal(ks[9], (BN_CH,), jnp.float32)
    be2 = 0.1 * jax.random.normal(ks[10], (BN_CH,), jnp.float32)
    g3 = 1.0 + 0.1 * jax.random.normal(ks[11], (BN_CH,), jnp.float32)
    be3 = 0.1 * jax.random.normal(ks[12], (BN_CH,), jnp.float32)
    params = (w1, b1, w2, b2, w3, b3, g1, be1, g2, be2, g3, be3)

    # One-time weight-side prep (hoisted), then the per-call kernel.
    prepped = prepare_params(params, N, S)
    fwd = jax.jit(shuffle_plug_padding2_forward)
    out = jax.block_until_ready(fwd(x, prepped))
    ref = jax.block_until_ready(reference_forward(x, params))

    assert out.shape == (N, BN_CH, S, S)
    np.testing.assert_allclose(np.asarray(out), np.asarray(ref), rtol=2e-2, atol=2e-2)
    print("KERNEL_OK")
</pallas_src>

<mosaic_0001>
module attributes {stable_mosaic.version = 11 : i64} {
  func.func @kernel(%arg0: memref<8x256xbf16, #tpu.memory_space<vmem>>, %arg1: memref<8x384xf32, #tpu.memory_space<vmem>>, %arg2: memref<256x1280xbf16, #tpu.memory_space<vmem>>, %arg3: memref<1x1280xf32, #tpu.memory_space<vmem>>, %arg4: memref<1x640xf32, #tpu.memory_space<vmem>>, %arg5: memref<1x640xf32, #tpu.memory_space<vmem>>, %arg6: memref<1x384xf32, #tpu.memory_space<vmem>>, %arg7: memref<8x10368xf32, #tpu.memory_space<vmem>>, %arg8: memref<8x6xf32, #tpu.memory_space<vmem>>, %arg9: memref<8x384xf32, #tpu.memory_space<vmem>>) attributes {dimension_semantics = [], scalar_prefetch = 0 : i64, scratch_operands = 0 : i64, tpu.core_type = #tpu.core_type<tc>} {
    %c0 = arith.constant 0 : index
    %c0_0 = arith.constant 0 : index
    %0 = vector.load %arg8[%c0, %c0_0] : memref<8x6xf32, #tpu.memory_space<vmem>>, vector<8x6xf32>
    %c0_1 = arith.constant 0 : index
    %c0_2 = arith.constant 0 : index
    %1 = vector.load %arg0[%c0_1, %c0_2] : memref<8x256xbf16, #tpu.memory_space<vmem>>, vector<8x256xbf16>
    %c0_3 = arith.constant 0 : index
    %c0_4 = arith.constant 0 : index
    %2 = vector.load %arg2[%c0_3, %c0_4] : memref<256x1280xbf16, #tpu.memory_space<vmem>>, vector<256x1280xbf16>
    %cst = arith.constant dense<0.000000e+00> : vector<8x1280xf32>
    %3 = tpu.matmul %1, %2, %cst {dimension_numbers = #tpu.dot_dimension_numbers<[1], [0], [0], [1], [0, 0, 1, 1], [], []>} : vector<8x256xbf16>, vector<256x1280xbf16>, vector<8x1280xf32> -> vector<8x1280xf32>
    %c0_5 = arith.constant 0 : index
    %c0_6 = arith.constant 0 : index
    %4 = vector.load %arg3[%c0_5, %c0_6] : memref<1x1280xf32, #tpu.memory_space<vmem>>, vector<1x1280xf32>
    %5 = vector.broadcast %4 : vector<1x1280xf32> to vector<8x1280xf32>
    %6 = arith.addf %3, %5 : vector<8x1280xf32>
    %7 = vector.extract_strided_slice %6 {offsets = [0, 0], sizes = [8, 640], strides = [1, 1]} : vector<8x1280xf32> to vector<8x640xf32>
    %8 = vector.extract_strided_slice %6 {offsets = [0, 640], sizes = [8, 640], strides = [1, 1]} : vector<8x1280xf32> to vector<8x640xf32>
    %9 = vector.extract_strided_slice %0 {offsets = [0, 0], sizes = [8, 1], strides = [1, 1]} : vector<8x6xf32> to vector<8x1xf32>
    %10 = vector.extract_strided_slice %0 {offsets = [0, 1], sizes = [8, 1], strides = [1, 1]} : vector<8x6xf32> to vector<8x1xf32>
    %cst_7 = arith.constant dense<0.000000e+00> : vector<8xf32>
    %11 = vector.multi_reduction <add>, %7, %cst_7 [1] : vector<8x640xf32> to vector<8xf32>
    %12 = vector.shape_cast %11 : vector<8xf32> to vector<8x1xf32>
    %c4_i32 = arith.constant 4 : i32
    %13 = tpu.dynamic_rotate %12 by %c4_i32 dim 0 : vector<8x1xf32>, i32 -> vector<8x1xf32>
    %14 = arith.addf %12, %13 : vector<8x1xf32>
    %15 = arith.mulf %7, %7 : vector<8x640xf32>
    %cst_8 = arith.constant dense<0.000000e+00> : vector<8xf32>
    %16 = vector.multi_reduction <add>, %15, %cst_8 [1] : vector<8x640xf32> to vector<8xf32>
    %17 = vector.shape_cast %16 : vector<8xf32> to vector<8x1xf32>
    %c4_i32_9 = arith.constant 4 : i32
    %18 = tpu.dynamic_rotate %17 by %c4_i32_9 dim 0 : vector<8x1xf32>, i32 -> vector<8x1xf32>
    %19 = arith.addf %17, %18 : vector<8x1xf32>
    %cst_10 = arith.constant 0.00130208337 : f32
    %20 = vector.broadcast %cst_10 : f32 to vector<8x1xf32>
    %21 = arith.mulf %14, %20 : vector<8x1xf32>
    %cst_11 = arith.constant 0.00130208337 : f32
    %22 = vector.broadcast %cst_11 : f32 to vector<8x1xf32>
    %23 = arith.mulf %19, %22 : vector<8x1xf32>
    %24 = arith.mulf %21, %21 : vector<8x1xf32>
    %25 = arith.subf %23, %24 : vector<8x1xf32>
    %cst_12 = arith.constant 9.99999974E-6 : f32
    %26 = vector.broadcast %cst_12 : f32 to vector<8x1xf32>
    %27 = arith.addf %25, %26 : vector<8x1xf32>
    %28 = math.rsqrt %27 : vector<8x1xf32>
    %29 = arith.mulf %9, %28 : vector<8x1xf32>
    %30 = arith.mulf %21, %29 : vector<8x1xf32>
    %31 = arith.subf %10, %30 : vector<8x1xf32>
    %32 = vector.broadcast %29 : vector<8x1xf32> to vector<8x640xf32>
    %33 = arith.mulf %7, %32 : vector<8x640xf32>
    %c0_13 = arith.constant 0 : index
    %c0_14 = arith.constant 0 : index
    %34 = vector.load %arg4[%c0_13, %c0_14] : memref<1x640xf32, #tpu.memory_space<vmem>>, vector<1x640xf32>
    %35 = vector.broadcast %31 : vector<8x1xf32> to vector<8x640xf32>
    %36 = vector.broadcast %34 : vector<1x640xf32> to vector<8x640xf32>
    %37 = arith.mulf %35, %36 : vector<8x640xf32>
    %38 = arith.addf %33, %37 : vector<8x640xf32>
    %39 = vector.extract_strided_slice %0 {offsets = [0, 2], sizes = [8, 1], strides = [1, 1]} : vector<8x6xf32> to vector<8x1xf32>
    %40 = vector.extract_strided_slice %0 {offsets = [0, 3], sizes = [8, 1], strides = [1, 1]} : vector<8x6xf32> to vector<8x1xf32>
    %cst_15 = arith.constant dense<0.000000e+00> : vector<8xf32>
    %41 = vector.multi_reduction <add>, %8, %cst_15 [1] : vector<8x640xf32> to vector<8xf32>
    %42 = vector.shape_cast %41 : vector<8xf32> to vector<8x1xf32>
    %c4_i32_16 = arith.constant 4 : i32
    %43 = tpu.dynamic_rotate %42 by %c4_i32_16 dim 0 : vector<8x1xf32>, i32 -> vector<8x1xf32>
    %44 = arith.addf %42, %43 : vector<8x1xf32>
    %45 = arith.mulf %8, %8 : vector<8x640xf32>
    %cst_17 = arith.constant dense<0.000000e+00> : vector<8xf32>
    %46 = vector.multi_reduction <add>, %45, %cst_17 [1] : vector<8x640xf32> to vector<8xf32>
    %47 = vector.shape_cast %46 : vector<8xf32> to vector<8x1xf32>
    %c4_i32_18 = arith.constant 4 : i32
    %48 = tpu.dynamic_rotate %47 by %c4_i32_18 dim 0 : vector<8x1xf32>, i32 -> vector<8x1xf32>
    %49 = arith.addf %47, %48 : vector<8x1xf32>
    %cst_19 = arith.constant 0.00130208337 : f32
    %50 = vector.broadcast %cst_19 : f32 to vector<8x1xf32>
    %51 = arith.mulf %44, %50 : vector<8x1xf32>
    %cst_20 = arith.constant 0.00130208337 : f32
    %52 = vector.broadcast %cst_20 : f32 to vector<8x1xf32>
    %53 = arith.mulf %49, %52 : vector<8x1xf32>
    %54 = arith.mulf %51, %51 : vector<8x1xf32>
    %55 = arith.subf %53, %54 : vector<8x1xf32>
    %cst_21 = arith.constant 9.99999974E-6 : f32
    %56 = vector.broadcast %cst_21 : f32 to vector<8x1xf32>
    %57 = arith.addf %55, %56 : vector<8x1xf32>
    %58 = math.rsqrt %57 : vector<8x1xf32>
    %59 = arith.mulf %39, %58 : vector<8x1xf32>
    %60 = arith.mulf %51, %59 : vector<8x1xf32>
    %61 = arith.subf %40, %60 : vector<8x1xf32>
    %62 = vector.broadcast %59 : vector<8x1xf32> to vector<8x640xf32>
    %63 = arith.mulf %8, %62 : vector<8x640xf32>
    %c0_22 = arith.constant 0 : index
    %c0_23 = arith.constant 0 : index
    %64 = vector.load %arg5[%c0_22, %c0_23] : memref<1x640xf32, #tpu.memory_space<vmem>>, vector<1x640xf32>
    %65 = vector.broadcast %61 : vector<8x1xf32> to vector<8x640xf32>
    %66 = vector.broadcast %64 : vector<1x640xf32> to vector<8x640xf32>
    %67 = arith.mulf %65, %66 : vector<8x640xf32>
    %68 = arith.addf %63, %67 : vector<8x640xf32>
    %69 = arith.addf %38, %68 : vector<8x640xf32>
    %70 = vector.extract_strided_slice %69 {offsets = [0, 0], sizes = [8, 384], strides = [1, 1]} : vector<8x640xf32> to vector<8x384xf32>
    %c0_24 = arith.constant 0 : index
    %c0_25 = arith.constant 0 : index
    %71 = vector.load %arg7[%c0_24, %c0_25] : memref<8x10368xf32, #tpu.memory_space<vmem>>, vector<8x128xf32>
    %72 = vector.extract_strided_slice %70 {offsets = [0, 0], sizes = [8, 128], strides = [1, 1]} : vector<8x384xf32> to vector<8x128xf32>
    %73 = arith.mulf %71, %72 : vector<8x128xf32>
    %74 = vector.extract_strided_slice %70 {offsets = [0, 128], sizes = [8, 128], strides = [1, 1]} : vector<8x384xf32> to vector<8x128xf32>
    %75 = arith.mulf %71, %74 : vector<8x128xf32>
    %76 = vector.extract_strided_slice %70 {offsets = [0, 256], sizes = [8, 128], strides = [1, 1]} : vector<8x384xf32> to vector<8x128xf32>
    %77 = arith.mulf %71, %76 : vector<8x128xf32>
    %c383_i32 = arith.constant 383 : i32
    %78 = tpu.dynamic_rotate %70 by %c383_i32 dim 1 : vector<8x384xf32>, i32 -> vector<8x384xf32>
    %c0_26 = arith.constant 0 : index
    %c128 = arith.constant 128 : index
    %79 = vector.load %arg7[%c0_26, %c128] : memref<8x10368xf32, #tpu.memory_space<vmem>>, vector<8x128xf32>
    %80 = vector.extract_strided_slice %78 {offsets = [0, 0], sizes = [8, 128], strides = [1, 1]} : vector<8x384xf32> to vector<8x128xf32>
    %81 = arith.mulf %79, %80 : vector<8x128xf32>
    %82 = vector.extract_strided_slice %78 {offsets = [0, 128], sizes = [8, 128], strides = [1, 1]} : vector<8x384xf32> to vector<8x128xf32>
    %83 = arith.mulf %79, %82 : vector<8x128xf32>
    %84 = vector.extract_strided_slice %78 {offsets = [0, 256], sizes = [8, 128], strides = [1, 1]} : vector<8x384xf32> to vector<8x128xf32>
    %85 = arith.mulf %79, %84 : vector<8x128xf32>
    %c382_i32 = arith.constant 382 : i32
    %86 = tpu.dynamic_rotate %70 by %c382_i32 dim 1 : vector<8x384xf32>, i32 -> vector<8x384xf32>
    %c0_27 = arith.constant 0 : index
    %c256 = arith.constant 256 : index
    %87 = vector.load %arg7[%c0_27, %c256] : memref<8x10368xf32, #tpu.memory_space<vmem>>, vector<8x128xf32>
    %88 = vector.extract_strided_slice %86 {offsets = [0, 0], sizes = [8, 128], strides = [1, 1]} : vector<8x384xf32> to vector<8x128xf32>
    %89 = arith.mulf %87, %88 : vector<8x128xf32>
    %90 = vector.extract_strided_slice %86 {offsets = [0, 128], sizes = [8, 128], strides = [1, 1]} : vector<8x384xf32> to vector<8x128xf32>
    %91 = arith.mulf %87, %90 : vector<8x128xf32>
    %92 = vector.extract_strided_slice %86 {offsets = [0, 256], sizes = [8, 128], strides = [1, 1]} : vector<8x384xf32> to vector<8x128xf32>
    %93 = arith.mulf %87, %92 : vector<8x128xf32>
    %c381_i32 = arith.constant 381 : i32
    %94 = tpu.dynamic_rotate %70 by %c381_i32 dim 1 : vector<8x384xf32>, i32 -> vector<8x384xf32>
    %c0_28 = arith.constant 0 : index
    %c384 = arith.constant 384 : index
    %95 = vector.load %arg7[%c0_28, %c384] : memref<8x10368xf32, #tpu.memory_space<vmem>>, vector<8x128xf32>
    %96 = vector.extract_strided_slice %94 {offsets = [0, 0], sizes = [8, 128], strides = [1, 1]} : vector<8x384xf32> to vector<8x128xf32>
    %97 = arith.mulf %95, %96 : vector<8x128xf32>
    %98 = arith.addf %73, %97 : vector<8x128xf32>
    %99 = vector.extract_strided_slice %94 {offsets = [0, 128], sizes = [8, 128], strides = [1, 1]} : vector<8x384xf32> to vector<8x128xf32>
    %100 = arith.mulf %95, %99 : vector<8x128xf32>
    %101 = arith.addf %75, %100 : vector<8x128xf32>
    %102 = vector.extract_strided_slice %94 {offsets = [0, 256], sizes = [8, 128], strides = [1, 1]} : vector<8x384xf32> to vector<8x128xf32>
    %103 = arith.mulf %95, %102 : vector<8x128xf32>
    %104 = arith.addf %77, %103 : vector<8x128xf32>
    %c380_i32 = arith.constant 380 : i32
    %105 = tpu.dynamic_rotate %70 by %c380_i32 dim 1 : vector<8x384xf32>, i32 -> vector<8x384xf32>
    %c0_29 = arith.constant 0 : index
    %c512 = arith.constant 512 : index
    %106 = vector.load %arg7[%c0_29, %c512] : memref<8x10368xf32, #tpu.memory_space<vmem>>, vector<8x128xf32>
    %107 = vector.extract_strided_slice %105 {offsets = [0, 0], sizes = [8, 128], strides = [1, 1]} : vector<8x384xf32> to vector<8x128xf32>
    %108 = arith.mulf %106, %107 : vector<8x128xf32>
    %109 = arith.addf %81, %108 : vector<8x128xf32>
    %110 = vector.extract_strided_slice %105 {offsets = [0, 128], sizes = [8, 128], strides = [1, 1]} : vector<8x384xf32> to vector<8x128xf32>
    %111 = arith.mulf %106, %110 : vector<8x128xf32>
    %112 = arith.addf %83, %111 : vector<8x128xf32>
    %113 = vector.extract_strided_slice %105 {offsets = [0, 256], sizes = [8, 128], strides = [1, 1]} : vector<8x384xf32> to vector<8x128xf32>
    %114 = arith.mulf %106, %113 : vector<8x128xf32>
    %115 = arith.addf %85, %114 : vector<8x128xf32>
    %c379_i32 = arith.constant 379 : i32
    %116 = tpu.dynamic_rotate %70 by %c379_i32 dim 1 : vector<8x384xf32>, i32 -> vector<8x384xf32>
    %c0_30 = arith.constant 0 : index
    %c640 = arith.constant 640 : index
    %117 = vector.load %arg7[%c0_30, %c640] : memref<8x10368xf32, #tpu.memory_space<vmem>>, vector<8x128xf32>
    %118 = vector.extract_strided_slice %116 {offsets = [0, 0], sizes = [8, 128], strides = [1, 1]} : vector<8x384xf32> to vector<8x128xf32>
    %119 = arith.mulf %117, %118 : vector<8x128xf32>
    %120 = arith.addf %89, %119 : vector<8x128xf32>
    %121 = vector.extract_strided_slice %116 {offsets = [0, 128], sizes = [8, 128], strides = [1, 1]} : vector<8x384xf32> to vector<8x128xf32>
    %122 = arith.mulf %117, %121 : vector<8x128xf32>
    %123 = arith.addf %91, %122 : vector<8x128xf32>
    %124 = vector.extract_strided_slice %116 {offsets = [0, 256], sizes = [8, 128], strides = [1, 1]} : vector<8x384xf32> to vector<8x128xf32>
    %125 = arith.mulf %117, %124 : vector<8x128xf32>
    %126 = arith.addf %93, %125 : vector<8x128xf32>
    %c378_i32 = arith.constant 378 : i32
    %127 = tpu.dynamic_rotate %70 by %c378_i32 dim 1 : vector<8x384xf32>, i32 -> vector<8x384xf32>
    %c0_31 = arith.constant 0 : index
    %c768 = arith.constant 768 : index
    %128 = vector.load %arg7[%c0_31, %c768] : memref<8x10368xf32, #tpu.memory_space<vmem>>, vector<8x128xf32>
    %129 = vector.extract_strided_slice %127 {offsets = [0, 0], sizes = [8, 128], strides = [1, 1]} : vector<8x384xf32> to vector<8x128xf32>
    %130 = arith.mulf %128, %129 : vector<8x128xf32>
    %131 = arith.addf %98, %130 : vector<8x128xf32>
    %132 = vector.extract_strided_slice %127 {offsets = [0, 128], sizes = [8, 128], strides = [1, 1]} : vector<8x384xf32> to vector<8x128xf32>
    %133 = arith.mulf %128, %132 : vector<8x128xf32>
    %134 = arith.addf %101, %133 : vector<8x128xf32>
    %135 = vector.extract_strided_slice %127 {offsets = [0, 256], sizes = [8, 128], strides = [1, 1]} : vector<8x384xf32> to vector<8x128xf32>
    %136 = arith.mulf %128, %135 : vector<8x128xf32>
    %137 = arith.addf %104, %136 : vector<8x128xf32>
    %c377_i32 = arith.constant 377 : i32
    %138 = tpu.dynamic_rotate %70 by %c377_i32 dim 1 : vector<8x384xf32>, i32 -> vector<8x384xf32>
    %c0_32 = arith.constant 0 : index
    %c896 = arith.constant 896 : index
    %139 = vector.load %arg7[%c0_32, %c896] : memref<8x10368xf32, #tpu.memory_space<vmem>>, vector<8x128xf32>
    %140 = vector.extract_strided_slice %138 {offsets = [0, 0], sizes = [8, 128], strides = [1, 1]} : vector<8x384xf32> to vector<8x128xf32>
    %141 = arith.mulf %139, %140 : vector<8x128xf32>
    %142 = arith.addf %109, %141 : vector<8x128xf32>
    %143 = vector.extract_strided_slice %138 {offsets = [0, 128], sizes = [8, 128], strides = [1, 1]} : vector<8x384xf32> to vector<8x128xf32>
    %144 = arith.mulf %139, %143 : vector<8x128xf32>
    %145 = arith.addf %112, %144 : vector<8x128xf32>
    %146 = vector.extract_strided_slice %138 {offsets = [0, 256], sizes = [8, 128], strides = [1, 1]} : vector<8x384xf32> to vector<8x128xf32>
    %147 = arith.mulf %139, %146 : vector<8x128xf32>
    %148 = arith.addf %115, %147 : vector<8x128xf32>
    %c376_i32 = arith.constant 376 : i32
    %149 = tpu.dynamic_rotate %70 by %c376_i32 dim 1 : vector<8x384xf32>, i32 -> vector<8x384xf32>
    %c0_33 = arith.constant 0 : index
    %c1024 = arith.constant 1024 : index
    %150 = vector.load %arg7[%c0_33, %c1024] : memref<8x10368xf32, #tpu.memory_space<vmem>>, vector<8x128xf32>
    %151 = vector.extract_strided_slice %149 {offsets = [0, 0], sizes = [8, 128], strides = [1, 1]} : vector<8x384xf32> to vector<8x128xf32>
    %152 = arith.mulf %150, %151 : vector<8x128xf32>
    %153 = arith.addf %120, %152 : vector<8x128xf32>
    %154 = vector.extract_strided_slice %149 {offsets = [0, 128], sizes = [8, 128], strides = [1, 1]} : vector<8x384xf32> to vector<8x128xf32>
    %155 = arith.mulf %150, %154 : vector<8x128xf32>
    %156 = arith.addf %123, %155 : vector<8x128xf32>
    %157 = vector.extract_strided_slice %149 {offsets = [0, 256], sizes = [8, 128], strides = [1, 1]} : vector<8x384xf32> to vector<8x128xf32>
    %158 = arith.mulf %150, %157 : vector<8x128xf32>
    %159 = arith.addf %126, %158 : vector<8x128xf32>
    %c616_i32 = arith.constant 616 : i32
    %160 = tpu.dynamic_rotate %69 by %c616_i32 dim 1 : vector<8x640xf32>, i32 -> vector<8x640xf32>
    %161 = vector.extract_strided_slice %160 {offsets = [0, 0], sizes = [8, 384], strides = [1, 1]} : vector<8x640xf32> to vector<8x384xf32>
    %c0_34 = arith.constant 0 : index
    %c1152 = arith.constant 1152 : index
    %162 = vector.load %arg7[%c0_34, %c1152] : memref<8x10368xf32, #tpu.memory_space<vmem>>, vector<8x128xf32>
    %163 = vector.extract_strided_slice %161 {offsets = [0, 0], sizes = [8, 128], strides = [1, 1]} : vector<8x384xf32> to vector<8x128xf32>
    %164 = arith.mulf %162, %163 : vector<8x128xf32>
    %165 = arith.addf %131, %164 : vector<8x128xf32>
    %166 = vector.extract_strided_slice %161 {offsets = [0, 128], sizes = [8, 128], strides = [1, 1]} : vector<8x384xf32> to vector<8x128xf32>
    %167 = arith.mulf %162, %166 : vector<8x128xf32>
    %168 = arith.addf %134, %167 : vector<8x128xf32>
    %169 = vector.extract_strided_slice %161 {offsets = [0, 256], sizes = [8, 128], strides = [1, 1]} : vector<8x384xf32> to vector<8x128xf32>
    %170 = arith.mulf %162, %169 : vector<8x128xf32>
    %171 = arith.addf %137, %170 : vector<8x128xf32>
    %c383_i32_35 = arith.constant 383 : i32
    %172 = tpu.dynamic_rotate %161 by %c383_i32_35 dim 1 : vector<8x384xf32>, i32 -> vector<8x384xf32>
    %c0_36 = arith.constant 0 : index
    %c1280 = arith.constant 1280 : index
    %173 = vector.load %arg7[%c0_36, %c1280] : memref<8x10368xf32, #tpu.memory_space<vmem>>, vector<8x128xf32>
    %174 = vector.extract_strided_slice %172 {offsets = [0, 0], sizes = [8, 128], strides = [1, 1]} : vector<8x384xf32> to vector<8x128xf32>
    %175 = arith.mulf %173, %174 : vector<8x128xf32>
    %176 = arith.addf %142, %175 : vector<8x128xf32>
    %177 = vector.extract_strided_slice %172 {offsets = [0, 128], sizes = [8, 128], strides = [1, 1]} : vector<8x384xf32> to vector<8x128xf32>
    %178 = arith.mulf %173, %177 : vector<8x128xf32>
    %179 = arith.addf %145, %178 : vector<8x128xf32>
    %180 = vector.extract_strided_slice %172 {offsets = [0, 256], sizes = [8, 128], strides = [1, 1]} : vector<8x384xf32> to vector<8x128xf32>
    %181 = arith.mulf %173, %180 : vector<8x128xf32>
    %182 = arith.addf %148, %181 : vector<8x128xf32>
    %c382_i32_37 = arith.constant 382 : i32
    %183 = tpu.dynamic_rotate %161 by %c382_i32_37 dim 1 : vector<8x384xf32>, i32 -> vector<8x384xf32>
    %c0_38 = arith.constant 0 : index
    %c1408 = arith.constant 1408 : index
    %184 = vector.load %arg7[%c0_38, %c1408] : memref<8x10368xf32, #tpu.memory_space<vmem>>, vector<8x128xf32>
    %185 = vector.extract_strided_slice %183 {offsets = [0, 0], sizes = [8, 128], strides = [1, 1]} : vector<8x384xf32> to vector<8x128xf32>
    %186 = arith.mulf %184, %185 : vector<8x128xf32>
    %187 = arith.addf %153, %186 : vector<8x128xf32>
    %188 = vector.extract_strided_slice %183 {offsets = [0, 128], sizes = [8, 128], strides = [1, 1]} : vector<8x384xf32> to vector<8x128xf32>
    %189 = arith.mulf %184, %188 : vector<8x128xf32>
    %190 = arith.addf %156, %189 : vector<8x128xf32>
    %191 = vector.extract_strided_slice %183 {offsets = [0, 256], sizes = [8, 128], strides = [1, 1]} : vector<8x384xf32> to vector<8x128xf32>
    %192 = arith.mulf %184, %191 : vector<8x128xf32>
    %193 = arith.addf %159, %192 : vector<8x128xf32>
    %c381_i32_39 = arith.constant 381 : i32
    %194 = tpu.dynamic_rotate %161 by %c381_i32_39 dim 1 : vector<8x384xf32>, i32 -> vector<8x384xf32>
    %c0_40 = arith.constant 0 : index
    %c1536 = arith.constant 1536 : index
    %195 = vector.load %arg7[%c0_40, %c1536] : memref<8x10368xf32, #tpu.memory_space<vmem>>, vector<8x128xf32>
    %196 = vector.extract_strided_slice %194 {offsets = [0, 0], sizes = [8, 128], strides = [1, 1]} : vector<8x384xf32> to vector<8x128xf32>
    %197 = arith.mulf %195, %196 : vector<8x128xf32>
    %198 = arith.addf %165, %197 : vector<8x128xf32>
    %199 = vector.extract_strided_slice %194 {offsets = [0, 128], sizes = [8, 128], strides = [1, 1]} : vector<8x384xf32> to vector<8x128xf32>
    %200 = arith.mulf %195, %199 : vector<8x128xf32>
    %201 = arith.addf %168, %200 : vector<8x128xf32>
    %202 = vector.extract_strided_slice %194 {offsets = [0, 256], sizes = [8, 128], strides = [1, 1]} : vector<8x384xf32> to vector<8x128xf32>
    %203 = arith.mulf %195, %202 : vector<8x128xf32>
    %204 = arith.addf %171, %203 : vector<8x128xf32>
    %c380_i32_41 = arith.constant 380 : i32
    %205 = tpu.dynamic_rotate %161 by %c380_i32_41 dim 1 : vector<8x384xf32>, i32 -> vector<8x384xf32>
    %c0_42 = arith.constant 0 : index
    %c1664 = arith.constant 1664 : index
    %206 = vector.load %arg7[%c0_42, %c1664] : memref<8x10368xf32, #tpu.memory_space<vmem>>, vector<8x128xf32>
    %207 = vector.extract_strided_slice %205 {offsets = [0, 0], sizes = [8, 128], strides = [1, 1]} : vector<8x384xf32> to vector<8x128xf32>
    %208 = arith.mulf %206, %207 : vector<8x128xf32>
    %209 = arith.addf %176, %208 : vector<8x128xf32>
    %210 = vector.extract_strided_slice %205 {offsets = [0, 128], sizes = [8, 128], strides = [1, 1]} : vector<8x384xf32> to vector<8x128xf32>
    %211 = arith.mulf %206, %210 : vector<8x128xf32>
    %212 = arith.addf %179, %211 : vector<8x128xf32>
    %213 = vector.extract_strided_slice %205 {offsets = [0, 256], sizes = [8, 128], strides = [1, 1]} : vector<8x384xf32> to vector<8x128xf32>
    %214 = arith.mulf %206, %213 : vector<8x128xf32>
    %215 = arith.addf %182, %214 : vector<8x128xf32>
    %c379_i32_43 = arith.constant 379 : i32
    %216 = tpu.dynamic_rotate %161 by %c379_i32_43 dim 1 : vector<8x384xf32>, i32 -> vector<8x384xf32>
    %c0_44 = arith.constant 0 : index
    %c1792 = arith.constant 1792 : index
    %217 = vector.load %arg7[%c0_44, %c1792] : memref<8x10368xf32, #tpu.memory_space<vmem>>, vector<8x128xf32>
    %218 = vector.extract_strided_slice %216 {offsets = [0, 0], sizes = [8, 128], strides = [1, 1]} : vector<8x384xf32> to vector<8x128xf32>
    %219 = arith.mulf %217, %218 : vector<8x128xf32>
    %220 = arith.addf %187, %219 : vector<8x128xf32>
    %221 = vector.extract_strided_slice %216 {offsets = [0, 128], sizes = [8, 128], strides = [1, 1]} : vector<8x384xf32> to vector<8x128xf32>
    %222 = arith.mulf %217, %221 : vector<8x128xf32>
    %223 = arith.addf %190, %222 : vector<8x128xf32>
    %224 = vector.extract_strided_slice %216 {offsets = [0, 256], sizes = [8, 128], strides = [1, 1]} : vector<8x384xf32> to vector<8x128xf32>
    %225 = arith.mulf %217, %224 : vector<8x128xf32>
    %226 = arith.addf %193, %225 : vector<8x128xf32>
    %c378_i32_45 = arith.constant 378 : i32
    %227 = tpu.dynamic_rotate %161 by %c378_i32_45 dim 1 : vector<8x384xf32>, i32 -> vector<8x384xf32>
    %c0_46 = arith.constant 0 : index
    %c1920 = arith.constant 1920 : index
    %228 = vector.load %arg7[%c0_46, %c1920] : memref<8x10368xf32, #tpu.memory_space<vmem>>, vector<8x128xf32>
    %229 = vector.extract_strided_slice %227 {offsets = [0, 0], sizes = [8, 128], strides = [1, 1]} : vector<8x384xf32> to vector<8x128xf32>
    %230 = arith.mulf %228, %229 : vector<8x128xf32>
    %231 = arith.addf %198, %230 : vector<8x128xf32>
    %232 = vector.extract_strided_slice %227 {offsets = [0, 128], sizes = [8, 128], strides = [1, 1]} : vector<8x384xf32> to vector<8x128xf32>
    %233 = arith.mulf %228, %232 : vector<8x128xf32>
    %234 = arith.addf %201, %233 : vector<8x128xf32>
    %235 = vector.extract_strided_slice %227 {offsets = [0, 256], sizes = [8, 128], strides = [1, 1]} : vector<8x384xf32> to vector<8x128xf32>
    %236 = arith.mulf %228, %235 : vector<8x128xf32>
    %237 = arith.addf %204, %236 : vector<8x128xf32>
    %c377_i32_47 = arith.constant 377 : i32
    %238 = tpu.dynamic_rotate %161 by %c377_i32_47 dim 1 : vector<8x384xf32>, i32 -> vector<8x384xf32>
    %c0_48 = arith.constant 0 : index
    %c2048 = arith.constant 2048 : index
    %239 = vector.load %arg7[%c0_48, %c2048] : memref<8x10368xf32, #tpu.memory_space<vmem>>, vector<8x128xf32>
    %240 = vector.extract_strided_slice %238 {offsets = [0, 0], sizes = [8, 128], strides = [1, 1]} : vector<8x384xf32> to vector<8x128xf32>
    %241 = arith.mulf %239, %240 : vector<8x128xf32>
    %242 = arith.addf %209, %241 : vector<8x128xf32>
    %243 = vector.extract_strided_slice %238 {offsets = [0, 128], sizes = [8, 128], strides = [1, 1]} : vector<8x384xf32> to vector<8x128xf32>
    %244 = arith.mulf %239, %243 : vector<8x128xf32>
    %245 = arith.addf %212, %244 : vector<8x128xf32>
    %246 = vector.extract_strided_slice %238 {offsets = [0, 256], sizes = [8, 128], strides = [1, 1]} : vector<8x384xf32> to vector<8x128xf32>
    %247 = arith.mulf %239, %246 : vector<8x128xf32>
    %248 = arith.addf %215, %247 : vector<8x128xf32>
    %c376_i32_49 = arith.constant 376 : i32
    %249 = tpu.dynamic_rotate %161 by %c376_i32_49 dim 1 : vector<8x384xf32>, i32 -> vector<8x384xf32>
    %c0_50 = arith.constant 0 : index
    %c2176 = arith.constant 2176 : index
    %250 = vector.load %arg7[%c0_50, %c2176] : memref<8x10368xf32, #tpu.memory_space<vmem>>, vector<8x128xf32>
    %251 = vector.extract_strided_slice %249 {offsets = [0, 0], sizes = [8, 128], strides = [1, 1]} : vector<8x384xf32> to vector<8x128xf32>
    %252 = arith.mulf %250, %251 : vector<8x128xf32>
    %253 = arith.addf %220, %252 : vector<8x128xf32>
    %254 = vector.extract_strided_slice %249 {offsets = [0, 128], sizes = [8, 128], strides = [1, 1]} : vector<8x384xf32> to vector<8x128xf32>
    %255 = arith.mulf %250, %254 : vector<8x128xf32>
    %256 = arith.addf %223, %255 : vector<8x128xf32>
    %257 = vector.extract_strided_slice %249 {offsets = [0, 256], sizes = [8, 128], strides = [1, 1]} : vector<8x384xf32> to vector<8x128xf32>
    %258 = arith.mulf %250, %257 : vector<8x128xf32>
    %259 = arith.addf %226, %258 : vector<8x128xf32>
    %c592_i32 = arith.constant 592 : i32
    %260 = tpu.dynamic_rotate %69 by %c592_i32 dim 1 : vector<8x640xf32>, i32 -> vector<8x640xf32>
    %261 = vector.extract_strided_slice %260 {offsets = [0, 0], sizes = [8, 384], strides = [1, 1]} : vector<8x640xf32> to vector<8x384xf32>
    %c0_51 = arith.constant 0 : index
    %c2304 = arith.constant 2304 : index
    %262 = vector.load %arg7[%c0_51, %c2304] : memref<8x10368xf32, #tpu.memory_space<vmem>>, vector<8x128xf32>
    %263 = vector.extract_strided_slice %261 {offsets = [0, 0], sizes = [8, 128], strides = [1, 1]} : vector<8x384xf32> to vector<8x128xf32>
    %264 = arith.mulf %262, %263 : vector<8x128xf32>
    %265 = arith.addf %231, %264 : vector<8x128xf32>
    %266 = vector.extract_strided_slice %261 {offsets = [0, 128], sizes = [8, 128], strides = [1, 1]} : vector<8x384xf32> to vector<8x128xf32>
    %267 = arith.mulf %262, %266 : vector<8x128xf32>
    %268 = arith.addf %234, %267 : vector<8x128xf32>
    %269 = vector.extract_strided_slice %261 {offsets = [0, 256], sizes = [8, 128], strides = [1, 1]} : vector<8x384xf32> to vector<8x128xf32>
    %270 = arith.mulf %262, %269 : vector<8x128xf32>
    %271 = arith.addf %237, %270 : vector<8x128xf32>
    %c383_i32_52 = arith.constant 383 : i32
    %272 = tpu.dynamic_rotate %261 by %c383_i32_52 dim 1 : vector<8x384xf32>, i32 -> vector<8x384xf32>
    %c0_53 = arith.constant 0 : index
    %c2432 = arith.constant 2432 : index
    %273 = vector.load %arg7[%c0_53, %c2432] : memref<8x10368xf32, #tpu.memory_space<vmem>>, vector<8x128xf32>
    %274 = vector.extract_strided_slice %272 {offsets = [0, 0], sizes = [8, 128], strides = [1, 1]} : vector<8x384xf32> to vector<8x128xf32>
    %275 = arith.mulf %273, %274 : vector<8x128xf32>
    %276 = arith.addf %242, %275 : vector<8x128xf32>
    %277 = vector.extract_strided_slice %272 {offsets = [0, 128], sizes = [8, 128], strides = [1, 1]} : vector<8x384xf32> to vector<8x128xf32>
    %278 = arith.mulf %273, %277 : vector<8x128xf32>
    %279 = arith.addf %245, %278 : vector<8x128xf32>
    %280 = vector.extract_strided_slice %272 {offsets = [0, 256], sizes = [8, 128], strides = [1, 1]} : vector<8x384xf32> to vector<8x128xf32>
    %281 = arith.mulf %273, %280 : vector<8x128xf32>
    %282 = arith.addf %248, %281 : vector<8x128xf32>
    %c382_i32_54 = arith.constant 382 : i32
    %283 = tpu.dynamic_rotate %261 by %c382_i32_54 dim 1 : vector<8x384xf32>, i32 -> vector<8x384xf32>
    %c0_55 = arith.constant 0 : index
    %c2560 = arith.constant 2560 : index
    %284 = vector.load %arg7[%c0_55, %c2560] : memref<8x10368xf32, #tpu.memory_space<vmem>>, vector<8x128xf32>
    %285 = vector.extract_strided_slice %283 {offsets = [0, 0], sizes = [8, 128], strides = [1, 1]} : vector<8x384xf32> to vector<8x128xf32>
    %286 = arith.mulf %284, %285 : vector<8x128xf32>
    %287 = arith.addf %253, %286 : vector<8x128xf32>
    %288 = vector.extract_strided_slice %283 {offsets = [0, 128], sizes = [8, 128], strides = [1, 1]} : vector<8x384xf32> to vector<8x128xf32>
    %289 = arith.mulf %284, %288 : vector<8x128xf32>
    %290 = arith.addf %256, %289 : vector<8x128xf32>
    %291 = vector.extract_strided_slice %283 {offsets = [0, 256], sizes = [8, 128], strides = [1, 1]} : vector<8x384xf32> to vector<8x128xf32>
    %292 = arith.mulf %284, %291 : vector<8x128xf32>
    %293 = arith.addf %259, %292 : vector<8x128xf32>
    %c381_i32_56 = arith.constant 381 : i32
    %294 = tpu.dynamic_rotate %261 by %c381_i32_56 dim 1 : vector<8x384xf32>, i32 -> vector<8x384xf32>
    %c0_57 = arith.constant 0 : index
    %c2688 = arith.constant 2688 : index
    %295 = vector.load %arg7[%c0_57, %c2688] : memref<8x10368xf32, #tpu.memory_space<vmem>>, vector<8x128xf32>
    %296 = vector.extract_strided_slice %294 {offsets = [0, 0], sizes = [8, 128], strides = [1, 1]} : vector<8x384xf32> to vector<8x128xf32>
    %297 = arith.mulf %295, %296 : vector<8x128xf32>
    %298 = arith.addf %265, %297 : vector<8x128xf32>
    %299 = vector.extract_strided_slice %294 {offsets = [0, 128], sizes = [8, 128], strides = [1, 1]} : vector<8x384xf32> to vector<8x128xf32>
    %300 = arith.mulf %295, %299 : vector<8x128xf32>
    %301 = arith.addf %268, %300 : vector<8x128xf32>
    %302 = vector.extract_strided_slice %294 {offsets = [0, 256], sizes = [8, 128], strides = [1, 1]} : vector<8x384xf32> to vector<8x128xf32>
    %303 = arith.mulf %295, %302 : vector<8x128xf32>
    %304 = arith.addf %271, %303 : vector<8x128xf32>
    %c380_i32_58 = arith.constant 380 : i32
    %305 = tpu.dynamic_rotate %261 by %c380_i32_58 dim 1 : vector<8x384xf32>, i32 -> vector<8x384xf32>
    %c0_59 = arith.constant 0 : index
    %c2816 = arith.constant 2816 : index
    %306 = vector.load %arg7[%c0_59, %c2816] : memref<8x10368xf32, #tpu.memory_space<vmem>>, vector<8x128xf32>
    %307 = vector.extract_strided_slice %305 {offsets = [0, 0], sizes = [8, 128], strides = [1, 1]} : vector<8x384xf32> to vector<8x128xf32>
    %308 = arith.mulf %306, %307 : vector<8x128xf32>
    %309 = arith.addf %276, %308 : vector<8x128xf32>
    %310 = vector.extract_strided_slice %305 {offsets = [0, 128], sizes = [8, 128], strides = [1, 1]} : vector<8x384xf32> to vector<8x128xf32>
    %311 = arith.mulf %306, %310 : vector<8x128xf32>
    %312 = arith.addf %279, %311 : vector<8x128xf32>
    %313 = vector.extract_strided_slice %305 {offsets = [0, 256], sizes = [8, 128], strides = [1, 1]} : vector<8x384xf32> to vector<8x128xf32>
    %314 = arith.mulf %306, %313 : vector<8x128xf32>
    %315 = arith.addf %282, %314 : vector<8x128xf32>
    %c379_i32_60 = arith.constant 379 : i32
    %316 = tpu.dynamic_rotate %261 by %c379_i32_60 dim 1 : vector<8x384xf32>, i32 -> vector<8x384xf32>
    %c0_61 = arith.constant 0 : index
    %c2944 = arith.constant 2944 : index
    %317 = vector.load %arg7[%c0_61, %c2944] : memref<8x10368xf32, #tpu.memory_space<vmem>>, vector<8x128xf32>
    %318 = vector.extract_strided_slice %316 {offsets = [0, 0], sizes = [8, 128], strides = [1, 1]} : vector<8x384xf32> to vector<8x128xf32>
    %319 = arith.mulf %317, %318 : vector<8x128xf32>
    %320 = arith.addf %287, %319 : vector<8x128xf32>
    %321 = vector.extract_strided_slice %316 {offsets = [0, 128], sizes = [8, 128], strides = [1, 1]} : vector<8x384xf32> to vector<8x128xf32>
    %322 = arith.mulf %317, %321 : vector<8x128xf32>
    %323 = arith.addf %290, %322 : vector<8x128xf32>
    %324 = vector.extract_strided_slice %316 {offsets = [0, 256], sizes = [8, 128], strides = [1, 1]} : vector<8x384xf32> to vector<8x128xf32>
    %325 = arith.mulf %317, %324 : vector<8x128xf32>
    %326 = arith.addf %293, %325 : vector<8x128xf32>
    %c378_i32_62 = arith.constant 378 : i32
    %327 = tpu.dynamic_rotate %261 by %c378_i32_62 dim 1 : vector<8x384xf32>, i32 -> vector<8x384xf32>
    %c0_63 = arith.constant 0 : index
    %c3072 = arith.constant 3072 : index
    %328 = vector.load %arg7[%c0_63, %c3072] : memref<8x10368xf32, #tpu.memory_space<vmem>>, vector<8x128xf32>
    %329 = vector.extract_strided_slice %327 {offsets = [0, 0], sizes = [8, 128], strides = [1, 1]} : vector<8x384xf32> to vector<8x128xf32>
    %330 = arith.mulf %328, %329 : vector<8x128xf32>
    %331 = arith.addf %298, %330 : vector<8x128xf32>
    %332 = vector.extract_strided_slice %327 {offsets = [0, 128], sizes = [8, 128], strides = [1, 1]} : vector<8x384xf32> to vector<8x128xf32>
    %333 = arith.mulf %328, %332 : vector<8x128xf32>
    %334 = arith.addf %301, %333 : vector<8x128xf32>
    %335 = vector.extract_strided_slice %327 {offsets = [0, 256], sizes = [8, 128], strides = [1, 1]} : vector<8x384xf32> to vector<8x128xf32>
    %336 = arith.mulf %328, %335 : vector<8x128xf32>
    %337 = arith.addf %304, %336 : vector<8x128xf32>
    %c377_i32_64 = arith.constant 377 : i32
    %338 = tpu.dynamic_rotate %261 by %c377_i32_64 dim 1 : vector<8x384xf32>, i32 -> vector<8x384xf32>
    %c0_65 = arith.constant 0 : index
    %c3200 = arith.constant 3200 : index
    %339 = vector.load %arg7[%c0_65, %c3200] : memref<8x10368xf32, #tpu.memory_space<vmem>>, vector<8x128xf32>
    %340 = vector.extract_strided_slice %338 {offsets = [0, 0], sizes = [8, 128], strides = [1, 1]} : vector<8x384xf32> to vector<8x128xf32>
    %341 = arith.mulf %339, %340 : vector<8x128xf32>
    %342 = arith.addf %309, %341 : vector<8x128xf32>
    %343 = vector.extract_strided_slice %338 {offsets = [0, 128], sizes = [8, 128], strides = [1, 1]} : vector<8x384xf32> to vector<8x128xf32>
    %344 = arith.mulf %339, %343 : vector<8x128xf32>
    %345 = arith.addf %312, %344 : vector<8x128xf32>
    %346 = vector.extract_strided_slice %338 {offsets = [0, 256], sizes = [8, 128], strides = [1, 1]} : vector<8x384xf32> to vector<8x128xf32>
    %347 = arith.mulf %339, %346 : vector<8x128xf32>
    %348 = arith.addf %315, %347 : vector<8x128xf32>
    %c376_i32_66 = arith.constant 376 : i32
    %349 = tpu.dynamic_rotate %261 by %c376_i32_66 dim 1 : vector<8x384xf32>, i32 -> vector<8x384xf32>
    %c0_67 = arith.constant 0 : index
    %c3328 = arith.constant 3328 : index
    %350 = vector.load %arg7[%c0_67, %c3328] : memref<8x10368xf32, #tpu.memory_space<vmem>>, vector<8x128xf32>
    %351 = vector.extract_strided_slice %349 {offsets = [0, 0], sizes = [8, 128], strides = [1, 1]} : vector<8x384xf32> to vector<8x128xf32>
    %352 = arith.mulf %350, %351 : vector<8x128xf32>
    %353 = arith.addf %320, %352 : vector<8x128xf32>
    %354 = vector.extract_strided_slice %349 {offsets = [0, 128], sizes = [8, 128], strides = [1, 1]} : vector<8x384xf32> to vector<8x128xf32>
    %355 = arith.mulf %350, %354 : vector<8x128xf32>
    %356 = arith.addf %323, %355 : vector<8x128xf32>
    %357 = vector.extract_strided_slice %349 {offsets = [0, 256], sizes = [8, 128], strides = [1, 1]} : vector<8x384xf32> to vector<8x128xf32>
    %358 = arith.mulf %350, %357 : vector<8x128xf32>
    %359 = arith.addf %326, %358 : vector<8x128xf32>
    %c568_i32 = arith.constant 568 : i32
    %360 = tpu.dynamic_rotate %69 by %c568_i32 dim 1 : vector<8x640xf32>, i32 -> vector<8x640xf32>
    %361 = vector.extract_strided_slice %360 {offsets = [0, 0], sizes = [8, 384], strides = [1, 1]} : vector<8x640xf32> to vector<8x384xf32>
    %c0_68 = arith.constant 0 : index
    %c3456 = arith.constant 3456 : index
    %362 = vector.load %arg7[%c0_68, %c3456] : memref<8x10368xf32, #tpu.memory_space<vmem>>, vector<8x128xf32>
    %363 = vector.extract_strided_slice %361 {offsets = [0, 0], sizes = [8, 128], strides = [1, 1]} : vector<8x384xf32> to vector<8x128xf32>
    %364 = arith.mulf %362, %363 : vector<8x128xf32>
    %365 = arith.addf %331, %364 : vector<8x128xf32>
    %366 = vector.extract_strided_slice %361 {offsets = [0, 128], sizes = [8, 128], strides = [1, 1]} : vector<8x384xf32> to vector<8x128xf32>
    %367 = arith.mulf %362, %366 : vector<8x128xf32>
    %368 = arith.addf %334, %367 : vector<8x128xf32>
    %369 = vector.extract_strided_slice %361 {offsets = [0, 256], sizes = [8, 128], strides = [1, 1]} : vector<8x384xf32> to vector<8x128xf32>
    %370 = arith.mulf %362, %369 : vector<8x128xf32>
    %371 = arith.addf %337, %370 : vector<8x128xf32>
    %c383_i32_69 = arith.constant 383 : i32
    %372 = tpu.dynamic_rotate %361 by %c383_i32_69 dim 1 : vector<8x384xf32>, i32 -> vector<8x384xf32>
    %c0_70 = arith.constant 0 : index
    %c3584 = arith.constant 3584 : index
    %373 = vector.load %arg7[%c0_70, %c3584] : memref<8x10368xf32, #tpu.memory_space<vmem>>, vector<8x128xf32>
    %374 = vector.extract_strided_slice %372 {offsets = [0, 0], sizes = [8, 128], strides = [1, 1]} : vector<8x384xf32> to vector<8x128xf32>
    %375 = arith.mulf %373, %374 : vector<8x128xf32>
    %376 = arith.addf %342, %375 : vector<8x128xf32>
    %377 = vector.extract_strided_slice %372 {offsets = [0, 128], sizes = [8, 128], strides = [1, 1]} : vector<8x384xf32> to vector<8x128xf32>
    %378 = arith.mulf %373, %377 : vector<8x128xf32>
    %379 = arith.addf %345, %378 : vector<8x128xf32>
    %380 = vector.extract_strided_slice %372 {offsets = [0, 256], sizes = [8, 128], strides = [1, 1]} : vector<8x384xf32> to vector<8x128xf32>
    %381 = arith.mulf %373, %380 : vector<8x128xf32>
    %382 = arith.addf %348, %381 : vector<8x128xf32>
    %c382_i32_71 = arith.constant 382 : i32
    %383 = tpu.dynamic_rotate %361 by %c382_i32_71 dim 1 : vector<8x384xf32>, i32 -> vector<8x384xf32>
    %c0_72 = arith.constant 0 : index
    %c3712 = arith.constant 3712 : index
    %384 = vector.load %arg7[%c0_72, %c3712] : memref<8x10368xf32, #tpu.memory_space<vmem>>, vector<8x128xf32>
    %385 = vector.extract_strided_slice %383 {offsets = [0, 0], sizes = [8, 128], strides = [1, 1]} : vector<8x384xf32> to vector<8x128xf32>
    %386 = arith.mulf %384, %385 : vector<8x128xf32>
    %387 = arith.addf %353, %386 : vector<8x128xf32>
    %388 = vector.extract_strided_slice %383 {offsets = [0, 128], sizes = [8, 128], strides = [1, 1]} : vector<8x384xf32> to vector<8x128xf32>
    %389 = arith.mulf %384, %388 : vector<8x128xf32>
    %390 = arith.addf %356, %389 : vector<8x128xf32>
    %391 = vector.extract_strided_slice %383 {offsets = [0, 256], sizes = [8, 128], strides = [1, 1]} : vector<8x384xf32> to vector<8x128xf32>
    %392 = arith.mulf %384, %391 : vector<8x128xf32>
    %393 = arith.addf %359, %392 : vector<8x128xf32>
    %c381_i32_73 = arith.constant 381 : i32
    %394 = tpu.dynamic_rotate %361 by %c381_i32_73 dim 1 : vector<8x384xf32>, i32 -> vector<8x384xf32>
    %c0_74 = arith.constant 0 : index
    %c3840 = arith.constant 3840 : index
    %395 = vector.load %arg7[%c0_74, %c3840] : memref<8x10368xf32, #tpu.memory_space<vmem>>, vector<8x128xf32>
    %396 = vector.extract_strided_slice %394 {offsets = [0, 0], sizes = [8, 128], strides = [1, 1]} : vector<8x384xf32> to vector<8x128xf32>
    %397 = arith.mulf %395, %396 : vector<8x128xf32>
    %398 = arith.addf %365, %397 : vector<8x128xf32>
    %399 = vector.extract_strided_slice %394 {offsets = [0, 128], sizes = [8, 128], strides = [1, 1]} : vector<8x384xf32> to vector<8x128xf32>
    %400 = arith.mulf %395, %399 : vector<8x128xf32>
    %401 = arith.addf %368, %400 : vector<8x128xf32>
    %402 = vector.extract_strided_slice %394 {offsets = [0, 256], sizes = [8, 128], strides = [1, 1]} : vector<8x384xf32> to vector<8x128xf32>
    %403 = arith.mulf %395, %402 : vector<8x128xf32>
    %404 = arith.addf %371, %403 : vector<8x128xf32>
    %c380_i32_75 = arith.constant 380 : i32
    %405 = tpu.dynamic_rotate %361 by %c380_i32_75 dim 1 : vector<8x384xf32>, i32 -> vector<8x384xf32>
    %c0_76 = arith.constant 0 : index
    %c3968 = arith.constant 3968 : index
    %406 = vector.load %arg7[%c0_76, %c3968] : memref<8x10368xf32, #tpu.memory_space<vmem>>, vector<8x128xf32>
    %407 = vector.extract_strided_slice %405 {offsets = [0, 0], sizes = [8, 128], strides = [1, 1]} : vector<8x384xf32> to vector<8x128xf32>
    %408 = arith.mulf %406, %407 : vector<8x128xf32>
    %409 = arith.addf %376, %408 : vector<8x128xf32>
    %410 = vector.extract_strided_slice %405 {offsets = [0, 128], sizes = [8, 128], strides = [1, 1]} : vector<8x384xf32> to vector<8x128xf32>
    %411 = arith.mulf %406, %410 : vector<8x128xf32>
    %412 = arith.addf %379, %411 : vector<8x128xf32>
    %413 = vector.extract_strided_slice %405 {offsets = [0, 256], sizes = [8, 128], strides = [1, 1]} : vector<8x384xf32> to vector<8x128xf32>
    %414 = arith.mulf %406, %413 : vector<8x128xf32>
    %415 = arith.addf %382, %414 : vector<8x128xf32>
    %c379_i32_77 = arith.constant 379 : i32
    %416 = tpu.dynamic_rotate %361 by %c379_i32_77 dim 1 : vector<8x384xf32>, i32 -> vector<8x384xf32>
    %c0_78 = arith.constant 0 : index
    %c4096 = arith.constant 4096 : index
    %417 = vector.load %arg7[%c0_78, %c4096] : memref<8x10368xf32, #tpu.memory_space<vmem>>, vector<8x128xf32>
    %418 = vector.extract_strided_slice %416 {offsets = [0, 0], sizes = [8, 128], strides = [1, 1]} : vector<8x384xf32> to vector<8x128xf32>
    %419 = arith.mulf %417, %418 : vector<8x128xf32>
    %420 = arith.addf %387, %419 : vector<8x128xf32>
    %421 = vector.extract_strided_slice %416 {offsets = [0, 128], sizes = [8, 128], strides = [1, 1]} : vector<8x384xf32> to vector<8x128xf32>
    %422 = arith.mulf %417, %421 : vector<8x128xf32>
    %423 = arith.addf %390, %422 : vector<8x128xf32>
    %424 = vector.extract_strided_slice %416 {offsets = [0, 256], sizes = [8, 128], strides = [1, 1]} : vector<8x384xf32> to vector<8x128xf32>
    %425 = arith.mulf %417, %424 : vector<8x128xf32>
    %426 = arith.addf %393, %425 : vector<8x128xf32>
    %c378_i32_79 = arith.constant 378 : i32
    %427 = tpu.dynamic_rotate %361 by %c378_i32_79 dim 1 : vector<8x384xf32>, i32 -> vector<8x384xf32>
    %c0_80 = arith.constant 0 : index
    %c4224 = arith.constant 4224 : index
    %428 = vector.load %arg7[%c0_80, %c4224] : memref<8x10368xf32, #tpu.memory_space<vmem>>, vector<8x128xf32>
    %429 = vector.extract_strided_slice %427 {offsets = [0, 0], sizes = [8, 128], strides = [1, 1]} : vector<8x384xf32> to vector<8x128xf32>
    %430 = arith.mulf %428, %429 : vector<8x128xf32>
    %431 = arith.addf %398, %430 : vector<8x128xf32>
    %432 = vector.extract_strided_slice %427 {offsets = [0, 128], sizes = [8, 128], strides = [1, 1]} : vector<8x384xf32> to vector<8x128xf32>
    %433 = arith.mulf %428, %432 : vector<8x128xf32>
    %434 = arith.addf %401, %433 : vector<8x128xf32>
    %435 = vector.extract_strided_slice %427 {offsets = [0, 256], sizes = [8, 128], strides = [1, 1]} : vector<8x384xf32> to vector<8x128xf32>
    %436 = arith.mulf %428, %435 : vector<8x128xf32>
    %437 = arith.addf %404, %436 : vector<8x128xf32>
    %c377_i32_81 = arith.constant 377 : i32
    %438 = tpu.dynamic_rotate %361 by %c377_i32_81 dim 1 : vector<8x384xf32>, i32 -> vector<8x384xf32>
    %c0_82 = arith.constant 0 : index
    %c4352 = arith.constant 4352 : index
    %439 = vector.load %arg7[%c0_82, %c4352] : memref<8x10368xf32, #tpu.memory_space<vmem>>, vector<8x128xf32>
    %440 = vector.extract_strided_slice %438 {offsets = [0, 0], sizes = [8, 128], strides = [1, 1]} : vector<8x384xf32> to vector<8x128xf32>
    %441 = arith.mulf %439, %440 : vector<8x128xf32>
    %442 = arith.addf %409, %441 : vector<8x128xf32>
    %443 = vector.extract_strided_slice %438 {offsets = [0, 128], sizes = [8, 128], strides = [1, 1]} : vector<8x384xf32> to vector<8x128xf32>
    %444 = arith.mulf %439, %443 : vector<8x128xf32>
    %445 = arith.addf %412, %444 : vector<8x128xf32>
    %446 = vector.extract_strided_slice %438 {offsets = [0, 256], sizes = [8, 128], strides = [1, 1]} : vector<8x384xf32> to vector<8x128xf32>
    %447 = arith.mulf %439, %446 : vector<8x128xf32>
    %448 = arith.addf %415, %447 : vector<8x128xf32>
    %c376_i32_83 = arith.constant 376 : i32
    %449 = tpu.dynamic_rotate %361 by %c376_i32_83 dim 1 : vector<8x384xf32>, i32 -> vector<8x384xf32>
    %c0_84 = arith.constant 0 : index
    %c4480 = arith.constant 4480 : index
    %450 = vector.load %arg7[%c0_84, %c4480] : memref<8x10368xf32, #tpu.memory_space<vmem>>, vector<8x128xf32>
    %451 = vector.extract_strided_slice %449 {offsets = [0, 0], sizes = [8, 128], strides = [1, 1]} : vector<8x384xf32> to vector<8x128xf32>
    %452 = arith.mulf %450, %451 : vector<8x128xf32>
    %453 = arith.addf %420, %452 : vector<8x128xf32>
    %454 = vector.extract_strided_slice %449 {offsets = [0, 128], sizes = [8, 128], strides = [1, 1]} : vector<8x384xf32> to vector<8x128xf32>
    %455 = arith.mulf %450, %454 : vector<8x128xf32>
    %456 = arith.addf %423, %455 : vector<8x128xf32>
    %457 = vector.extract_strided_slice %449 {offsets = [0, 256], sizes = [8, 128], strides = [1, 1]} : vector<8x384xf32> to vector<8x128xf32>
    %458 = arith.mulf %450, %457 : vector<8x128xf32>
    %459 = arith.addf %426, %458 : vector<8x128xf32>
    %c544_i32 = arith.constant 544 : i32
    %460 = tpu.dynamic_rotate %69 by %c544_i32 dim 1 : vector<8x640xf32>, i32 -> vector<8x640xf32>
    %461 = vector.extract_strided_slice %460 {offsets = [0, 0], sizes = [8, 384], strides = [1, 1]} : vector<8x640xf32> to vector<8x384xf32>
    %c0_85 = arith.constant 0 : index
    %c4608 = arith.constant 4608 : index
    %462 = vector.load %arg7[%c0_85, %c4608] : memref<8x10368xf32, #tpu.memory_space<vmem>>, vector<8x128xf32>
    %463 = vector.extract_strided_slice %461 {offsets = [0, 0], sizes = [8, 128], strides = [1, 1]} : vector<8x384xf32> to vector<8x128xf32>
    %464 = arith.mulf %462, %463 : vector<8x128xf32>
    %465 = arith.addf %431, %464 : vector<8x128xf32>
    %466 = vector.extract_strided_slice %461 {offsets = [0, 128], sizes = [8, 128], strides = [1, 1]} : vector<8x384xf32> to vector<8x128xf32>
    %467 = arith.mulf %462, %466 : vector<8x128xf32>
    %468 = arith.addf %434, %467 : vector<8x128xf32>
    %469 = vector.extract_strided_slice %461 {offsets = [0, 256], sizes = [8, 128], strides = [1, 1]} : vector<8x384xf32> to vector<8x128xf32>
    %470 = arith.mulf %462, %469 : vector<8x128xf32>
    %471 = arith.addf %437, %470 : vector<8x128xf32>
    %c383_i32_86 = arith.constant 383 : i32
    %472 = tpu.dynamic_rotate %461 by %c383_i32_86 dim 1 : vector<8x384xf32>, i32 -> vector<8x384xf32>
    %c0_87 = arith.constant 0 : index
    %c4736 = arith.constant 4736 : index
    %473 = vector.load %arg7[%c0_87, %c4736] : memref<8x10368xf32, #tpu.memory_space<vmem>>, vector<8x128xf32>
    %474 = vector.extract_strided_slice %472 {offsets = [0, 0], sizes = [8, 128], strides = [1, 1]} : vector<8x384xf32> to vector<8x128xf32>
    %475 = arith.mulf %473, %474 : vector<8x128xf32>
    %476 = arith.addf %442, %475 : vector<8x128xf32>
    %477 = vector.extract_strided_slice %472 {offsets = [0, 128], sizes = [8, 128], strides = [1, 1]} : vector<8x384xf32> to vector<8x128xf32>
    %478 = arith.mulf %473, %477 : vector<8x128xf32>
    %479 = arith.addf %445, %478 : vector<8x128xf32>
    %480 = vector.extract_strided_slice %472 {offsets = [0, 256], sizes = [8, 128], strides = [1, 1]} : vector<8x384xf32> to vector<8x128xf32>
    %481 = arith.mulf %473, %480 : vector<8x128xf32>
    %482 = arith.addf %448, %481 : vector<8x128xf32>
    %c382_i32_88 = arith.constant 382 : i32
    %483 = tpu.dynamic_rotate %461 by %c382_i32_88 dim 1 : vector<8x384xf32>, i32 -> vector<8x384xf32>
    %c0_89 = arith.constant 0 : index
    %c4864 = arith.constant 4864 : index
    %484 = vector.load %arg7[%c0_89, %c4864] : memref<8x10368xf32, #tpu.memory_space<vmem>>, vector<8x128xf32>
    %485 = vector.extract_strided_slice %483 {offsets = [0, 0], sizes = [8, 128], strides = [1, 1]} : vector<8x384xf32> to vector<8x128xf32>
    %486 = arith.mulf %484, %485 : vector<8x128xf32>
    %487 = arith.addf %453, %486 : vector<8x128xf32>
    %488 = vector.extract_strided_slice %483 {offsets = [0, 128], sizes = [8, 128], strides = [1, 1]} : vector<8x384xf32> to vector<8x128xf32>
    %489 = arith.mulf %484, %488 : vector<8x128xf32>
    %490 = arith.addf %456, %489 : vector<8x128xf32>
    %491 = vector.extract_strided_slice %483 {offsets = [0, 256], sizes = [8, 128], strides = [1, 1]} : vector<8x384xf32> to vector<8x128xf32>
    %492 = arith.mulf %484, %491 : vector<8x128xf32>
    %493 = arith.addf %459, %492 : vector<8x128xf32>
    %c381_i32_90 = arith.constant 381 : i32
    %494 = tpu.dynamic_rotate %461 by %c381_i32_90 dim 1 : vector<8x384xf32>, i32 -> vector<8x384xf32>
    %c0_91 = arith.constant 0 : index
    %c4992 = arith.constant 4992 : index
    %495 = vector.load %arg7[%c0_91, %c4992] : memref<8x10368xf32, #tpu.memory_space<vmem>>, vector<8x128xf32>
    %496 = vector.extract_strided_slice %494 {offsets = [0, 0], sizes = [8, 128], strides = [1, 1]} : vector<8x384xf32> to vector<8x128xf32>
    %497 = arith.mulf %495, %496 : vector<8x128xf32>
    %498 = arith.addf %465, %497 : vector<8x128xf32>
    %499 = vector.extract_strided_slice %494 {offsets = [0, 128], sizes = [8, 128], strides = [1, 1]} : vector<8x384xf32> to vector<8x128xf32>
    %500 = arith.mulf %495, %499 : vector<8x128xf32>
    %501 = arith.addf %468, %500 : vector<8x128xf32>
    %502 = vector.extract_strided_slice %494 {offsets = [0, 256], sizes = [8, 128], strides = [1, 1]} : vector<8x384xf32> to vector<8x128xf32>
    %503 = arith.mulf %495, %502 : vector<8x128xf32>
    %504 = arith.addf %471, %503 : vector<8x128xf32>
    %c380_i32_92 = arith.constant 380 : i32
    %505 = tpu.dynamic_rotate %461 by %c380_i32_92 dim 1 : vector<8x384xf32>, i32 -> vector<8x384xf32>
    %c0_93 = arith.constant 0 : index
    %c5120 = arith.constant 5120 : index
    %506 = vector.load %arg7[%c0_93, %c5120] : memref<8x10368xf32, #tpu.memory_space<vmem>>, vector<8x128xf32>
    %507 = vector.extract_strided_slice %505 {offsets = [0, 0], sizes = [8, 128], strides = [1, 1]} : vector<8x384xf32> to vector<8x128xf32>
    %508 = arith.mulf %506, %507 : vector<8x128xf32>
    %509 = arith.addf %476, %508 : vector<8x128xf32>
    %510 = vector.extract_strided_slice %505 {offsets = [0, 128], sizes = [8, 128], strides = [1, 1]} : vector<8x384xf32> to vector<8x128xf32>
    %511 = arith.mulf %506, %510 : vector<8x128xf32>
    %512 = arith.addf %479, %511 : vector<8x128xf32>
    %513 = vector.extract_strided_slice %505 {offsets = [0, 256], sizes = [8, 128], strides = [1, 1]} : vector<8x384xf32> to vector<8x128xf32>
    %514 = arith.mulf %506, %513 : vector<8x128xf32>
    %515 = arith.addf %482, %514 : vector<8x128xf32>
    %c379_i32_94 = arith.constant 379 : i32
    %516 = tpu.dynamic_rotate %461 by %c379_i32_94 dim 1 : vector<8x384xf32>, i32 -> vector<8x384xf32>
    %c0_95 = arith.constant 0 : index
    %c5248 = arith.constant 5248 : index
    %517 = vector.load %arg7[%c0_95, %c5248] : memref<8x10368xf32, #tpu.memory_space<vmem>>, vector<8x128xf32>
    %518 = vector.extract_strided_slice %516 {offsets = [0, 0], sizes = [8, 128], strides = [1, 1]} : vector<8x384xf32> to vector<8x128xf32>
    %519 = arith.mulf %517, %518 : vector<8x128xf32>
    %520 = arith.addf %487, %519 : vector<8x128xf32>
    %521 = vector.extract_strided_slice %516 {offsets = [0, 128], sizes = [8, 128], strides = [1, 1]} : vector<8x384xf32> to vector<8x128xf32>
    %522 = arith.mulf %517, %521 : vector<8x128xf32>
    %523 = arith.addf %490, %522 : vector<8x128xf32>
    %524 = vector.extract_strided_slice %516 {offsets = [0, 256], sizes = [8, 128], strides = [1, 1]} : vector<8x384xf32> to vector<8x128xf32>
    %525 = arith.mulf %517, %524 : vector<8x128xf32>
    %526 = arith.addf %493, %525 : vector<8x128xf32>
    %c378_i32_96 = arith.constant 378 : i32
    %527 = tpu.dynamic_rotate %461 by %c378_i32_96 dim 1 : vector<8x384xf32>, i32 -> vector<8x384xf32>
    %c0_97 = arith.constant 0 : index
    %c5376 = arith.constant 5376 : index
    %528 = vector.load %arg7[%c0_97, %c5376] : memref<8x10368xf32, #tpu.memory_space<vmem>>, vector<8x128xf32>
    %529 = vector.extract_strided_slice %527 {offsets = [0, 0], sizes = [8, 128], strides = [1, 1]} : vector<8x384xf32> to vector<8x128xf32>
    %530 = arith.mulf %528, %529 : vector<8x128xf32>
    %531 = arith.addf %498, %530 : vector<8x128xf32>
    %532 = vector.extract_strided_slice %527 {offsets = [0, 128], sizes = [8, 128], strides = [1, 1]} : vector<8x384xf32> to vector<8x128xf32>
    %533 = arith.mulf %528, %532 : vector<8x128xf32>
    %534 = arith.addf %501, %533 : vector<8x128xf32>
    %535 = vector.extract_strided_slice %527 {offsets = [0, 256], sizes = [8, 128], strides = [1, 1]} : vector<8x384xf32> to vector<8x128xf32>
    %536 = arith.mulf %528, %535 : vector<8x128xf32>
    %537 = arith.addf %504, %536 : vector<8x128xf32>
    %c377_i32_98 = arith.constant 377 : i32
    %538 = tpu.dynamic_rotate %461 by %c377_i32_98 dim 1 : vector<8x384xf32>, i32 -> vector<8x384xf32>
    %c0_99 = arith.constant 0 : index
    %c5504 = arith.constant 5504 : index
    %539 = vector.load %arg7[%c0_99, %c5504] : memref<8x10368xf32, #tpu.memory_space<vmem>>, vector<8x128xf32>
    %540 = vector.extract_strided_slice %538 {offsets = [0, 0], sizes = [8, 128], strides = [1, 1]} : vector<8x384xf32> to vector<8x128xf32>
    %541 = arith.mulf %539, %540 : vector<8x128xf32>
    %542 = arith.addf %509, %541 : vector<8x128xf32>
    %543 = vector.extract_strided_slice %538 {offsets = [0, 128], sizes = [8, 128], strides = [1, 1]} : vector<8x384xf32> to vector<8x128xf32>
    %544 = arith.mulf %539, %543 : vector<8x128xf32>
    %545 = arith.addf %512, %544 : vector<8x128xf32>
    %546 = vector.extract_strided_slice %538 {offsets = [0, 256], sizes = [8, 128], strides = [1, 1]} : vector<8x384xf32> to vector<8x128xf32>
    %547 = arith.mulf %539, %546 : vector<8x128xf32>
    %548 = arith.addf %515, %547 : vector<8x128xf32>
    %c376_i32_100 = arith.constant 376 : i32
    %549 = tpu.dynamic_rotate %461 by %c376_i32_100 dim 1 : vector<8x384xf32>, i32 -> vector<8x384xf32>
    %c0_101 = arith.constant 0 : index
    %c5632 = arith.constant 5632 : index
    %550 = vector.load %arg7[%c0_101, %c5632] : memref<8x10368xf32, #tpu.memory_space<vmem>>, vector<8x128xf32>
    %551 = vector.extract_strided_slice %549 {offsets = [0, 0], sizes = [8, 128], strides = [1, 1]} : vector<8x384xf32> to vector<8x128xf32>
    %552 = arith.mulf %550, %551 : vector<8x128xf32>
    %553 = arith.addf %520, %552 : vector<8x128xf32>
    %554 = vector.extract_strided_slice %549 {offsets = [0, 128], sizes = [8, 128], strides = [1, 1]} : vector<8x384xf32> to vector<8x128xf32>
    %555 = arith.mulf %550, %554 : vector<8x128xf32>
    %556 = arith.addf %523, %555 : vector<8x128xf32>
    %557 = vector.extract_strided_slice %549 {offsets = [0, 256], sizes = [8, 128], strides = [1, 1]} : vector<8x384xf32> to vector<8x128xf32>
    %558 = arith.mulf %550, %557 : vector<8x128xf32>
    %559 = arith.addf %526, %558 : vector<8x128xf32>
    %c520_i32 = arith.constant 520 : i32
    %560 = tpu.dynamic_rotate %69 by %c520_i32 dim 1 : vector<8x640xf32>, i32 -> vector<8x640xf32>
    %561 = vector.extract_strided_slice %560 {offsets = [0, 0], sizes = [8, 384], strides = [1, 1]} : vector<8x640xf32> to vector<8x384xf32>
    %c0_102 = arith.constant 0 : index
    %c5760 = arith.constant 5760 : index
    %562 = vector.load %arg7[%c0_102, %c5760] : memref<8x10368xf32, #tpu.memory_space<vmem>>, vector<8x128xf32>
    %563 = vector.extract_strided_slice %561 {offsets = [0, 0], sizes = [8, 128], strides = [1, 1]} : vector<8x384xf32> to vector<8x128xf32>
    %564 = arith.mulf %562, %563 : vector<8x128xf32>
    %565 = arith.addf %531, %564 : vector<8x128xf32>
    %566 = vector.extract_strided_slice %561 {offsets = [0, 128], sizes = [8, 128], strides = [1, 1]} : vector<8x384xf32> to vector<8x128xf32>
    %567 = arith.mulf %562, %566 : vector<8x128xf32>
    %568 = arith.addf %534, %567 : vector<8x128xf32>
    %569 = vector.extract_strided_slice %561 {offsets = [0, 256], sizes = [8, 128], strides = [1, 1]} : vector<8x384xf32> to vector<8x128xf32>
    %570 = arith.mulf %562, %569 : vector<8x128xf32>
    %571 = arith.addf %537, %570 : vector<8x128xf32>
    %c383_i32_103 = arith.constant 383 : i32
    %572 = tpu.dynamic_rotate %561 by %c383_i32_103 dim 1 : vector<8x384xf32>, i32 -> vector<8x384xf32>
    %c0_104 = arith.constant 0 : index
    %c5888 = arith.constant 5888 : index
    %573 = vector.load %arg7[%c0_104, %c5888] : memref<8x10368xf32, #tpu.memory_space<vmem>>, vector<8x128xf32>
    %574 = vector.extract_strided_slice %572 {offsets = [0, 0], sizes = [8, 128], strides = [1, 1]} : vector<8x384xf32> to vector<8x128xf32>
    %575 = arith.mulf %573, %574 : vector<8x128xf32>
    %576 = arith.addf %542, %575 : vector<8x128xf32>
    %577 = vector.extract_strided_slice %572 {offsets = [0, 128], sizes = [8, 128], strides = [1, 1]} : vector<8x384xf32> to vector<8x128xf32>
    %578 = arith.mulf %573, %577 : vector<8x128xf32>
    %579 = arith.addf %545, %578 : vector<8x128xf32>
    %580 = vector.extract_strided_slice %572 {offsets = [0, 256], sizes = [8, 128], strides = [1, 1]} : vector<8x384xf32> to vector<8x128xf32>
    %581 = arith.mulf %573, %580 : vector<8x128xf32>
    %582 = arith.addf %548, %581 : vector<8x128xf32>
    %c382_i32_105 = arith.constant 382 : i32
    %583 = tpu.dynamic_rotate %561 by %c382_i32_105 dim 1 : vector<8x384xf32>, i32 -> vector<8x384xf32>
    %c0_106 = arith.constant 0 : index
    %c6016 = arith.constant 6016 : index
    %584 = vector.load %arg7[%c0_106, %c6016] : memref<8x10368xf32, #tpu.memory_space<vmem>>, vector<8x128xf32>
    %585 = vector.extract_strided_slice %583 {offsets = [0, 0], sizes = [8, 128], strides = [1, 1]} : vector<8x384xf32> to vector<8x128xf32>
    %586 = arith.mulf %584, %585 : vector<8x128xf32>
    %587 = arith.addf %553, %586 : vector<8x128xf32>
    %588 = vector.extract_strided_slice %583 {offsets = [0, 128], sizes = [8, 128], strides = [1, 1]} : vector<8x384xf32> to vector<8x128xf32>
    %589 = arith.mulf %584, %588 : vector<8x128xf32>
    %590 = arith.addf %556, %589 : vector<8x128xf32>
    %591 = vector.extract_strided_slice %583 {offsets = [0, 256], sizes = [8, 128], strides = [1, 1]} : vector<8x384xf32> to vector<8x128xf32>
    %592 = arith.mulf %584, %591 : vector<8x128xf32>
    %593 = arith.addf %559, %592 : vector<8x128xf32>
    %c381_i32_107 = arith.constant 381 : i32
    %594 = tpu.dynamic_rotate %561 by %c381_i32_107 dim 1 : vector<8x384xf32>, i32 -> vector<8x384xf32>
    %c0_108 = arith.constant 0 : index
    %c6144 = arith.constant 6144 : index
    %595 = vector.load %arg7[%c0_108, %c6144] : memref<8x10368xf32, #tpu.memory_space<vmem>>, vector<8x128xf32>
    %596 = vector.extract_strided_slice %594 {offsets = [0, 0], sizes = [8, 128], strides = [1, 1]} : vector<8x384xf32> to vector<8x128xf32>
    %597 = arith.mulf %595, %596 : vector<8x128xf32>
    %598 = arith.addf %565, %597 : vector<8x128xf32>
    %599 = vector.extract_strided_slice %594 {offsets = [0, 128], sizes = [8, 128], strides = [1, 1]} : vector<8x384xf32> to vector<8x128xf32>
    %600 = arith.mulf %595, %599 : vector<8x128xf32>
    %601 = arith.addf %568, %600 : vector<8x128xf32>
    %602 = vector.extract_strided_slice %594 {offsets = [0, 256], sizes = [8, 128], strides = [1, 1]} : vector<8x384xf32> to vector<8x128xf32>
    %603 = arith.mulf %595, %602 : vector<8x128xf32>
    %604 = arith.addf %571, %603 : vector<8x128xf32>
    %c380_i32_109 = arith.constant 380 : i32
    %605 = tpu.dynamic_rotate %561 by %c380_i32_109 dim 1 : vector<8x384xf32>, i32 -> vector<8x384xf32>
    %c0_110 = arith.constant 0 : index
    %c6272 = arith.constant 6272 : index
    %606 = vector.load %arg7[%c0_110, %c6272] : memref<8x10368xf32, #tpu.memory_space<vmem>>, vector<8x128xf32>
    %607 = vector.extract_strided_slice %605 {offsets = [0, 0], sizes = [8, 128], strides = [1, 1]} : vector<8x384xf32> to vector<8x128xf32>
    %608 = arith.mulf %606, %607 : vector<8x128xf32>
    %609 = arith.addf %576, %608 : vector<8x128xf32>
    %610 = vector.extract_strided_slice %605 {offsets = [0, 128], sizes = [8, 128], strides = [1, 1]} : vector<8x384xf32> to vector<8x128xf32>
    %611 = arith.mulf %606, %610 : vector<8x128xf32>
    %612 = arith.addf %579, %611 : vector<8x128xf32>
    %613 = vector.extract_strided_slice %605 {offsets = [0, 256], sizes = [8, 128], strides = [1, 1]} : vector<8x384xf32> to vector<8x128xf32>
    %614 = arith.mulf %606, %613 : vector<8x128xf32>
    %615 = arith.addf %582, %614 : vector<8x128xf32>
    %c379_i32_111 = arith.constant 379 : i32
    %616 = tpu.dynamic_rotate %561 by %c379_i32_111 dim 1 : vector<8x384xf32>, i32 -> vector<8x384xf32>
    %c0_112 = arith.constant 0 : index
    %c6400 = arith.constant 6400 : index
    %617 = vector.load %arg7[%c0_112, %c6400] : memref<8x10368xf32, #tpu.memory_space<vmem>>, vector<8x128xf32>
    %618 = vector.extract_strided_slice %616 {offsets = [0, 0], sizes = [8, 128], strides = [1, 1]} : vector<8x384xf32> to vector<8x128xf32>
    %619 = arith.mulf %617, %618 : vector<8x128xf32>
    %620 = arith.addf %587, %619 : vector<8x128xf32>
    %621 = vector.extract_strided_slice %616 {offsets = [0, 128], sizes = [8, 128], strides = [1, 1]} : vector<8x384xf32> to vector<8x128xf32>
    %622 = arith.mulf %617, %621 : vector<8x128xf32>
    %623 = arith.addf %590, %622 : vector<8x128xf32>
    %624 = vector.extract_strided_slice %616 {offsets = [0, 256], sizes = [8, 128], strides = [1, 1]} : vector<8x384xf32> to vector<8x128xf32>
    %625 = arith.mulf %617, %624 : vector<8x128xf32>
    %626 = arith.addf %593, %625 : vector<8x128xf32>
    %c378_i32_113 = arith.constant 378 : i32
    %627 = tpu.dynamic_rotate %561 by %c378_i32_113 dim 1 : vector<8x384xf32>, i32 -> vector<8x384xf32>
    %c0_114 = arith.constant 0 : index
    %c6528 = arith.constant 6528 : index
    %628 = vector.load %arg7[%c0_114, %c6528] : memref<8x10368xf32, #tpu.memory_space<vmem>>, vector<8x128xf32>
    %629 = vector.extract_strided_slice %627 {offsets = [0, 0], sizes = [8, 128], strides = [1, 1]} : vector<8x384xf32> to vector<8x128xf32>
    %630 = arith.mulf %628, %629 : vector<8x128xf32>
    %631 = arith.addf %598, %630 : vector<8x128xf32>
    %632 = vector.extract_strided_slice %627 {offsets = [0, 128], sizes = [8, 128], strides = [1, 1]} : vector<8x384xf32> to vector<8x128xf32>
    %633 = arith.mulf %628, %632 : vector<8x128xf32>
    %634 = arith.addf %601, %633 : vector<8x128xf32>
    %635 = vector.extract_strided_slice %627 {offsets = [0, 256], sizes = [8, 128], strides = [1, 1]} : vector<8x384xf32> to vector<8x128xf32>
    %636 = arith.mulf %628, %635 : vector<8x128xf32>
    %637 = arith.addf %604, %636 : vector<8x128xf32>
    %c377_i32_115 = arith.constant 377 : i32
    %638 = tpu.dynamic_rotate %561 by %c377_i32_115 dim 1 : vector<8x384xf32>, i32 -> vector<8x384xf32>
    %c0_116 = arith.constant 0 : index
    %c6656 = arith.constant 6656 : index
    %639 = vector.load %arg7[%c0_116, %c6656] : memref<8x10368xf32, #tpu.memory_space<vmem>>, vector<8x128xf32>
    %640 = vector.extract_strided_slice %638 {offsets = [0, 0], sizes = [8, 128], strides = [1, 1]} : vector<8x384xf32> to vector<8x128xf32>
    %641 = arith.mulf %639, %640 : vector<8x128xf32>
    %642 = arith.addf %609, %641 : vector<8x128xf32>
    %643 = vector.extract_strided_slice %638 {offsets = [0, 128], sizes = [8, 128], strides = [1, 1]} : vector<8x384xf32> to vector<8x128xf32>
    %644 = arith.mulf %639, %643 : vector<8x128xf32>
    %645 = arith.addf %612, %644 : vector<8x128xf32>
    %646 = vector.extract_strided_slice %638 {offsets = [0, 256], sizes = [8, 128], strides = [1, 1]} : vector<8x384xf32> to vector<8x128xf32>
    %647 = arith.mulf %639, %646 : vector<8x128xf32>
    %648 = arith.addf %615, %647 : vector<8x128xf32>
    %c376_i32_117 = arith.constant 376 : i32
    %649 = tpu.dynamic_rotate %561 by %c376_i32_117 dim 1 : vector<8x384xf32>, i32 -> vector<8x384xf32>
    %c0_118 = arith.constant 0 : index
    %c6784 = arith.constant 6784 : index
    %650 = vector.load %arg7[%c0_118, %c6784] : memref<8x10368xf32, #tpu.memory_space<vmem>>, vector<8x128xf32>
    %651 = vector.extract_strided_slice %649 {offsets = [0, 0], sizes = [8, 128], strides = [1, 1]} : vector<8x384xf32> to vector<8x128xf32>
    %652 = arith.mulf %650, %651 : vector<8x128xf32>
    %653 = arith.addf %620, %652 : vector<8x128xf32>
    %654 = vector.extract_strided_slice %649 {offsets = [0, 128], sizes = [8, 128], strides = [1, 1]} : vector<8x384xf32> to vector<8x128xf32>
    %655 = arith.mulf %650, %654 : vector<8x128xf32>
    %656 = arith.addf %623, %655 : vector<8x128xf32>
    %657 = vector.extract_strided_slice %649 {offsets = [0, 256], sizes = [8, 128], strides = [1, 1]} : vector<8x384xf32> to vector<8x128xf32>
    %658 = arith.mulf %650, %657 : vector<8x128xf32>
    %659 = arith.addf %626, %658 : vector<8x128xf32>
    %c496_i32 = arith.constant 496 : i32
    %660 = tpu.dynamic_rotate %69 by %c496_i32 dim 1 : vector<8x640xf32>, i32 -> vector<8x640xf32>
    %661 = vector.extract_strided_slice %660 {offsets = [0, 0], sizes = [8, 384], strides = [1, 1]} : vector<8x640xf32> to vector<8x384xf32>
    %c0_119 = arith.constant 0 : index
    %c6912 = arith.constant 6912 : index
    %662 = vector.load %arg7[%c0_119, %c6912] : memref<8x10368xf32, #tpu.memory_space<vmem>>, vector<8x128xf32>
    %663 = vector.extract_strided_slice %661 {offsets = [0, 0], sizes = [8, 128], strides = [1, 1]} : vector<8x384xf32> to vector<8x128xf32>
    %664 = arith.mulf %662, %663 : vector<8x128xf32>
    %665 = arith.addf %631, %664 : vector<8x128xf32>
    %666 = vector.extract_strided_slice %661 {offsets = [0, 128], sizes = [8, 128], strides = [1, 1]} : vector<8x384xf32> to vector<8x128xf32>
    %667 = arith.mulf %662, %666 : vector<8x128xf32>
    %668 = arith.addf %634, %667 : vector<8x128xf32>
    %669 = vector.extract_strided_slice %661 {offsets = [0, 256], sizes = [8, 128], strides = [1, 1]} : vector<8x384xf32> to vector<8x128xf32>
    %670 = arith.mulf %662, %669 : vector<8x128xf32>
    %671 = arith.addf %637, %670 : vector<8x128xf32>
    %c383_i32_120 = arith.constant 383 : i32
    %672 = tpu.dynamic_rotate %661 by %c383_i32_120 dim 1 : vector<8x384xf32>, i32 -> vector<8x384xf32>
    %c0_121 = arith.constant 0 : index
    %c7040 = arith.constant 7040 : index
    %673 = vector.load %arg7[%c0_121, %c7040] : memref<8x10368xf32, #tpu.memory_space<vmem>>, vector<8x128xf32>
    %674 = vector.extract_strided_slice %672 {offsets = [0, 0], sizes = [8, 128], strides = [1, 1]} : vector<8x384xf32> to vector<8x128xf32>
    %675 = arith.mulf %673, %674 : vector<8x128xf32>
    %676 = arith.addf %642, %675 : vector<8x128xf32>
    %677 = vector.extract_strided_slice %672 {offsets = [0, 128], sizes = [8, 128], strides = [1, 1]} : vector<8x384xf32> to vector<8x128xf32>
    %678 = arith.mulf %673, %677 : vector<8x128xf32>
    %679 = arith.addf %645, %678 : vector<8x128xf32>
    %680 = vector.extract_strided_slice %672 {offsets = [0, 256], sizes = [8, 128], strides = [1, 1]} : vector<8x384xf32> to vector<8x128xf32>
    %681 = arith.mulf %673, %680 : vector<8x128xf32>
    %682 = arith.addf %648, %681 : vector<8x128xf32>
    %c382_i32_122 = arith.constant 382 : i32
    %683 = tpu.dynamic_rotate %661 by %c382_i32_122 dim 1 : vector<8x384xf32>, i32 -> vector<8x384xf32>
    %c0_123 = arith.constant 0 : index
    %c7168 = arith.constant 7168 : index
    %684 = vector.load %arg7[%c0_123, %c7168] : memref<8x10368xf32, #tpu.memory_space<vmem>>, vector<8x128xf32>
    %685 = vector.extract_strided_slice %683 {offsets = [0, 0], sizes = [8, 128], strides = [1, 1]} : vector<8x384xf32> to vector<8x128xf32>
    %686 = arith.mulf %684, %685 : vector<8x128xf32>
    %687 = arith.addf %653, %686 : vector<8x128xf32>
    %688 = vector.extract_strided_slice %683 {offsets = [0, 128], sizes = [8, 128], strides = [1, 1]} : vector<8x384xf32> to vector<8x128xf32>
    %689 = arith.mulf %684, %688 : vector<8x128xf32>
    %690 = arith.addf %656, %689 : vector<8x128xf32>
    %691 = vector.extract_strided_slice %683 {offsets = [0, 256], sizes = [8, 128], strides = [1, 1]} : vector<8x384xf32> to vector<8x128xf32>
    %692 = arith.mulf %684, %691 : vector<8x128xf32>
    %693 = arith.addf %659, %692 : vector<8x128xf32>
    %c381_i32_124 = arith.constant 381 : i32
    %694 = tpu.dynamic_rotate %661 by %c381_i32_124 dim 1 : vector<8x384xf32>, i32 -> vector<8x384xf32>
    %c0_125 = arith.constant 0 : index
    %c7296 = arith.constant 7296 : index
    %695 = vector.load %arg7[%c0_125, %c7296] : memref<8x10368xf32, #tpu.memory_space<vmem>>, vector<8x128xf32>
    %696 = vector.extract_strided_slice %694 {offsets = [0, 0], sizes = [8, 128], strides = [1, 1]} : vector<8x384xf32> to vector<8x128xf32>
    %697 = arith.mulf %695, %696 : vector<8x128xf32>
    %698 = arith.addf %665, %697 : vector<8x128xf32>
    %699 = vector.extract_strided_slice %694 {offsets = [0, 128], sizes = [8, 128], strides = [1, 1]} : vector<8x384xf32> to vector<8x128xf32>
    %700 = arith.mulf %695, %699 : vector<8x128xf32>
    %701 = arith.addf %668, %700 : vector<8x128xf32>
    %702 = vector.extract_strided_slice %694 {offsets = [0, 256], sizes = [8, 128], strides = [1, 1]} : vector<8x384xf32> to vector<8x128xf32>
    %703 = arith.mulf %695, %702 : vector<8x128xf32>
    %704 = arith.addf %671, %703 : vector<8x128xf32>
    %c380_i32_126 = arith.constant 380 : i32
    %705 = tpu.dynamic_rotate %661 by %c380_i32_126 dim 1 : vector<8x384xf32>, i32 -> vector<8x384xf32>
    %c0_127 = arith.constant 0 : index
    %c7424 = arith.constant 7424 : index
    %706 = vector.load %arg7[%c0_127, %c7424] : memref<8x10368xf32, #tpu.memory_space<vmem>>, vector<8x128xf32>
    %707 = vector.extract_strided_slice %705 {offsets = [0, 0], sizes = [8, 128], strides = [1, 1]} : vector<8x384xf32> to vector<8x128xf32>
    %708 = arith.mulf %706, %707 : vector<8x128xf32>
    %709 = arith.addf %676, %708 : vector<8x128xf32>
    %710 = vector.extract_strided_slice %705 {offsets = [0, 128], sizes = [8, 128], strides = [1, 1]} : vector<8x384xf32> to vector<8x128xf32>
    %711 = arith.mulf %706, %710 : vector<8x128xf32>
    %712 = arith.addf %679, %711 : vector<8x128xf32>
    %713 = vector.extract_strided_slice %705 {offsets = [0, 256], sizes = [8, 128], strides = [1, 1]} : vector<8x384xf32> to vector<8x128xf32>
    %714 = arith.mulf %706, %713 : vector<8x128xf32>
    %715 = arith.addf %682, %714 : vector<8x128xf32>
    %c379_i32_128 = arith.constant 379 : i32
    %716 = tpu.dynamic_rotate %661 by %c379_i32_128 dim 1 : vector<8x384xf32>, i32 -> vector<8x384xf32>
    %c0_129 = arith.constant 0 : index
    %c7552 = arith.constant 7552 : index
    %717 = vector.load %arg7[%c0_129, %c7552] : memref<8x10368xf32, #tpu.memory_space<vmem>>, vector<8x128xf32>
    %718 = vector.extract_strided_slice %716 {offsets = [0, 0], sizes = [8, 128], strides = [1, 1]} : vector<8x384xf32> to vector<8x128xf32>
    %719 = arith.mulf %717, %718 : vector<8x128xf32>
    %720 = arith.addf %687, %719 : vector<8x128xf32>
    %721 = vector.extract_strided_slice %716 {offsets = [0, 128], sizes = [8, 128], strides = [1, 1]} : vector<8x384xf32> to vector<8x128xf32>
    %722 = arith.mulf %717, %721 : vector<8x128xf32>
    %723 = arith.addf %690, %722 : vector<8x128xf32>
    %724 = vector.extract_strided_slice %716 {offsets = [0, 256], sizes = [8, 128], strides = [1, 1]} : vector<8x384xf32> to vector<8x128xf32>
    %725 = arith.mulf %717, %724 : vector<8x128xf32>
    %726 = arith.addf %693, %725 : vector<8x128xf32>
    %c378_i32_130 = arith.constant 378 : i32
    %727 = tpu.dynamic_rotate %661 by %c378_i32_130 dim 1 : vector<8x384xf32>, i32 -> vector<8x384xf32>
    %c0_131 = arith.constant 0 : index
    %c7680 = arith.constant 7680 : index
    %728 = vector.load %arg7[%c0_131, %c7680] : memref<8x10368xf32, #tpu.memory_space<vmem>>, vector<8x128xf32>
    %729 = vector.extract_strided_slice %727 {offsets = [0, 0], sizes = [8, 128], strides = [1, 1]} : vector<8x384xf32> to vector<8x128xf32>
    %730 = arith.mulf %728, %729 : vector<8x128xf32>
    %731 = arith.addf %698, %730 : vector<8x128xf32>
    %732 = vector.extract_strided_slice %727 {offsets = [0, 128], sizes = [8, 128], strides = [1, 1]} : vector<8x384xf32> to vector<8x128xf32>
    %733 = arith.mulf %728, %732 : vector<8x128xf32>
    %734 = arith.addf %701, %733 : vector<8x128xf32>
    %735 = vector.extract_strided_slice %727 {offsets = [0, 256], sizes = [8, 128], strides = [1, 1]} : vector<8x384xf32> to vector<8x128xf32>
    %736 = arith.mulf %728, %735 : vector<8x128xf32>
    %737 = arith.addf %704, %736 : vector<8x128xf32>
    %c377_i32_132 = arith.constant 377 : i32
    %738 = tpu.dynamic_rotate %661 by %c377_i32_132 dim 1 : vector<8x384xf32>, i32 -> vector<8x384xf32>
    %c0_133 = arith.constant 0 : index
    %c7808 = arith.constant 7808 : index
    %739 = vector.load %arg7[%c0_133, %c7808] : memref<8x10368xf32, #tpu.memory_space<vmem>>, vector<8x128xf32>
    %740 = vector.extract_strided_slice %738 {offsets = [0, 0], sizes = [8, 128], strides = [1, 1]} : vector<8x384xf32> to vector<8x128xf32>
    %741 = arith.mulf %739, %740 : vector<8x128xf32>
    %742 = arith.addf %709, %741 : vector<8x128xf32>
    %743 = vector.extract_strided_slice %738 {offsets = [0, 128], sizes = [8, 128], strides = [1, 1]} : vector<8x384xf32> to vector<8x128xf32>
    %744 = arith.mulf %739, %743 : vector<8x128xf32>
    %745 = arith.addf %712, %744 : vector<8x128xf32>
    %746 = vector.extract_strided_slice %738 {offsets = [0, 256], sizes = [8, 128], strides = [1, 1]} : vector<8x384xf32> to vector<8x128xf32>
    %747 = arith.mulf %739, %746 : vector<8x128xf32>
    %748 = arith.addf %715, %747 : vector<8x128xf32>
    %c376_i32_134 = arith.constant 376 : i32
    %749 = tpu.dynamic_rotate %661 by %c376_i32_134 dim 1 : vector<8x384xf32>, i32 -> vector<8x384xf32>
    %c0_135 = arith.constant 0 : index
    %c7936 = arith.constant 7936 : index
    %750 = vector.load %arg7[%c0_135, %c7936] : memref<8x10368xf32, #tpu.memory_space<vmem>>, vector<8x128xf32>
    %751 = vector.extract_strided_slice %749 {offsets = [0, 0], sizes = [8, 128], strides = [1, 1]} : vector<8x384xf32> to vector<8x128xf32>
    %752 = arith.mulf %750, %751 : vector<8x128xf32>
    %753 = arith.addf %720, %752 : vector<8x128xf32>
    %754 = vector.extract_strided_slice %749 {offsets = [0, 128], sizes = [8, 128], strides = [1, 1]} : vector<8x384xf32> to vector<8x128xf32>
    %755 = arith.mulf %750, %754 : vector<8x128xf32>
    %756 = arith.addf %723, %755 : vector<8x128xf32>
    %757 = vector.extract_strided_slice %749 {offsets = [0, 256], sizes = [8, 128], strides = [1, 1]} : vector<8x384xf32> to vector<8x128xf32>
    %758 = arith.mulf %750, %757 : vector<8x128xf32>
    %759 = arith.addf %726, %758 : vector<8x128xf32>
    %c472_i32 = arith.constant 472 : i32
    %760 = tpu.dynamic_rotate %69 by %c472_i32 dim 1 : vector<8x640xf32>, i32 -> vector<8x640xf32>
    %761 = vector.extract_strided_slice %760 {offsets = [0, 0], sizes = [8, 384], strides = [1, 1]} : vector<8x640xf32> to vector<8x384xf32>
    %c0_136 = arith.constant 0 : index
    %c8064 = arith.constant 8064 : index
    %762 = vector.load %arg7[%c0_136, %c8064] : memref<8x10368xf32, #tpu.memory_space<vmem>>, vector<8x128xf32>
    %763 = vector.extract_strided_slice %761 {offsets = [0, 0], sizes = [8, 128], strides = [1, 1]} : vector<8x384xf32> to vector<8x128xf32>
    %764 = arith.mulf %762, %763 : vector<8x128xf32>
    %765 = arith.addf %731, %764 : vector<8x128xf32>
    %766 = vector.extract_strided_slice %761 {offsets = [0, 128], sizes = [8, 128], strides = [1, 1]} : vector<8x384xf32> to vector<8x128xf32>
    %767 = arith.mulf %762, %766 : vector<8x128xf32>
    %768 = arith.addf %734, %767 : vector<8x128xf32>
    %769 = vector.extract_strided_slice %761 {offsets = [0, 256], sizes = [8, 128], strides = [1, 1]} : vector<8x384xf32> to vector<8x128xf32>
    %770 = arith.mulf %762, %769 : vector<8x128xf32>
    %771 = arith.addf %737, %770 : vector<8x128xf32>
    %c383_i32_137 = arith.constant 383 : i32
    %772 = tpu.dynamic_rotate %761 by %c383_i32_137 dim 1 : vector<8x384xf32>, i32 -> vector<8x384xf32>
    %c0_138 = arith.constant 0 : index
    %c8192 = arith.constant 8192 : index
    %773 = vector.load %arg7[%c0_138, %c8192] : memref<8x10368xf32, #tpu.memory_space<vmem>>, vector<8x128xf32>
    %774 = vector.extract_strided_slice %772 {offsets = [0, 0], sizes = [8, 128], strides = [1, 1]} : vector<8x384xf32> to vector<8x128xf32>
    %775 = arith.mulf %773, %774 : vector<8x128xf32>
    %776 = arith.addf %742, %775 : vector<8x128xf32>
    %777 = vector.extract_strided_slice %772 {offsets = [0, 128], sizes = [8, 128], strides = [1, 1]} : vector<8x384xf32> to vector<8x128xf32>
    %778 = arith.mulf %773, %777 : vector<8x128xf32>
    %779 = arith.addf %745, %778 : vector<8x128xf32>
    %780 = vector.extract_strided_slice %772 {offsets = [0, 256], sizes = [8, 128], strides = [1, 1]} : vector<8x384xf32> to vector<8x128xf32>
    %781 = arith.mulf %773, %780 : vector<8x128xf32>
    %782 = arith.addf %748, %781 : vector<8x128xf32>
    %c382_i32_139 = arith.constant 382 : i32
    %783 = tpu.dynamic_rotate %761 by %c382_i32_139 dim 1 : vector<8x384xf32>, i32 -> vector<8x384xf32>
    %c0_140 = arith.constant 0 : index
    %c8320 = arith.constant 8320 : index
    %784 = vector.load %arg7[%c0_140, %c8320] : memref<8x10368xf32, #tpu.memory_space<vmem>>, vector<8x128xf32>
    %785 = vector.extract_strided_slice %783 {offsets = [0, 0], sizes = [8, 128], strides = [1, 1]} : vector<8x384xf32> to vector<8x128xf32>
    %786 = arith.mulf %784, %785 : vector<8x128xf32>
    %787 = arith.addf %753, %786 : vector<8x128xf32>
    %788 = vector.extract_strided_slice %783 {offsets = [0, 128], sizes = [8, 128], strides = [1, 1]} : vector<8x384xf32> to vector<8x128xf32>
    %789 = arith.mulf %784, %788 : vector<8x128xf32>
    %790 = arith.addf %756, %789 : vector<8x128xf32>
    %791 = vector.extract_strided_slice %783 {offsets = [0, 256], sizes = [8, 128], strides = [1, 1]} : vector<8x384xf32> to vector<8x128xf32>
    %792 = arith.mulf %784, %791 : vector<8x128xf32>
    %793 = arith.addf %759, %792 : vector<8x128xf32>
    %c381_i32_141 = arith.constant 381 : i32
    %794 = tpu.dynamic_rotate %761 by %c381_i32_141 dim 1 : vector<8x384xf32>, i32 -> vector<8x384xf32>
    %c0_142 = arith.constant 0 : index
    %c8448 = arith.constant 8448 : index
    %795 = vector.load %arg7[%c0_142, %c8448] : memref<8x10368xf32, #tpu.memory_space<vmem>>, vector<8x128xf32>
    %796 = vector.extract_strided_slice %794 {offsets = [0, 0], sizes = [8, 128], strides = [1, 1]} : vector<8x384xf32> to vector<8x128xf32>
    %797 = arith.mulf %795, %796 : vector<8x128xf32>
    %798 = arith.addf %765, %797 : vector<8x128xf32>
    %799 = vector.extract_strided_slice %794 {offsets = [0, 128], sizes = [8, 128], strides = [1, 1]} : vector<8x384xf32> to vector<8x128xf32>
    %800 = arith.mulf %795, %799 : vector<8x128xf32>
    %801 = arith.addf %768, %800 : vector<8x128xf32>
    %802 = vector.extract_strided_slice %794 {offsets = [0, 256], sizes = [8, 128], strides = [1, 1]} : vector<8x384xf32> to vector<8x128xf32>
    %803 = arith.mulf %795, %802 : vector<8x128xf32>
    %804 = arith.addf %771, %803 : vector<8x128xf32>
    %c380_i32_143 = arith.constant 380 : i32
    %805 = tpu.dynamic_rotate %761 by %c380_i32_143 dim 1 : vector<8x384xf32>, i32 -> vector<8x384xf32>
    %c0_144 = arith.constant 0 : index
    %c8576 = arith.constant 8576 : index
    %806 = vector.load %arg7[%c0_144, %c8576] : memref<8x10368xf32, #tpu.memory_space<vmem>>, vector<8x128xf32>
    %807 = vector.extract_strided_slice %805 {offsets = [0, 0], sizes = [8, 128], strides = [1, 1]} : vector<8x384xf32> to vector<8x128xf32>
    %808 = arith.mulf %806, %807 : vector<8x128xf32>
    %809 = arith.addf %776, %808 : vector<8x128xf32>
    %810 = vector.extract_strided_slice %805 {offsets = [0, 128], sizes = [8, 128], strides = [1, 1]} : vector<8x384xf32> to vector<8x128xf32>
    %811 = arith.mulf %806, %810 : vector<8x128xf32>
    %812 = arith.addf %779, %811 : vector<8x128xf32>
    %813 = vector.extract_strided_slice %805 {offsets = [0, 256], sizes = [8, 128], strides = [1, 1]} : vector<8x384xf32> to vector<8x128xf32>
    %814 = arith.mulf %806, %813 : vector<8x128xf32>
    %815 = arith.addf %782, %814 : vector<8x128xf32>
    %c379_i32_145 = arith.constant 379 : i32
    %816 = tpu.dynamic_rotate %761 by %c379_i32_145 dim 1 : vector<8x384xf32>, i32 -> vector<8x384xf32>
    %c0_146 = arith.constant 0 : index
    %c8704 = arith.constant 8704 : index
    %817 = vector.load %arg7[%c0_146, %c8704] : memref<8x10368xf32, #tpu.memory_space<vmem>>, vector<8x128xf32>
    %818 = vector.extract_strided_slice %816 {offsets = [0, 0], sizes = [8, 128], strides = [1, 1]} : vector<8x384xf32> to vector<8x128xf32>
    %819 = arith.mulf %817, %818 : vector<8x128xf32>
    %820 = arith.addf %787, %819 : vector<8x128xf32>
    %821 = vector.extract_strided_slice %816 {offsets = [0, 128], sizes = [8, 128], strides = [1, 1]} : vector<8x384xf32> to vector<8x128xf32>
    %822 = arith.mulf %817, %821 : vector<8x128xf32>
    %823 = arith.addf %790, %822 : vector<8x128xf32>
    %824 = vector.extract_strided_slice %816 {offsets = [0, 256], sizes = [8, 128], strides = [1, 1]} : vector<8x384xf32> to vector<8x128xf32>
    %825 = arith.mulf %817, %824 : vector<8x128xf32>
    %826 = arith.addf %793, %825 : vector<8x128xf32>
    %c378_i32_147 = arith.constant 378 : i32
    %827 = tpu.dynamic_rotate %761 by %c378_i32_147 dim 1 : vector<8x384xf32>, i32 -> vector<8x384xf32>
    %c0_148 = arith.constant 0 : index
    %c8832 = arith.constant 8832 : index
    %828 = vector.load %arg7[%c0_148, %c8832] : memref<8x10368xf32, #tpu.memory_space<vmem>>, vector<8x128xf32>
    %829 = vector.extract_strided_slice %827 {offsets = [0, 0], sizes = [8, 128], strides = [1, 1]} : vector<8x384xf32> to vector<8x128xf32>
    %830 = arith.mulf %828, %829 : vector<8x128xf32>
    %831 = arith.addf %798, %830 : vector<8x128xf32>
    %832 = vector.extract_strided_slice %827 {offsets = [0, 128], sizes = [8, 128], strides = [1, 1]} : vector<8x384xf32> to vector<8x128xf32>
    %833 = arith.mulf %828, %832 : vector<8x128xf32>
    %834 = arith.addf %801, %833 : vector<8x128xf32>
    %835 = vector.extract_strided_slice %827 {offsets = [0, 256], sizes = [8, 128], strides = [1, 1]} : vector<8x384xf32> to vector<8x128xf32>
    %836 = arith.mulf %828, %835 : vector<8x128xf32>
    %837 = arith.addf %804, %836 : vector<8x128xf32>
    %c377_i32_149 = arith.constant 377 : i32
    %838 = tpu.dynamic_rotate %761 by %c377_i32_149 dim 1 : vector<8x384xf32>, i32 -> vector<8x384xf32>
    %c0_150 = arith.constant 0 : index
    %c8960 = arith.constant 8960 : index
    %839 = vector.load %arg7[%c0_150, %c8960] : memref<8x10368xf32, #tpu.memory_space<vmem>>, vector<8x128xf32>
    %840 = vector.extract_strided_slice %838 {offsets = [0, 0], sizes = [8, 128], strides = [1, 1]} : vector<8x384xf32> to vector<8x128xf32>
    %841 = arith.mulf %839, %840 : vector<8x128xf32>
    %842 = arith.addf %809, %841 : vector<8x128xf32>
    %843 = vector.extract_strided_slice %838 {offsets = [0, 128], sizes = [8, 128], strides = [1, 1]} : vector<8x384xf32> to vector<8x128xf32>
    %844 = arith.mulf %839, %843 : vector<8x128xf32>
    %845 = arith.addf %812, %844 : vector<8x128xf32>
    %846 = vector.extract_strided_slice %838 {offsets = [0, 256], sizes = [8, 128], strides = [1, 1]} : vector<8x384xf32> to vector<8x128xf32>
    %847 = arith.mulf %839, %846 : vector<8x128xf32>
    %848 = arith.addf %815, %847 : vector<8x128xf32>
    %c376_i32_151 = arith.constant 376 : i32
    %849 = tpu.dynamic_rotate %761 by %c376_i32_151 dim 1 : vector<8x384xf32>, i32 -> vector<8x384xf32>
    %c0_152 = arith.constant 0 : index
    %c9088 = arith.constant 9088 : index
    %850 = vector.load %arg7[%c0_152, %c9088] : memref<8x10368xf32, #tpu.memory_space<vmem>>, vector<8x128xf32>
    %851 = vector.extract_strided_slice %849 {offsets = [0, 0], sizes = [8, 128], strides = [1, 1]} : vector<8x384xf32> to vector<8x128xf32>
    %852 = arith.mulf %850, %851 : vector<8x128xf32>
    %853 = arith.addf %820, %852 : vector<8x128xf32>
    %854 = vector.extract_strided_slice %849 {offsets = [0, 128], sizes = [8, 128], strides = [1, 1]} : vector<8x384xf32> to vector<8x128xf32>
    %855 = arith.mulf %850, %854 : vector<8x128xf32>
    %856 = arith.addf %823, %855 : vector<8x128xf32>
    %857 = vector.extract_strided_slice %849 {offsets = [0, 256], sizes = [8, 128], strides = [1, 1]} : vector<8x384xf32> to vector<8x128xf32>
    %858 = arith.mulf %850, %857 : vector<8x128xf32>
    %859 = arith.addf %826, %858 : vector<8x128xf32>
    %c448_i32 = arith.constant 448 : i32
    %860 = tpu.dynamic_rotate %69 by %c448_i32 dim 1 : vector<8x640xf32>, i32 -> vector<8x640xf32>
    %861 = vector.extract_strided_slice %860 {offsets = [0, 0], sizes = [8, 384], strides = [1, 1]} : vector<8x640xf32> to vector<8x384xf32>
    %c0_153 = arith.constant 0 : index
    %c9216 = arith.constant 9216 : index
    %862 = vector.load %arg7[%c0_153, %c9216] : memref<8x10368xf32, #tpu.memory_space<vmem>>, vector<8x128xf32>
    %863 = vector.extract_strided_slice %861 {offsets = [0, 0], sizes = [8, 128], strides = [1, 1]} : vector<8x384xf32> to vector<8x128xf32>
    %864 = arith.mulf %862, %863 : vector<8x128xf32>
    %865 = arith.addf %831, %864 : vector<8x128xf32>
    %866 = vector.extract_strided_slice %861 {offsets = [0, 128], sizes = [8, 128], strides = [1, 1]} : vector<8x384xf32> to vector<8x128xf32>
    %867 = arith.mulf %862, %866 : vector<8x128xf32>
    %868 = arith.addf %834, %867 : vector<8x128xf32>
    %869 = vector.extract_strided_slice %861 {offsets = [0, 256], sizes = [8, 128], strides = [1, 1]} : vector<8x384xf32> to vector<8x128xf32>
    %870 = arith.mulf %862, %869 : vector<8x128xf32>
    %871 = arith.addf %837, %870 : vector<8x128xf32>
    %c383_i32_154 = arith.constant 383 : i32
    %872 = tpu.dynamic_rotate %861 by %c383_i32_154 dim 1 : vector<8x384xf32>, i32 -> vector<8x384xf32>
    %c0_155 = arith.constant 0 : index
    %c9344 = arith.constant 9344 : index
    %873 = vector.load %arg7[%c0_155, %c9344] : memref<8x10368xf32, #tpu.memory_space<vmem>>, vector<8x128xf32>
    %874 = vector.extract_strided_slice %872 {offsets = [0, 0], sizes = [8, 128], strides = [1, 1]} : vector<8x384xf32> to vector<8x128xf32>
    %875 = arith.mulf %873, %874 : vector<8x128xf32>
    %876 = arith.addf %842, %875 : vector<8x128xf32>
    %877 = vector.extract_strided_slice %872 {offsets = [0, 128], sizes = [8, 128], strides = [1, 1]} : vector<8x384xf32> to vector<8x128xf32>
    %878 = arith.mulf %873, %877 : vector<8x128xf32>
    %879 = arith.addf %845, %878 : vector<8x128xf32>
    %880 = vector.extract_strided_slice %872 {offsets = [0, 256], sizes = [8, 128], strides = [1, 1]} : vector<8x384xf32> to vector<8x128xf32>
    %881 = arith.mulf %873, %880 : vector<8x128xf32>
    %882 = arith.addf %848, %881 : vector<8x128xf32>
    %c382_i32_156 = arith.constant 382 : i32
    %883 = tpu.dynamic_rotate %861 by %c382_i32_156 dim 1 : vector<8x384xf32>, i32 -> vector<8x384xf32>
    %c0_157 = arith.constant 0 : index
    %c9472 = arith.constant 9472 : index
    %884 = vector.load %arg7[%c0_157, %c9472] : memref<8x10368xf32, #tpu.memory_space<vmem>>, vector<8x128xf32>
    %885 = vector.extract_strided_slice %883 {offsets = [0, 0], sizes = [8, 128], strides = [1, 1]} : vector<8x384xf32> to vector<8x128xf32>
    %886 = arith.mulf %884, %885 : vector<8x128xf32>
    %887 = arith.addf %853, %886 : vector<8x128xf32>
    %888 = vector.extract_strided_slice %883 {offsets = [0, 128], sizes = [8, 128], strides = [1, 1]} : vector<8x384xf32> to vector<8x128xf32>
    %889 = arith.mulf %884, %888 : vector<8x128xf32>
    %890 = arith.addf %856, %889 : vector<8x128xf32>
    %891 = vector.extract_strided_slice %883 {offsets = [0, 256], sizes = [8, 128], strides = [1, 1]} : vector<8x384xf32> to vector<8x128xf32>
    %892 = arith.mulf %884, %891 : vector<8x128xf32>
    %893 = arith.addf %859, %892 : vector<8x128xf32>
    %c381_i32_158 = arith.constant 381 : i32
    %894 = tpu.dynamic_rotate %861 by %c381_i32_158 dim 1 : vector<8x384xf32>, i32 -> vector<8x384xf32>
    %c0_159 = arith.constant 0 : index
    %c9600 = arith.constant 9600 : index
    %895 = vector.load %arg7[%c0_159, %c9600] : memref<8x10368xf32, #tpu.memory_space<vmem>>, vector<8x128xf32>
    %896 = vector.extract_strided_slice %894 {offsets = [0, 0], sizes = [8, 128], strides = [1, 1]} : vector<8x384xf32> to vector<8x128xf32>
    %897 = arith.mulf %895, %896 : vector<8x128xf32>
    %898 = arith.addf %865, %897 : vector<8x128xf32>
    %899 = vector.extract_strided_slice %894 {offsets = [0, 128], sizes = [8, 128], strides = [1, 1]} : vector<8x384xf32> to vector<8x128xf32>
    %900 = arith.mulf %895, %899 : vector<8x128xf32>
    %901 = arith.addf %868, %900 : vector<8x128xf32>
    %902 = vector.extract_strided_slice %894 {offsets = [0, 256], sizes = [8, 128], strides = [1, 1]} : vector<8x384xf32> to vector<8x128xf32>
    %903 = arith.mulf %895, %902 : vector<8x128xf32>
    %904 = arith.addf %871, %903 : vector<8x128xf32>
    %c380_i32_160 = arith.constant 380 : i32
    %905 = tpu.dynamic_rotate %861 by %c380_i32_160 dim 1 : vector<8x384xf32>, i32 -> vector<8x384xf32>
    %c0_161 = arith.constant 0 : index
    %c9728 = arith.constant 9728 : index
    %906 = vector.load %arg7[%c0_161, %c9728] : memref<8x10368xf32, #tpu.memory_space<vmem>>, vector<8x128xf32>
    %907 = vector.extract_strided_slice %905 {offsets = [0, 0], sizes = [8, 128], strides = [1, 1]} : vector<8x384xf32> to vector<8x128xf32>
    %908 = arith.mulf %906, %907 : vector<8x128xf32>
    %909 = arith.addf %876, %908 : vector<8x128xf32>
    %910 = vector.extract_strided_slice %905 {offsets = [0, 128], sizes = [8, 128], strides = [1, 1]} : vector<8x384xf32> to vector<8x128xf32>
    %911 = arith.mulf %906, %910 : vector<8x128xf32>
    %912 = arith.addf %879, %911 : vector<8x128xf32>
    %913 = vector.extract_strided_slice %905 {offsets = [0, 256], sizes = [8, 128], strides = [1, 1]} : vector<8x384xf32> to vector<8x128xf32>
    %914 = arith.mulf %906, %913 : vector<8x128xf32>
    %915 = arith.addf %882, %914 : vector<8x128xf32>
    %c379_i32_162 = arith.constant 379 : i32
    %916 = tpu.dynamic_rotate %861 by %c379_i32_162 dim 1 : vector<8x384xf32>, i32 -> vector<8x384xf32>
    %c0_163 = arith.constant 0 : index
    %c9856 = arith.constant 9856 : index
    %917 = vector.load %arg7[%c0_163, %c9856] : memref<8x10368xf32, #tpu.memory_space<vmem>>, vector<8x128xf32>
    %918 = vector.extract_strided_slice %916 {offsets = [0, 0], sizes = [8, 128], strides = [1, 1]} : vector<8x384xf32> to vector<8x128xf32>
    %919 = arith.mulf %917, %918 : vector<8x128xf32>
    %920 = arith.addf %887, %919 : vector<8x128xf32>
    %921 = vector.extract_strided_slice %916 {offsets = [0, 128], sizes = [8, 128], strides = [1, 1]} : vector<8x384xf32> to vector<8x128xf32>
    %922 = arith.mulf %917, %921 : vector<8x128xf32>
    %923 = arith.addf %890, %922 : vector<8x128xf32>
    %924 = vector.extract_strided_slice %916 {offsets = [0, 256], sizes = [8, 128], strides = [1, 1]} : vector<8x384xf32> to vector<8x128xf32>
    %925 = arith.mulf %917, %924 : vector<8x128xf32>
    %926 = arith.addf %893, %925 : vector<8x128xf32>
    %c378_i32_164 = arith.constant 378 : i32
    %927 = tpu.dynamic_rotate %861 by %c378_i32_164 dim 1 : vector<8x384xf32>, i32 -> vector<8x384xf32>
    %c0_165 = arith.constant 0 : index
    %c9984 = arith.constant 9984 : index
    %928 = vector.load %arg7[%c0_165, %c9984] : memref<8x10368xf32, #tpu.memory_space<vmem>>, vector<8x128xf32>
    %929 = vector.extract_strided_slice %927 {offsets = [0, 0], sizes = [8, 128], strides = [1, 1]} : vector<8x384xf32> to vector<8x128xf32>
    %930 = arith.mulf %928, %929 : vector<8x128xf32>
    %931 = arith.addf %898, %930 : vector<8x128xf32>
    %932 = vector.extract_strided_slice %927 {offsets = [0, 128], sizes = [8, 128], strides = [1, 1]} : vector<8x384xf32> to vector<8x128xf32>
    %933 = arith.mulf %928, %932 : vector<8x128xf32>
    %934 = arith.addf %901, %933 : vector<8x128xf32>
    %935 = vector.extract_strided_slice %927 {offsets = [0, 256], sizes = [8, 128], strides = [1, 1]} : vector<8x384xf32> to vector<8x128xf32>
    %936 = arith.mulf %928, %935 : vector<8x128xf32>
    %937 = arith.addf %904, %936 : vector<8x128xf32>
    %c377_i32_166 = arith.constant 377 : i32
    %938 = tpu.dynamic_rotate %861 by %c377_i32_166 dim 1 : vector<8x384xf32>, i32 -> vector<8x384xf32>
    %c0_167 = arith.constant 0 : index
    %c10112 = arith.constant 10112 : index
    %939 = vector.load %arg7[%c0_167, %c10112] : memref<8x10368xf32, #tpu.memory_space<vmem>>, vector<8x128xf32>
    %940 = vector.extract_strided_slice %938 {offsets = [0, 0], sizes = [8, 128], strides = [1, 1]} : vector<8x384xf32> to vector<8x128xf32>
    %941 = arith.mulf %939, %940 : vector<8x128xf32>
    %942 = arith.addf %909, %941 : vector<8x128xf32>
    %943 = vector.extract_strided_slice %938 {offsets = [0, 128], sizes = [8, 128], strides = [1, 1]} : vector<8x384xf32> to vector<8x128xf32>
    %944 = arith.mulf %939, %943 : vector<8x128xf32>
    %945 = arith.addf %912, %944 : vector<8x128xf32>
    %946 = vector.extract_strided_slice %938 {offsets = [0, 256], sizes = [8, 128], strides = [1, 1]} : vector<8x384xf32> to vector<8x128xf32>
    %947 = arith.mulf %939, %946 : vector<8x128xf32>
    %948 = arith.addf %915, %947 : vector<8x128xf32>
    %c376_i32_168 = arith.constant 376 : i32
    %949 = tpu.dynamic_rotate %861 by %c376_i32_168 dim 1 : vector<8x384xf32>, i32 -> vector<8x384xf32>
    %c0_169 = arith.constant 0 : index
    %c10240 = arith.constant 10240 : index
    %950 = vector.load %arg7[%c0_169, %c10240] : memref<8x10368xf32, #tpu.memory_space<vmem>>, vector<8x128xf32>
    %951 = vector.extract_strided_slice %949 {offsets = [0, 0], sizes = [8, 128], strides = [1, 1]} : vector<8x384xf32> to vector<8x128xf32>
    %952 = arith.mulf %950, %951 : vector<8x128xf32>
    %953 = arith.addf %920, %952 : vector<8x128xf32>
    %954 = vector.extract_strided_slice %949 {offsets = [0, 128], sizes = [8, 128], strides = [1, 1]} : vector<8x384xf32> to vector<8x128xf32>
    %955 = arith.mulf %950, %954 : vector<8x128xf32>
    %956 = arith.addf %923, %955 : vector<8x128xf32>
    %957 = vector.extract_strided_slice %949 {offsets = [0, 256], sizes = [8, 128], strides = [1, 1]} : vector<8x384xf32> to vector<8x128xf32>
    %958 = arith.mulf %950, %957 : vector<8x128xf32>
    %959 = arith.addf %926, %958 : vector<8x128xf32>
    %960 = arith.addf %931, %942 : vector<8x128xf32>
    %961 = arith.addf %960, %953 : vector<8x128xf32>
    %962 = arith.addf %934, %945 : vector<8x128xf32>
    %963 = arith.addf %962, %956 : vector<8x128xf32>
    %964 = arith.addf %937, %948 : vector<8x128xf32>
    %965 = arith.addf %964, %959 : vector<8x128xf32>
    %966 = tpu.concatenate %961, %963, %965 in 1 : vector<8x128xf32>, vector<8x128xf32>, vector<8x128xf32> -> vector<8x384xf32>
    %967 = vector.extract_strided_slice %0 {offsets = [0, 4], sizes = [8, 1], strides = [1, 1]} : vector<8x6xf32> to vector<8x1xf32>
    %968 = vector.extract_strided_slice %0 {offsets = [0, 5], sizes = [8, 1], strides = [1, 1]} : vector<8x6xf32> to vector<8x1xf32>
    %c0_170 = arith.constant 0 : index
    %c0_171 = arith.constant 0 : index
    %969 = vector.load %arg6[%c0_170, %c0_171] : memref<1x384xf32, #tpu.memory_space<vmem>>, vector<1x384xf32>
    %970 = vector.broadcast %969 : vector<1x384xf32> to vector<8x384xf32>
    %971 = arith.mulf %966, %970 : vector<8x384xf32>
    %cst_172 = arith.constant dense<0.000000e+00> : vector<8xf32>
    %972 = vector.multi_reduction <add>, %971, %cst_172 [1] : vector<8x384xf32> to vector<8xf32>
    %973 = vector.shape_cast %972 : vector<8xf32> to vector<8x1xf32>
    %c4_i32_173 = arith.constant 4 : i32
    %974 = tpu.dynamic_rotate %973 by %c4_i32_173 dim 0 : vector<8x1xf32>, i32 -> vector<8x1xf32>
    %975 = arith.addf %973, %974 : vector<8x1xf32>
    %976 = arith.mulf %971, %971 : vector<8x384xf32>
    %cst_174 = arith.constant dense<0.000000e+00> : vector<8xf32>
    %977 = vector.multi_reduction <add>, %976, %cst_174 [1] : vector<8x384xf32> to vector<8xf32>
    %978 = vector.shape_cast %977 : vector<8xf32> to vector<8x1xf32>
    %c4_i32_175 = arith.constant 4 : i32
    %979 = tpu.dynamic_rotate %978 by %c4_i32_175 dim 0 : vector<8x1xf32>, i32 -> vector<8x1xf32>
    %980 = arith.addf %978, %979 : vector<8x1xf32>
    %cst_176 = arith.constant 0.001953125 : f32
    %981 = vector.broadcast %cst_176 : f32 to vector<8x1xf32>
    %982 = arith.mulf %975, %981 : vector<8x1xf32>
    %cst_177 = arith.constant 0.001953125 : f32
    %983 = vector.broadcast %cst_177 : f32 to vector<8x1xf32>
    %984 = arith.mulf %980, %983 : vector<8x1xf32>
    %985 = arith.mulf %982, %982 : vector<8x1xf32>
    %986 = arith.subf %984, %985 : vector<8x1xf32>
    %cst_178 = arith.constant 9.99999974E-6 : f32
    %987 = vector.broadcast %cst_178 : f32 to vector<8x1xf32>
    %988 = arith.addf %986, %987 : vector<8x1xf32>
    %989 = math.rsqrt %988 : vector<8x1xf32>
    %990 = arith.mulf %967, %989 : vector<8x1xf32>
    %991 = arith.mulf %982, %990 : vector<8x1xf32>
    %992 = arith.subf %968, %991 : vector<8x1xf32>
    %993 = vector.broadcast %990 : vector<8x1xf32> to vector<8x384xf32>
    %994 = arith.mulf %966, %993 : vector<8x384xf32>
    %995 = vector.broadcast %992 : vector<8x1xf32> to vector<8x384xf32>
    %996 = arith.addf %994, %995 : vector<8x384xf32>
    %c0_179 = arith.constant 0 : index
    %c0_180 = arith.constant 0 : index
    %997 = vector.load %arg1[%c0_179, %c0_180] : memref<8x384xf32, #tpu.memory_space<vmem>>, vector<8x384xf32>
    %998 = arith.addf %996, %997 : vector<8x384xf32>
    %cst_181 = arith.constant 5.000000e-01 : f32
    %999 = vector.broadcast %cst_181 : f32 to vector<8x384xf32>
    %1000 = arith.mulf %999, %998 : vector<8x384xf32>
    %1001 = arith.mulf %998, %998 : vector<8x384xf32>
    %1002 = arith.mulf %1001, %998 : vector<8x384xf32>
    %cst_182 = arith.constant 4.471500e-02 : f32
    %1003 = vector.broadcast %cst_182 : f32 to vector<8x384xf32>
    %1004 = arith.mulf %1003, %1002 : vector<8x384xf32>
    %1005 = arith.addf %998, %1004 : vector<8x384xf32>
    %cst_183 = arith.constant 0.797884583 : f32
    %1006 = vector.broadcast %cst_183 : f32 to vector<8x384xf32>
    %1007 = arith.mulf %1006, %1005 : vector<8x384xf32>
    %1008 = math.tanh %1007 : vector<8x384xf32>
    %cst_184 = arith.constant 1.000000e+00 : f32
    %1009 = vector.broadcast %cst_184 : f32 to vector<8x384xf32>
    %1010 = arith.addf %1009, %1008 : vector<8x384xf32>
    %1011 = arith.mulf %1000, %1010 : vector<8x384xf32>
    %c0_185 = arith.constant 0 : index
    %c0_186 = arith.constant 0 : index
    %1012 = vector.load %arg9[%c0_185, %c0_186] : memref<8x384xf32, #tpu.memory_space<vmem>>, vector<8x384xf32>
    tpu.vector_store %arg9[%c0_185, %c0_186], %1011 {strides = array<i32>} : memref<8x384xf32, #tpu.memory_space<vmem>>, vector<8x384xf32>,
    return
  }
}

</mosaic_0001>

<llo_original>
// kernel: shuffle_plug_padding2_forward.1
$region0: #{shuffle_plug_padding2_forward.1}
  #allocation0 [shape = 'u32[]', space=smem, size = 0x4, offset = 0x4, fixed_abs, tag = 'smem constant byte address 0x4 - core index']
  #allocation1 [shape = 'u32[144,128]{1,0:T(1,128)}', space=vmem, size = 0x12000, scoped, tag = 'internal scratch']
  %s0 = inlined_call_operand.vmem [shape: bf16[8,256], index: 0, kind: input, shape index: {}]
  %s1 = inlined_call_operand.vmem [shape: f32[8,384], index: 1, kind: input, shape index: {}]
  %s2 = inlined_call_operand.hbm [shape: bf16[256,1280], index: 2, kind: input, shape index: {}]
  %s3 = inlined_call_operand.vmem [shape: f32[1,1280], index: 3, kind: input, shape index: {}]
  %s4 = inlined_call_operand.vmem [shape: f32[1,640], index: 4, kind: input, shape index: {}]
  %s5 = inlined_call_operand.vmem [shape: f32[1,640], index: 5, kind: input, shape index: {}]
  %s6 = inlined_call_operand.vmem [shape: f32[1,384], index: 6, kind: input, shape index: {}]
  %s7 = inlined_call_operand.vmem [shape: f32[8,10368], index: 7, kind: input, shape index: {}]
  %s8 = inlined_call_operand.vmem [shape: f32[8,6], index: 8, kind: input, shape index: {}]
  %s9 = inlined_call_operand.vmem [shape: f32[8,384], index: 9, kind: output, shape index: {}]
  %s10 = sld [smem:[#allocation0]]
  $region50: #{shuffle_plug_padding2_forward.1} parent=0
    _
  %s12 = ssub.s32 1, %s10
  %s13 = scalar_select 0, %s12, %s10
  $region1: #{shuffle_plug_padding2_forward.1} parent=0
    #allocation2 [shape = 'u8[655360]{0}', space=vmem, size = 0xa0000, scoped, tag = 'input window, operand 2, single buffered']
    #allocation3 [shape = 's32[1]{0}', space=sflag, size = 0x4, scoped, tag = 'scoped memory for shuffle_plug_padding2_forward.1']
    %14 = vsyncpa [#allocation3], 0
    // Predicated region
    $region2: #{shuffle_plug_padding2_forward.1} parent=1 // pred_check
      _
    $region3: #{shuffle_plug_padding2_forward.1} parent=1 // pred_check_branch
      %16 = sbr.rel (0) target = $region5
    $region4: #{shuffle_plug_padding2_forward.1} parent=1 // pred_region
      _
    $region5: #{shuffle_plug_padding2_forward.1} parent=1 // pred_fallthru
      _
    // Predicated region
    $region6: #{shuffle_plug_padding2_forward.1} parent=1 // pred_check
      _
    $region7: #{shuffle_plug_padding2_forward.1} parent=1 // pred_check_branch
      %18 = sbr.rel (0) target = $region9
    $region8: #{shuffle_plug_padding2_forward.1} parent=1 // pred_region
      _
    $region9: #{shuffle_plug_padding2_forward.1} parent=1 // pred_fallthru
      _
    // Predicated region
    $region10: #{shuffle_plug_padding2_forward.1} parent=1 // pred_check
      _
    $region11: #{shuffle_plug_padding2_forward.1} parent=1 // pred_check_branch
      %20 = sbr.rel (0) target = $region13
    $region12: #{shuffle_plug_padding2_forward.1} parent=1 // pred_region
      %s22 = ssub.s32 20480, 20480
      %23 = vsyncadd [#allocation3], %s22
      %s24 = sshll.u32 [#allocation2], 4
      %s25 = int_to_ptr.vmem [resolvable:$true] %s24
      %30 = dma.hbm_to_vmem [thread:$0]  %s2, 20480, %s25, [#allocation3], 640, 640, 40
    $region13: #{shuffle_plug_padding2_forward.1} parent=1 // pred_fallthru
      _
    // Predicated region
    $region14: #{shuffle_plug_padding2_forward.1} parent=1 // pred_check
      _
    $region15: #{shuffle_plug_padding2_forward.1} parent=1 // pred_check_branch
      %32 = sbr.rel (0) target = $region17
    $region16: #{shuffle_plug_padding2_forward.1} parent=1 // pred_region
      _
    $region17: #{shuffle_plug_padding2_forward.1} parent=1 // pred_fallthru
      _
    // Predicated region
    $region18: #{shuffle_plug_padding2_forward.1} parent=1 // pred_check
      _
    $region19: #{shuffle_plug_padding2_forward.1} parent=1 // pred_check_branch
      %34 = sbr.rel (0) target = $region21
    $region20: #{shuffle_plug_padding2_forward.1} parent=1 // pred_region
      _
    $region21: #{shuffle_plug_padding2_forward.1} parent=1 // pred_fallthru
      _
    // Predicated region
    $region22: #{shuffle_plug_padding2_forward.1} parent=1 // pred_check
      _
    $region23: #{shuffle_plug_padding2_forward.1} parent=1 // pred_check_branch
      %36 = sbr.rel (0) target = $region25
    $region24: #{shuffle_plug_padding2_forward.1} parent=1 // pred_region
      _
    $region25: #{shuffle_plug_padding2_forward.1} parent=1 // pred_fallthru
      _
    // Predicated region
    $region26: #{shuffle_plug_padding2_forward.1} parent=1 // pred_check
      _
    $region27: #{shuffle_plug_padding2_forward.1} parent=1 // pred_check_branch
      %38 = sbr.rel (0) target = $region29
    $region28: #{shuffle_plug_padding2_forward.1} parent=1 // pred_region
      _
    $region29: #{shuffle_plug_padding2_forward.1} parent=1 // pred_fallthru
      _
    // Predicated region
    $region30: #{shuffle_plug_padding2_forward.1} parent=1 // pred_check
      _
    $region31: #{shuffle_plug_padding2_forward.1} parent=1 // pred_check_branch
      %40 = sbr.rel (0) target = $region33
    $region32: #{shuffle_plug_padding2_forward.1} parent=1 // pred_region
      _
    $region33: #{shuffle_plug_padding2_forward.1} parent=1 // pred_fallthru
      _
    // Predicated region
    $region34: #{shuffle_plug_padding2_forward.1} parent=1 // pred_check
      _
    $region35: #{shuffle_plug_padding2_forward.1} parent=1 // pred_check_branch
      %42 = sbr.rel (0) target = $region37
    $region36: #{shuffle_plug_padding2_forward.1} parent=1 // pred_region
      _
    $region37: #{shuffle_plug_padding2_forward.1} parent=1 // pred_fallthru
      _
    // Predicated region
    $region38: #{shuffle_plug_padding2_forward.1} parent=1 // pred_check
      _
    $region39: #{shuffle_plug_padding2_forward.1} parent=1 // pred_check_branch
      %44 = sbr.rel (0) target = $region41
    $region40: #{shuffle_plug_padding2_forward.1} parent=1 // pred_region
      %45 = dma.done [#allocation3], 20480
    $region41: #{shuffle_plug_padding2_forward.1} parent=1 // pred_fallthru
      _
    %v46 = vld [vmem:[%s8] sm:$0xff]
    %v47 = vld [vmem:[%s0] sm:$0xff]
    %v48 = vld [vmem:[#allocation2] sm:$0xff]
    %v49 = vld [vmem:[#allocation2 + $0x8] sm:$0xff]
    %v50 = vld [vmem:[#allocation2 + $0x10] sm:$0xff]
    %v51 = vld [vmem:[#allocation2 + $0x18] sm:$0xff]
    %v52 = vld [vmem:[#allocation2 + $0x20] sm:$0xff]
    %v53 = vld [vmem:[#allocation2 + $0x28] sm:$0xff]
    %v54 = vld [vmem:[#allocation2 + $0x30] sm:$0xff]
    %v55 = vld [vmem:[#allocation2 + $0x38] sm:$0xff]
    %v56 = vld [vmem:[#allocation2 + $0x40] sm:$0xff]
    %v57 = vld [vmem:[#allocation2 + $0x48] sm:$0xff]
    %v58 = vld [vmem:[#allocation2 + $0x50] sm:$0xff]
    %v59 = vld [vmem:[#allocation2 + $0x58] sm:$0xff]
    %v60 = vld [vmem:[#allocation2 + $0x60] sm:$0xff]
    %v61 = vld [vmem:[#allocation2 + $0x68] sm:$0xff]
    %v62 = vld [vmem:[#allocation2 + $0x70] sm:$0xff]
    %v63 = vld [vmem:[#allocation2 + $0x78] sm:$0xff]
    %v64 = vld [vmem:[#allocation2 + $0x80] sm:$0xff]
    %v65 = vld [vmem:[#allocation2 + $0x88] sm:$0xff]
    %v66 = vld [vmem:[#allocation2 + $0x90] sm:$0xff]
    %v67 = vld [vmem:[#allocation2 + $0x98] sm:$0xff]
    %v68 = vld [vmem:[#allocation2 + $0xa0] sm:$0xff]
    %v69 = vld [vmem:[#allocation2 + $0xa8] sm:$0xff]
    %v70 = vld [vmem:[#allocation2 + $0xb0] sm:$0xff]
    %v71 = vld [vmem:[#allocation2 + $0xb8] sm:$0xff]
    %v72 = vld [vmem:[#allocation2 + $0xc0] sm:$0xff]
    %v73 = vld [vmem:[#allocation2 + $0xc8] sm:$0xff]
    %v74 = vld [vmem:[#allocation2 + $0xd0] sm:$0xff]
    %v75 = vld [vmem:[#allocation2 + $0xd8] sm:$0xff]
    %v76 = vld [vmem:[#allocation2 + $0xe0] sm:$0xff]
    %v77 = vld [vmem:[#allocation2 + $0xe8] sm:$0xff]
    %v78 = vld [vmem:[#allocation2 + $0xf0] sm:$0xff]
    %v79 = vld [vmem:[#allocation2 + $0xf8] sm:$0xff]
    %v80 = vld [vmem:[#allocation2 + $0x100] sm:$0xff]
    %v81 = vld [vmem:[#allocation2 + $0x108] sm:$0xff]
    %v82 = vld [vmem:[#allocation2 + $0x110] sm:$0xff]
    %v83 = vld [vmem:[#allocation2 + $0x118] sm:$0xff]
    %v84 = vld [vmem:[#allocation2 + $0x120] sm:$0xff]
    %v85 = vld [vmem:[#allocation2 + $0x128] sm:$0xff]
    %v86 = vld [vmem:[#allocation2 + $0x130] sm:$0xff]
    %v87 = vld [vmem:[#allocation2 + $0x138] sm:$0xff]
    %v88 = vld [vmem:[#allocation2 + $0x140] sm:$0xff]
    %v89 = vld [vmem:[#allocation2 + $0x148] sm:$0xff]
    %v90 = vld [vmem:[#allocation2 + $0x150] sm:$0xff]
    %v91 = vld [vmem:[#allocation2 + $0x158] sm:$0xff]
    %v92 = vld [vmem:[#allocation2 + $0x160] sm:$0xff]
    %v93 = vld [vmem:[#allocation2 + $0x168] sm:$0xff]
    %v94 = vld [vmem:[#allocation2 + $0x170] sm:$0xff]
    %v95 = vld [vmem:[#allocation2 + $0x178] sm:$0xff]
    %v96 = vld [vmem:[#allocation2 + $0x180] sm:$0xff]
    %v97 = vld [vmem:[#allocation2 + $0x188] sm:$0xff]
    %v98 = vld [vmem:[#allocation2 + $0x190] sm:$0xff]
    %v99 = vld [vmem:[#allocation2 + $0x198] sm:$0xff]
    %v100 = vld [vmem:[#allocation2 + $0x1a0] sm:$0xff]
    %v101 = vld [vmem:[#allocation2 + $0x1a8] sm:$0xff]
    %v102 = vld [vmem:[#allocation2 + $0x1b0] sm:$0xff]
    %v103 = vld [vmem:[#allocation2 + $0x1b8] sm:$0xff]
    %v104 = vld [vmem:[#allocation2 + $0x1c0] sm:$0xff]
    %v105 = vld [vmem:[#allocation2 + $0x1c8] sm:$0xff]
    %v106 = vld [vmem:[#allocation2 + $0x1d0] sm:$0xff]
    %v107 = vld [vmem:[#allocation2 + $0x1d8] sm:$0xff]
    %v108 = vld [vmem:[#allocation2 + $0x1e0] sm:$0xff]
    %v109 = vld [vmem:[#allocation2 + $0x1e8] sm:$0xff]
    %v110 = vld [vmem:[#allocation2 + $0x1f0] sm:$0xff]
    %v111 = vld [vmem:[#allocation2 + $0x1f8] sm:$0xff]
    %v112 = vld [vmem:[#allocation2 + $0x200] sm:$0xff]
    %v113 = vld [vmem:[#allocation2 + $0x208] sm:$0xff]
    %v114 = vld [vmem:[#allocation2 + $0x210] sm:$0xff]
    %v115 = vld [vmem:[#allocation2 + $0x218] sm:$0xff]
    %v116 = vld [vmem:[#allocation2 + $0x220] sm:$0xff]
    %v117 = vld [vmem:[#allocation2 + $0x228] sm:$0xff]
    %v118 = vld [vmem:[#allocation2 + $0x230] sm:$0xff]
    %v119 = vld [vmem:[#allocation2 + $0x238] sm:$0xff]
    %v120 = vld [vmem:[#allocation2 + $0x240] sm:$0xff]
    %v121 = vld [vmem:[#allocation2 + $0x248] sm:$0xff]
    %v122 = vld [vmem:[#allocation2 + $0x250] sm:$0xff]
    %v123 = vld [vmem:[#allocation2 + $0x258] sm:$0xff]
    %v124 = vld [vmem:[#allocation2 + $0x260] sm:$0xff]
    %v125 = vld [vmem:[#allocation2 + $0x268] sm:$0xff]
    %v126 = vld [vmem:[#allocation2 + $0x270] sm:$0xff]
    %v127 = vld [vmem:[#allocation2 + $0x278] sm:$0xff]
    %v128 = vld [vmem:[#allocation2 + $0x280] sm:$0xff]
    %v129 = vld [vmem:[#allocation2 + $0x288] sm:$0xff]
    %v130 = vld [vmem:[#allocation2 + $0x290] sm:$0xff]
    %v131 = vld [vmem:[#allocation2 + $0x298] sm:$0xff]
    %v132 = vld [vmem:[#allocation2 + $0x2a0] sm:$0xff]
    %v133 = vld [vmem:[#allocation2 + $0x2a8] sm:$0xff]
    %v134 = vld [vmem:[#allocation2 + $0x2b0] sm:$0xff]
    %v135 = vld [vmem:[#allocation2 + $0x2b8] sm:$0xff]
    %v136 = vld [vmem:[#allocation2 + $0x2c0] sm:$0xff]
    %v137 = vld [vmem:[#allocation2 + $0x2c8] sm:$0xff]
    %v138 = vld [vmem:[#allocation2 + $0x2d0] sm:$0xff]
    %v139 = vld [vmem:[#allocation2 + $0x2d8] sm:$0xff]
    %v140 = vld [vmem:[#allocation2 + $0x2e0] sm:$0xff]
    %v141 = vld [vmem:[#allocation2 + $0x2e8] sm:$0xff]
    %v142 = vld [vmem:[#allocation2 + $0x2f0] sm:$0xff]
    %v143 = vld [vmem:[#allocation2 + $0x2f8] sm:$0xff]
    %v144 = vld [vmem:[#allocation2 + $0x300] sm:$0xff]
    %v145 = vld [vmem:[#allocation2 + $0x308] sm:$0xff]
    %v146 = vld [vmem:[#allocation2 + $0x310] sm:$0xff]
    %v147 = vld [vmem:[#allocation2 + $0x318] sm:$0xff]
    %v148 = vld [vmem:[#allocation2 + $0x320] sm:$0xff]
    %v149 = vld [vmem:[#allocation2 + $0x328] sm:$0xff]
    %v150 = vld [vmem:[#allocation2 + $0x330] sm:$0xff]
    %v151 = vld [vmem:[#allocation2 + $0x338] sm:$0xff]
    %v152 = vld [vmem:[#allocation2 + $0x340] sm:$0xff]
    %v153 = vld [vmem:[#allocation2 + $0x348] sm:$0xff]
    %v154 = vld [vmem:[#allocation2 + $0x350] sm:$0xff]
    %v155 = vld [vmem:[#allocation2 + $0x358] sm:$0xff]
    %v156 = vld [vmem:[#allocation2 + $0x360] sm:$0xff]
    %v157 = vld [vmem:[#allocation2 + $0x368] sm:$0xff]
    %v158 = vld [vmem:[#allocation2 + $0x370] sm:$0xff]
    %v159 = vld [vmem:[#allocation2 + $0x378] sm:$0xff]
    %v160 = vld [vmem:[#allocation2 + $0x380] sm:$0xff]
    %v161 = vld [vmem:[#allocation2 + $0x388] sm:$0xff]
    %v162 = vld [vmem:[#allocation2 + $0x390] sm:$0xff]
    %v163 = vld [vmem:[#allocation2 + $0x398] sm:$0xff]
    %v164 = vld [vmem:[#allocation2 + $0x3a0] sm:$0xff]
    %v165 = vld [vmem:[#allocation2 + $0x3a8] sm:$0xff]
    %v166 = vld [vmem:[#allocation2 + $0x3b0] sm:$0xff]
    %v167 = vld [vmem:[#allocation2 + $0x3b8] sm:$0xff]
    %v168 = vld [vmem:[#allocation2 + $0x3c0] sm:$0xff]
    %v169 = vld [vmem:[#allocation2 + $0x3c8] sm:$0xff]
    %v170 = vld [vmem:[#allocation2 + $0x3d0] sm:$0xff]
    %v171 = vld [vmem:[#allocation2 + $0x3d8] sm:$0xff]
    %v172 = vld [vmem:[#allocation2 + $0x3e0] sm:$0xff]
    %v173 = vld [vmem:[#allocation2 + $0x3e8] sm:$0xff]
    %v174 = vld [vmem:[#allocation2 + $0x3f0] sm:$0xff]
    %v175 = vld [vmem:[#allocation2 + $0x3f8] sm:$0xff]
    %v176 = vld [vmem:[#allocation2 + $0x400] sm:$0xff]
    %v177 = vld [vmem:[#allocation2 + $0x408] sm:$0xff]
    %v178 = vld [vmem:[#allocation2 + $0x410] sm:$0xff]
    %v179 = vld [vmem:[#allocation2 + $0x418] sm:$0xff]
    %v180 = vld [vmem:[#allocation2 + $0x420] sm:$0xff]
    %v181 = vld [vmem:[#allocation2 + $0x428] sm:$0xff]
    %v182 = vld [vmem:[#allocation2 + $0x430] sm:$0xff]
    %v183 = vld [vmem:[#allocation2 + $0x438] sm:$0xff]
    %v184 = vld [vmem:[#allocation2 + $0x440] sm:$0xff]
    %v185 = vld [vmem:[#allocation2 + $0x448] sm:$0xff]
    %v186 = vld [vmem:[#allocation2 + $0x450] sm:$0xff]
    %v187 = vld [vmem:[#allocation2 + $0x458] sm:$0xff]
    %v188 = vld [vmem:[#allocation2 + $0x460] sm:$0xff]
    %v189 = vld [vmem:[#allocation2 + $0x468] sm:$0xff]
    %v190 = vld [vmem:[#allocation2 + $0x470] sm:$0xff]
    %v191 = vld [vmem:[#allocation2 + $0x478] sm:$0xff]
    %v192 = vld [vmem:[#allocation2 + $0x480] sm:$0xff]
    %v193 = vld [vmem:[#allocation2 + $0x488] sm:$0xff]
    %v194 = vld [vmem:[#allocation2 + $0x490] sm:$0xff]
    %v195 = vld [vmem:[#allocation2 + $0x498] sm:$0xff]
    %v196 = vld [vmem:[#allocation2 + $0x4a0] sm:$0xff]
    %v197 = vld [vmem:[#allocation2 + $0x4a8] sm:$0xff]
    %v198 = vld [vmem:[#allocation2 + $0x4b0] sm:$0xff]
    %v199 = vld [vmem:[#allocation2 + $0x4b8] sm:$0xff]
    %v200 = vld [vmem:[#allocation2 + $0x4c0] sm:$0xff]
    %v201 = vld [vmem:[#allocation2 + $0x4c8] sm:$0xff]
    %v202 = vld [vmem:[#allocation2 + $0x4d0] sm:$0xff]
    %v203 = vld [vmem:[#allocation2 + $0x4d8] sm:$0xff]
    %v204 = vld [vmem:[#allocation2 + $0x4e0] sm:$0xff]
    %v205 = vld [vmem:[#allocation2 + $0x4e8] sm:$0xff]
    %v206 = vld [vmem:[#allocation2 + $0x4f0] sm:$0xff]
    %v207 = vld [vmem:[#allocation2 + $0x4f8] sm:$0xff]
    %v208 = vld [vmem:[%s3] sm:$0xff]
    %v209 = vld [vmem:[%s3 + $0x8] sm:$0x3]
    %v212 = vlaneseq
    %v213 = vshrl.u32 %v212, 7
    %v214 = vsub.s32 0, %v213
    %v215 = vrot.slane %v208, %v214
    %v216 = vlaneseq
    %v217 = vshrl.u32 %v216, 7
    %v218 = vsub.s32 1, %v217
    %v219 = vrot.slane %v208, %v218
    %v220 = vlaneseq
    %v221 = vshrl.u32 %v220, 7
    %v222 = vsub.s32 2, %v221
    %v223 = vrot.slane %v208, %v222
    %v224 = vlaneseq
    %v225 = vshrl.u32 %v224, 7
    %v226 = vsub.s32 3, %v225
    %v227 = vrot.slane %v208, %v226
    %v228 = vlaneseq
    %v229 = vshrl.u32 %v228, 7
    %v230 = vsub.s32 4, %v229
    %v231 = vrot.slane %v208, %v230
    %v232 = vlaneseq
    %v233 = vshrl.u32 %v232, 7
    %v234 = vsub.s32 5, %v233
    %v235 = vrot.slane %v208, %v234
    %v236 = vlaneseq
    %v237 = vshrl.u32 %v236, 7
    %v238 = vsub.s32 6, %v237
    %v239 = vrot.slane %v208, %v238
    %v240 = vlaneseq
    %v241 = vshrl.u32 %v240, 7
    %v242 = vsub.s32 7, %v241
    %v243 = vrot.slane %v208, %v242
    %v244 = vlaneseq
    %v245 = vshrl.u32 %v244, 7
    %v246 = vsub.s32 0, %v245
    %v247 = vrot.slane %v209, %v246
    %v248 = vlaneseq
    %v249 = vshrl.u32 %v248, 7
    %v250 = vsub.s32 1, %v249
    %v251 = vrot.slane %v209, %v250
    %v263 = vunpack.c.l.b16 %v47
    %v264 = vunpack.c.h.b16 %v47
    %v265 = vpack.c.b16 %v263, %v263
    %v266 = vpack.c.b16 %v264, %v264
    %v429 = vunpack.c.l.b16 %v48
    %v430 = vunpack.c.h.b16 %v48
    %v431 = vunpack.c.l.b16 %v49
    %v432 = vunpack.c.h.b16 %v49
    %v433 = vunpack.c.l.b16 %v50
    %v434 = vunpack.c.h.b16 %v50
    %v435 = vunpack.c.l.b16 %v51
    %v436 = vunpack.c.h.b16 %v51
    %v437 = vunpack.c.l.b16 %v52
    %v438 = vunpack.c.h.b16 %v52
    %v439 = vunpack.c.l.b16 %v53
    %v440 = vunpack.c.h.b16 %v53
    %v441 = vunpack.c.l.b16 %v54
    %v442 = vunpack.c.h.b16 %v54
    %v443 = vunpack.c.l.b16 %v55
    %v444 = vunpack.c.h.b16 %v55
    %v445 = vunpack.c.l.b16 %v56
    %v446 = vunpack.c.h.b16 %v56
    %v447 = vunpack.c.l.b16 %v57
    %v448 = vunpack.c.h.b16 %v57
    %v449 = vunpack.c.l.b16 %v58
    %v450 = vunpack.c.h.b16 %v58
    %v451 = vunpack.c.l.b16 %v59
    %v452 = vunpack.c.h.b16 %v59
    %v453 = vunpack.c.l.b16 %v60
    %v454 = vunpack.c.h.b16 %v60
    %v455 = vunpack.c.l.b16 %v61
    %v456 = vunpack.c.h.b16 %v61
    %v457 = vunpack.c.l.b16 %v62
    %v458 = vunpack.c.h.b16 %v62
    %v459 = vunpack.c.l.b16 %v63
    %v460 = vunpack.c.h.b16 %v63
    %v461 = vunpack.c.l.b16 %v64
    %v462 = vunpack.c.h.b16 %v64
    %v463 = vunpack.c.l.b16 %v65
    %v464 = vunpack.c.h.b16 %v65
    %v465 = vunpack.c.l.b16 %v66
    %v466 = vunpack.c.h.b16 %v66
    %v467 = vunpack.c.l.b16 %v67
    %v468 = vunpack.c.h.b16 %v67
    %v469 = vunpack.c.l.b16 %v68
    %v470 = vunpack.c.h.b16 %v68
    %v471 = vunpack.c.l.b16 %v69
    %v472 = vunpack.c.h.b16 %v69
    %v473 = vunpack.c.l.b16 %v70
    %v474 = vunpack.c.h.b16 %v70
    %v475 = vunpack.c.l.b16 %v71
    %v476 = vunpack.c.h.b16 %v71
    %v477 = vunpack.c.l.b16 %v72
    %v478 = vunpack.c.h.b16 %v72
    %v479 = vunpack.c.l.b16 %v73
    %v480 = vunpack.c.h.b16 %v73
    %v481 = vunpack.c.l.b16 %v74
    %v482 = vunpack.c.h.b16 %v74
    %v483 = vunpack.c.l.b16 %v75
    %v484 = vunpack.c.h.b16 %v75
    %v485 = vunpack.c.l.b16 %v76
    %v486 = vunpack.c.h.b16 %v76
    %v487 = vunpack.c.l.b16 %v77
    %v488 = vunpack.c.h.b16 %v77
    %v489 = vunpack.c.l.b16 %v78
    %v490 = vunpack.c.h.b16 %v78
    %v491 = vunpack.c.l.b16 %v79
    %v492 = vunpack.c.h.b16 %v79
    %v493 = vunpack.c.l.b16 %v80
    %v494 = vunpack.c.h.b16 %v80
    %v495 = vunpack.c.l.b16 %v81
    %v496 = vunpack.c.h.b16 %v81
    %v497 = vunpack.c.l.b16 %v82
    %v498 = vunpack.c.h.b16 %v82
    %v499 = vunpack.c.l.b16 %v83
    %v500 = vunpack.c.h.b16 %v83
    %v501 = vunpack.c.l.b16 %v84
    %v502 = vunpack.c.h.b16 %v84
    %v503 = vunpack.c.l.b16 %v85
    %v504 = vunpack.c.h.b16 %v85
    %v505 = vunpack.c.l.b16 %v86
    %v506 = vunpack.c.h.b16 %v86
    %v507 = vunpack.c.l.b16 %v87
    %v508 = vunpack.c.h.b16 %v87
    %v509 = vunpack.c.l.b16 %v88
    %v510 = vunpack.c.h.b16 %v88
    %v511 = vunpack.c.l.b16 %v89
    %v512 = vunpack.c.h.b16 %v89
    %v513 = vunpack.c.l.b16 %v90
    %v514 = vunpack.c.h.b16 %v90
    %v515 = vunpack.c.l.b16 %v91
    %v516 = vunpack.c.h.b16 %v91
    %v517 = vunpack.c.l.b16 %v92
    %v518 = vunpack.c.h.b16 %v92
    %v519 = vunpack.c.l.b16 %v93
    %v520 = vunpack.c.h.b16 %v93
    %v521 = vunpack.c.l.b16 %v94
    %v522 = vunpack.c.h.b16 %v94
    %v523 = vunpack.c.l.b16 %v95
    %v524 = vunpack.c.h.b16 %v95
    %v525 = vunpack.c.l.b16 %v96
    %v526 = vunpack.c.h.b16 %v96
    %v527 = vunpack.c.l.b16 %v97
    %v528 = vunpack.c.h.b16 %v97
    %v529 = vunpack.c.l.b16 %v98
    %v530 = vunpack.c.h.b16 %v98
    %v531 = vunpack.c.l.b16 %v99
    %v532 = vunpack.c.h.b16 %v99
    %v533 = vunpack.c.l.b16 %v100
    %v534 = vunpack.c.h.b16 %v100
    %v535 = vunpack.c.l.b16 %v101
    %v536 = vunpack.c.h.b16 %v101
    %v537 = vunpack.c.l.b16 %v102
    %v538 = vunpack.c.h.b16 %v102
    %v539 = vunpack.c.l.b16 %v103
    %v540 = vunpack.c.h.b16 %v103
    %v541 = vunpack.c.l.b16 %v104
    %v542 = vunpack.c.h.b16 %v104
    %v543 = vunpack.c.l.b16 %v105
    %v544 = vunpack.c.h.b16 %v105
    %v545 = vunpack.c.l.b16 %v106
    %v546 = vunpack.c.h.b16 %v106
    %v547 = vunpack.c.l.b16 %v107
    %v548 = vunpack.c.h.b16 %v107
    %v549 = vunpack.c.l.b16 %v108
    %v550 = vunpack.c.h.b16 %v108
    %v551 = vunpack.c.l.b16 %v109
    %v552 = vunpack.c.h.b16 %v109
    %v553 = vunpack.c.l.b16 %v110
    %v554 = vunpack.c.h.b16 %v110
    %v555 = vunpack.c.l.b16 %v111
    %v556 = vunpack.c.h.b16 %v111
    %v557 = vunpack.c.l.b16 %v112
    %v558 = vunpack.c.h.b16 %v112
    %v559 = vunpack.c.l.b16 %v113
    %v560 = vunpack.c.h.b16 %v113
    %v561 = vunpack.c.l.b16 %v114
    %v562 = vunpack.c.h.b16 %v114
    %v563 = vunpack.c.l.b16 %v115
    %v564 = vunpack.c.h.b16 %v115
    %v565 = vunpack.c.l.b16 %v116
    %v566 = vunpack.c.h.b16 %v116
    %v567 = vunpack.c.l.b16 %v117
    %v568 = vunpack.c.h.b16 %v117
    %v569 = vunpack.c.l.b16 %v118
    %v570 = vunpack.c.h.b16 %v118
    %v571 = vunpack.c.l.b16 %v119
    %v572 = vunpack.c.h.b16 %v119
    %v573 = vunpack.c.l.b16 %v120
    %v574 = vunpack.c.h.b16 %v120
    %v575 = vunpack.c.l.b16 %v121
    %v576 = vunpack.c.h.b16 %v121
    %v577 = vunpack.c.l.b16 %v122
    %v578 = vunpack.c.h.b16 %v122
    %v579 = vunpack.c.l.b16 %v123
    %v580 = vunpack.c.h.b16 %v123
    %v581 = vunpack.c.l.b16 %v124
    %v582 = vunpack.c.h.b16 %v124
    %v583 = vunpack.c.l.b16 %v125
    %v584 = vunpack.c.h.b16 %v125
    %v585 = vunpack.c.l.b16 %v126
    %v586 = vunpack.c.h.b16 %v126
    %v587 = vunpack.c.l.b16 %v127
    %v588 = vunpack.c.h.b16 %v127
    %v589 = vunpack.c.l.b16 %v128
    %v590 = vunpack.c.h.b16 %v128
    %v591 = vunpack.c.l.b16 %v129
    %v592 = vunpack.c.h.b16 %v129
    %v593 = vunpack.c.l.b16 %v130
    %v594 = vunpack.c.h.b16 %v130
    %v595 = vunpack.c.l.b16 %v131
    %v596 = vunpack.c.h.b16 %v131
    %v597 = vunpack.c.l.b16 %v132
    %v598 = vunpack.c.h.b16 %v132
    %v599 = vunpack.c.l.b16 %v133
    %v600 = vunpack.c.h.b16 %v133
    %v601 = vunpack.c.l.b16 %v134
    %v602 = vunpack.c.h.b16 %v134
    %v603 = vunpack.c.l.b16 %v135
    %v604 = vunpack.c.h.b16 %v135
    %v605 = vunpack.c.l.b16 %v136
    %v606 = vunpack.c.h.b16 %v136
    %v607 = vunpack.c.l.b16 %v137
    %v608 = vunpack.c.h.b16 %v137
    %v609 = vunpack.c.l.b16 %v138
    %v610 = vunpack.c.h.b16 %v138
    %v611 = vunpack.c.l.b16 %v139
    %v612 = vunpack.c.h.b16 %v139
    %v613 = vunpack.c.l.b16 %v140
    %v614 = vunpack.c.h.b16 %v140
    %v615 = vunpack.c.l.b16 %v141
    %v616 = vunpack.c.h.b16 %v141
    %v617 = vunpack.c.l.b16 %v142
    %v618 = vunpack.c.h.b16 %v142
    %v619 = vunpack.c.l.b16 %v143
    %v620 = vunpack.c.h.b16 %v143
    %v621 = vunpack.c.l.b16 %v144
    %v622 = vunpack.c.h.b16 %v144
    %v623 = vunpack.c.l.b16 %v145
    %v624 = vunpack.c.h.b16 %v145
    %v625 = vunpack.c.l.b16 %v146
    %v626 = vunpack.c.h.b16 %v146
    %v627 = vunpack.c.l.b16 %v147
    %v628 = vunpack.c.h.b16 %v147
    %v629 = vunpack.c.l.b16 %v148
    %v630 = vunpack.c.h.b16 %v148
    %v631 = vunpack.c.l.b16 %v149
    %v632 = vunpack.c.h.b16 %v149
    %v633 = vunpack.c.l.b16 %v150
    %v634 = vunpack.c.h.b16 %v150
    %v635 = vunpack.c.l.b16 %v151
    %v636 = vunpack.c.h.b16 %v151
    %v637 = vunpack.c.l.b16 %v152
    %v638 = vunpack.c.h.b16 %v152
    %v639 = vunpack.c.l.b16 %v153
    %v640 = vunpack.c.h.b16 %v153
    %v641 = vunpack.c.l.b16 %v154
    %v642 = vunpack.c.h.b16 %v154
    %v643 = vunpack.c.l.b16 %v155
    %v644 = vunpack.c.h.b16 %v155
    %v645 = vunpack.c.l.b16 %v156
    %v646 = vunpack.c.h.b16 %v156
    %v647 = vunpack.c.l.b16 %v157
    %v648 = vunpack.c.h.b16 %v157
    %v649 = vunpack.c.l.b16 %v158
    %v650 = vunpack.c.h.b16 %v158
    %v651 = vunpack.c.l.b16 %v159
    %v652 = vunpack.c.h.b16 %v159
    %v653 = vunpack.c.l.b16 %v160
    %v654 = vunpack.c.h.b16 %v160
    %v655 = vunpack.c.l.b16 %v161
    %v656 = vunpack.c.h.b16 %v161
    %v657 = vunpack.c.l.b16 %v162
    %v658 = vunpack.c.h.b16 %v162
    %v659 = vunpack.c.l.b16 %v163
    %v660 = vunpack.c.h.b16 %v163
    %v661 = vunpack.c.l.b16 %v164
    %v662 = vunpack.c.h.b16 %v164
    %v663 = vunpack.c.l.b16 %v165
    %v664 = vunpack.c.h.b16 %v165
    %v665 = vunpack.c.l.b16 %v166
    %v666 = vunpack.c.h.b16 %v166
    %v667 = vunpack.c.l.b16 %v167
    %v668 = vunpack.c.h.b16 %v167
    %v669 = vunpack.c.l.b16 %v168
    %v670 = vunpack.c.h.b16 %v168
    %v671 = vunpack.c.l.b16 %v169
    %v672 = vunpack.c.h.b16 %v169
    %v673 = vunpack.c.l.b16 %v170
    %v674 = vunpack.c.h.b16 %v170
    %v675 = vunpack.c.l.b16 %v171
    %v676 = vunpack.c.h.b16 %v171
    %v677 = vunpack.c.l.b16 %v172
    %v678 = vunpack.c.h.b16 %v172
    %v679 = vunpack.c.l.b16 %v173
    %v680 = vunpack.c.h.b16 %v173
    %v681 = vunpack.c.l.b16 %v174
    %v682 = vunpack.c.h.b16 %v174
    %v683 = vunpack.c.l.b16 %v175
    %v684 = vunpack.c.h.b16 %v175
    %v685 = vunpack.c.l.b16 %v176
    %v686 = vunpack.c.h.b16 %v176
    %v687 = vunpack.c.l.b16 %v177
    %v688 = vunpack.c.h.b16 %v177
    %v689 = vunpack.c.l.b16 %v178
    %v690 = vunpack.c.h.b16 %v178
    %v691 = vunpack.c.l.b16 %v179
    %v692 = vunpack.c.h.b16 %v179
    %v693 = vunpack.c.l.b16 %v180
    %v694 = vunpack.c.h.b16 %v180
    %v695 = vunpack.c.l.b16 %v181
    %v696 = vunpack.c.h.b16 %v181
    %v697 = vunpack.c.l.b16 %v182
    %v698 = vunpack.c.h.b16 %v182
    %v699 = vunpack.c.l.b16 %v183
    %v700 = vunpack.c.h.b16 %v183
    %v701 = vunpack.c.l.b16 %v184
    %v702 = vunpack.c.h.b16 %v184
    %v703 = vunpack.c.l.b16 %v185
    %v704 = vunpack.c.h.b16 %v185
    %v705 = vunpack.c.l.b16 %v186
    %v706 = vunpack.c.h.b16 %v186
    %v707 = vunpack.c.l.b16 %v187
    %v708 = vunpack.c.h.b16 %v187
    %v709 = vunpack.c.l.b16 %v188
    %v710 = vunpack.c.h.b16 %v188
    %v711 = vunpack.c.l.b16 %v189
    %v712 = vunpack.c.h.b16 %v189
    %v713 = vunpack.c.l.b16 %v190
    %v714 = vunpack.c.h.b16 %v190
    %v715 = vunpack.c.l.b16 %v191
    %v716 = vunpack.c.h.b16 %v191
    %v717 = vunpack.c.l.b16 %v192
    %v718 = vunpack.c.h.b16 %v192
    %v719 = vunpack.c.l.b16 %v193
    %v720 = vunpack.c.h.b16 %v193
    %v721 = vunpack.c.l.b16 %v194
    %v722 = vunpack.c.h.b16 %v194
    %v723 = vunpack.c.l.b16 %v195
    %v724 = vunpack.c.h.b16 %v195
    %v725 = vunpack.c.l.b16 %v196
    %v726 = vunpack.c.h.b16 %v196
    %v727 = vunpack.c.l.b16 %v197
    %v728 = vunpack.c.h.b16 %v197
    %v729 = vunpack.c.l.b16 %v198
    %v730 = vunpack.c.h.b16 %v198
    %v731 = vunpack.c.l.b16 %v199
    %v732 = vunpack.c.h.b16 %v199
    %v733 = vunpack.c.l.b16 %v200
    %v734 = vunpack.c.h.b16 %v200
    %v735 = vunpack.c.l.b16 %v201
    %v736 = vunpack.c.h.b16 %v201
    %v737 = vunpack.c.l.b16 %v202
    %v738 = vunpack.c.h.b16 %v202
    %v739 = vunpack.c.l.b16 %v203
    %v740 = vunpack.c.h.b16 %v203
    %v741 = vunpack.c.l.b16 %v204
    %v742 = vunpack.c.h.b16 %v204
    %v743 = vunpack.c.l.b16 %v205
    %v744 = vunpack.c.h.b16 %v205
    %v745 = vunpack.c.l.b16 %v206
    %v746 = vunpack.c.h.b16 %v206
    %v747 = vunpack.c.l.b16 %v207
    %v748 = vunpack.c.h.b16 %v207
    %v749 = vpack.c.b16 %v439, %v429
    %v750 = vpack.c.b16 %v440, %v430
    %v751 = vpack.c.b16 %v441, %v431
    %v752 = vpack.c.b16 %v442, %v432
    %v753 = vpack.c.b16 %v443, %v433
    %v754 = vpack.c.b16 %v444, %v434
    %v755 = vpack.c.b16 %v445, %v435
    %v756 = vpack.c.b16 %v446, %v436
    %v757 = vpack.c.b16 %v447, %v437
    %v758 = vpack.c.b16 %v448, %v438
    %v759 = vpack.c.b16 %v459, %v449
    %v760 = vpack.c.b16 %v460, %v450
    %v761 = vpack.c.b16 %v461, %v451
    %v762 = vpack.c.b16 %v462, %v452
    %v763 = vpack.c.b16 %v463, %v453
    %v764 = vpack.c.b16 %v464, %v454
    %v765 = vpack.c.b16 %v465, %v455
    %v766 = vpack.c.b16 %v466, %v456
    %v767 = vpack.c.b16 %v467, %v457
    %v768 = vpack.c.b16 %v468, %v458
    %v769 = vpack.c.b16 %v479, %v469
    %v770 = vpack.c.b16 %v480, %v470
    %v771 = vpack.c.b16 %v481, %v471
    %v772 = vpack.c.b16 %v482, %v472
    %v773 = vpack.c.b16 %v483, %v473
    %v774 = vpack.c.b16 %v484, %v474
    %v775 = vpack.c.b16 %v485, %v475
    %v776 = vpack.c.b16 %v486, %v476
    %v777 = vpack.c.b16 %v487, %v477
    %v778 = vpack.c.b16 %v488, %v478
    %v779 = vpack.c.b16 %v499, %v489
    %v780 = vpack.c.b16 %v500, %v490
    %v781 = vpack.c.b16 %v501, %v491
    %v782 = vpack.c.b16 %v502, %v492
    %v783 = vpack.c.b16 %v503, %v493
    %v784 = vpack.c.b16 %v504, %v494
    %v785 = vpack.c.b16 %v505, %v495
    %v786 = vpack.c.b16 %v506, %v496
    %v787 = vpack.c.b16 %v507, %v497
    %v788 = vpack.c.b16 %v508, %v498
    %v789 = vpack.c.b16 %v519, %v509
    %v790 = vpack.c.b16 %v520, %v510
    %v791 = vpack.c.b16 %v521, %v511
    %v792 = vpack.c.b16 %v522, %v512
    %v793 = vpack.c.b16 %v523, %v513
    %v794 = vpack.c.b16 %v524, %v514
    %v795 = vpack.c.b16 %v525, %v515
    %v796 = vpack.c.b16 %v526, %v516
    %v797 = vpack.c.b16 %v527, %v517
    %v798 = vpack.c.b16 %v528, %v518
    %v799 = vpack.c.b16 %v539, %v529
    %v800 = vpack.c.b16 %v540, %v530
    %v801 = vpack.c.b16 %v541, %v531
    %v802 = vpack.c.b16 %v542, %v532
    %v803 = vpack.c.b16 %v543, %v533
    %v804 = vpack.c.b16 %v544, %v534
    %v805 = vpack.c.b16 %v545, %v535
    %v806 = vpack.c.b16 %v546, %v536
    %v807 = vpack.c.b16 %v547, %v537
    %v808 = vpack.c.b16 %v548, %v538
    %v809 = vpack.c.b16 %v559, %v549
    %v810 = vpack.c.b16 %v560, %v550
    %v811 = vpack.c.b16 %v561, %v551
    %v812 = vpack.c.b16 %v562, %v552
    %v813 = vpack.c.b16 %v563, %v553
    %v814 = vpack.c.b16 %v564, %v554
    %v815 = vpack.c.b16 %v565, %v555
    %v816 = vpack.c.b16 %v566, %v556
    %v817 = vpack.c.b16 %v567, %v557
    %v818 = vpack.c.b16 %v568, %v558
    %v819 = vpack.c.b16 %v579, %v569
    %v820 = vpack.c.b16 %v580, %v570
    %v821 = vpack.c.b16 %v581, %v571
    %v822 = vpack.c.b16 %v582, %v572
    %v823 = vpack.c.b16 %v583, %v573
    %v824 = vpack.c.b16 %v584, %v574
    %v825 = vpack.c.b16 %v585, %v575
    %v826 = vpack.c.b16 %v586, %v576
    %v827 = vpack.c.b16 %v587, %v577
    %v828 = vpack.c.b16 %v588, %v578
    %v829 = vpack.c.b16 %v599, %v589
    %v830 = vpack.c.b16 %v600, %v590
    %v831 = vpack.c.b16 %v601, %v591
    %v832 = vpack.c.b16 %v602, %v592
    %v833 = vpack.c.b16 %v603, %v593
    %v834 = vpack.c.b16 %v604, %v594
    %v835 = vpack.c.b16 %v605, %v595
    %v836 = vpack.c.b16 %v606, %v596
    %v837 = vpack.c.b16 %v607, %v597
    %v838 = vpack.c.b16 %v608, %v598
    %v839 = vpack.c.b16 %v619, %v609
    %v840 = vpack.c.b16 %v620, %v610
    %v841 = vpack.c.b16 %v621, %v611
    %v842 = vpack.c.b16 %v622, %v612
    %v843 = vpack.c.b16 %v623, %v613
    %v844 = vpack.c.b16 %v624, %v614
    %v845 = vpack.c.b16 %v625, %v615
    %v846 = vpack.c.b16 %v626, %v616
    %v847 = vpack.c.b16 %v627, %v617
    %v848 = vpack.c.b16 %v628, %v618
    %v849 = vpack.c.b16 %v639, %v629
    %v850 = vpack.c.b16 %v640, %v630
    %v851 = vpack.c.b16 %v641, %v631
    %v852 = vpack.c.b16 %v642, %v632
    %v853 = vpack.c.b16 %v643, %v633
    %v854 = vpack.c.b16 %v644, %v634
    %v855 = vpack.c.b16 %v645, %v635
    %v856 = vpack.c.b16 %v646, %v636
    %v857 = vpack.c.b16 %v647, %v637
    %v858 = vpack.c.b16 %v648, %v638
    %v859 = vpack.c.b16 %v659, %v649
    %v860 = vpack.c.b16 %v660, %v650
    %v861 = vpack.c.b16 %v661, %v651
    %v862 = vpack.c.b16 %v662, %v652
    %v863 = vpack.c.b16 %v663, %v653
    %v864 = vpack.c.b16 %v664, %v654
    %v865 = vpack.c.b16 %v665, %v655
    %v866 = vpack.c.b16 %v666, %v656
    %v867 = vpack.c.b16 %v667, %v657
    %v868 = vpack.c.b16 %v668, %v658
    %v869 = vpack.c.b16 %v679, %v669
    %v870 = vpack.c.b16 %v680, %v670
    %v871 = vpack.c.b16 %v681, %v671
    %v872 = vpack.c.b16 %v682, %v672
    %v873 = vpack.c.b16 %v683, %v673
    %v874 = vpack.c.b16 %v684, %v674
    %v875 = vpack.c.b16 %v685, %v675
    %v876 = vpack.c.b16 %v686, %v676
    %v877 = vpack.c.b16 %v687, %v677
    %v878 = vpack.c.b16 %v688, %v678
    %v879 = vpack.c.b16 %v699, %v689
    %v880 = vpack.c.b16 %v700, %v690
    %v881 = vpack.c.b16 %v701, %v691
    %v882 = vpack.c.b16 %v702, %v692
    %v883 = vpack.c.b16 %v703, %v693
    %v884 = vpack.c.b16 %v704, %v694
    %v885 = vpack.c.b16 %v705, %v695
    %v886 = vpack.c.b16 %v706, %v696
    %v887 = vpack.c.b16 %v707, %v697
    %v888 = vpack.c.b16 %v708, %v698
    %v889 = vpack.c.b16 %v719, %v709
    %v890 = vpack.c.b16 %v720, %v710
    %v891 = vpack.c.b16 %v721, %v711
    %v892 = vpack.c.b16 %v722, %v712
    %v893 = vpack.c.b16 %v723, %v713
    %v894 = vpack.c.b16 %v724, %v714
    %v895 = vpack.c.b16 %v725, %v715
    %v896 = vpack.c.b16 %v726, %v716
    %v897 = vpack.c.b16 %v727, %v717
    %v898 = vpack.c.b16 %v728, %v718
    %v899 = vpack.c.b16 %v739, %v729
    %v900 = vpack.c.b16 %v740, %v730
    %v901 = vpack.c.b16 %v741, %v731
    %v902 = vpack.c.b16 %v742, %v732
    %v903 = vpack.c.b16 %v743, %v733
    %v904 = vpack.c.b16 %v744, %v734
    %v905 = vpack.c.b16 %v745, %v735
    %v906 = vpack.c.b16 %v746, %v736
    %v907 = vpack.c.b16 %v747, %v737
    %v908 = vpack.c.b16 %v748, %v738
    %1069 = vmatprep.subr.bf16.mxu0 %v750
    %1070 = vmatpush1.bf16.msra.mxu0 %v749
    %1071 = vmatprep.subr.bf16.mxu0 %v760
    %1072 = vmatpush1.bf16.msra.mxu0 %v759
    %1073 = vmatprep.subr.bf16.mxu0 %v770
    %1074 = vmatpush1.bf16.msra.mxu0 %v769
    %1075 = vmatprep.subr.bf16.mxu0 %v780
    %1076 = vmatpush1.bf16.msra.mxu0 %v779
    %1077 = vmatprep.subr.bf16.mxu0 %v790
    %1078 = vmatpush1.bf16.msra.mxu0 %v789
    %1079 = vmatprep.subr.bf16.mxu0 %v800
    %1080 = vmatpush1.bf16.msra.mxu0 %v799
    %1081 = vmatprep.subr.bf16.mxu0 %v810
    %1082 = vmatpush1.bf16.msra.mxu0 %v809
    %1083 = vmatprep.subr.bf16.mxu0 %v820
    %1084 = vmatpush1.bf16.msra.mxu0 %v819
    %1085 = vmatprep.subr.bf16.mxu0 %v830
    %1086 = vmatpush1.bf16.msra.mxu0 %v829
    %1087 = vmatprep.subr.bf16.mxu0 %v840
    %1088 = vmatpush1.bf16.msra.mxu0 %v839
    %1089 = vmatprep.subr.bf16.mxu0 %v850
    %1090 = vmatpush1.bf16.msra.mxu0 %v849
    %1091 = vmatprep.subr.bf16.mxu0 %v860
    %1092 = vmatpush1.bf16.msra.mxu0 %v859
    %1093 = vmatprep.subr.bf16.mxu0 %v870
    %1094 = vmatpush1.bf16.msra.mxu0 %v869
    %1095 = vmatprep.subr.bf16.mxu0 %v880
    %1096 = vmatpush1.bf16.msra.mxu0 %v879
    %1097 = vmatprep.subr.bf16.mxu0 %v890
    %1098 = vmatpush1.bf16.msra.mxu0 %v889
    %1099 = vmatprep.subr.bf16.mxu0 %v900
    %1100 = vmatpush1.bf16.msra.mxu0 %v899
    %1101 = vmatprep.mubr.bf16.mxu0 %v266
    %1102 = vmatmul.mubr.bf16.gmra.mrb[0].mxu0 %v265
    %v1103 = vpop.f32.mrb[0].mxu0
    %v1104 = vadd.f32 %v215, %v1103
    %v1105 = vpop.f32.mrb[0].mxu0
    %v1106 = vadd.f32 %v219, %v1105
    %v1107 = vpop.f32.mrb[0].mxu0
    %v1108 = vpop.f32.mrb[0].mxu0
    %1109 = vdwg.mxu0
    %1110 = vmatprep.subr.bf16.mxu0 %v752
    %1111 = vmatpush1.bf16.msra.mxu0 %v751
    %1112 = vmatprep.subr.bf16.mxu0 %v762
    %1113 = vmatpush1.bf16.msra.mxu0 %v761
    %1114 = vmatprep.subr.bf16.mxu0 %v772
    %1115 = vmatpush1.bf16.msra.mxu0 %v771
    %1116 = vmatprep.subr.bf16.mxu0 %v782
    %1117 = vmatpush1.bf16.msra.mxu0 %v781
    %1118 = vmatprep.subr.bf16.mxu0 %v792
    %1119 = vmatpush1.bf16.msra.mxu0 %v791
    %1120 = vmatprep.subr.bf16.mxu0 %v802
    %1121 = vmatpush1.bf16.msra.mxu0 %v801
    %1122 = vmatprep.subr.bf16.mxu0 %v812
    %1123 = vmatpush1.bf16.msra.mxu0 %v811
    %1124 = vmatprep.subr.bf16.mxu0 %v822
    %1125 = vmatpush1.bf16.msra.mxu0 %v821
    %1126 = vmatprep.subr.bf16.mxu0 %v832
    %1127 = vmatpush1.bf16.msra.mxu0 %v831
    %1128 = vmatprep.subr.bf16.mxu0 %v842
    %1129 = vmatpush1.bf16.msra.mxu0 %v841
    %1130 = vmatprep.subr.bf16.mxu0 %v852
    %1131 = vmatpush1.bf16.msra.mxu0 %v851
    %1132 = vmatprep.subr.bf16.mxu0 %v862
    %1133 = vmatpush1.bf16.msra.mxu0 %v861
    %1134 = vmatprep.subr.bf16.mxu0 %v872
    %1135 = vmatpush1.bf16.msra.mxu0 %v871
    %1136 = vmatprep.subr.bf16.mxu0 %v882
    %1137 = vmatpush1.bf16.msra.mxu0 %v881
    %1138 = vmatprep.subr.bf16.mxu0 %v892
    %1139 = vmatpush1.bf16.msra.mxu0 %v891
    %1140 = vmatprep.subr.bf16.mxu0 %v902
    %1141 = vmatpush1.bf16.msra.mxu0 %v901
    %1142 = vmatprep.mubr.bf16.mxu0 %v266
    %1143 = vmatmul.mubr.bf16.gmra.mrb[0].mxu0 %v265
    %v1144 = vpop.f32.mrb[0].mxu0
    %v1145 = vadd.f32 %v223, %v1144
    %v1146 = vpop.f32.mrb[0].mxu0
    %v1147 = vadd.f32 %v227, %v1146
    %v1148 = vpop.f32.mrb[0].mxu0
    %v1149 = vpop.f32.mrb[0].mxu0
    %1150 = vdwg.mxu0
    %1151 = vmatprep.subr.bf16.mxu0 %v754
    %1152 = vmatpush1.bf16.msra.mxu0 %v753
    %1153 = vmatprep.subr.bf16.mxu0 %v764
    %1154 = vmatpush1.bf16.msra.mxu0 %v763
    %1155 = vmatprep.subr.bf16.mxu0 %v774
    %1156 = vmatpush1.bf16.msra.mxu0 %v773
    %1157 = vmatprep.subr.bf16.mxu0 %v784
    %1158 = vmatpush1.bf16.msra.mxu0 %v783
    %1159 = vmatprep.subr.bf16.mxu0 %v794
    %1160 = vmatpush1.bf16.msra.mxu0 %v793
    %1161 = vmatprep.subr.bf16.mxu0 %v804
    %1162 = vmatpush1.bf16.msra.mxu0 %v803
    %1163 = vmatprep.subr.bf16.mxu0 %v814
    %1164 = vmatpush1.bf16.msra.mxu0 %v813
    %1165 = vmatprep.subr.bf16.mxu0 %v824
    %1166 = vmatpush1.bf16.msra.mxu0 %v823
    %1167 = vmatprep.subr.bf16.mxu0 %v834
    %1168 = vmatpush1.bf16.msra.mxu0 %v833
    %1169 = vmatprep.subr.bf16.mxu0 %v844
    %1170 = vmatpush1.bf16.msra.mxu0 %v843
    %1171 = vmatprep.subr.bf16.mxu0 %v854
    %1172 = vmatpush1.bf16.msra.mxu0 %v853
    %1173 = vmatprep.subr.bf16.mxu0 %v864
    %1174 = vmatpush1.bf16.msra.mxu0 %v863
    %1175 = vmatprep.subr.bf16.mxu0 %v874
    %1176 = vmatpush1.bf16.msra.mxu0 %v873
    %1177 = vmatprep.subr.bf16.mxu0 %v884
    %1178 = vmatpush1.bf16.msra.mxu0 %v883
    %1179 = vmatprep.subr.bf16.mxu0 %v894
    %1180 = vmatpush1.bf16.msra.mxu0 %v893
    %1181 = vmatprep.subr.bf16.mxu0 %v904
    %1182 = vmatpush1.bf16.msra.mxu0 %v903
    %1183 = vmatprep.mubr.bf16.mxu0 %v266
    %1184 = vmatmul.mubr.bf16.gmra.mrb[0].mxu0 %v265
    %v1185 = vpop.f32.mrb[0].mxu0
    %v1186 = vadd.f32 %v231, %v1185
    %v1187 = vpop.f32.mrb[0].mxu0
    %v1188 = vadd.f32 %v235, %v1187
    %v1189 = vpop.f32.mrb[0].mxu0
    %v1190 = vpop.f32.mrb[0].mxu0
    %1191 = vdwg.mxu0
    %1192 = vmatprep.subr.bf16.mxu0 %v756
    %1193 = vmatpush1.bf16.msra.mxu0 %v755
    %1194 = vmatprep.subr.bf16.mxu0 %v766
    %1195 = vmatpush1.bf16.msra.mxu0 %v765
    %1196 = vmatprep.subr.bf16.mxu0 %v776
    %1197 = vmatpush1.bf16.msra.mxu0 %v775
    %1198 = vmatprep.subr.bf16.mxu0 %v786
    %1199 = vmatpush1.bf16.msra.mxu0 %v785
    %1200 = vmatprep.subr.bf16.mxu0 %v796
    %1201 = vmatpush1.bf16.msra.mxu0 %v795
    %1202 = vmatprep.subr.bf16.mxu0 %v806
    %1203 = vmatpush1.bf16.msra.mxu0 %v805
    %1204 = vmatprep.subr.bf16.mxu0 %v816
    %1205 = vmatpush1.bf16.msra.mxu0 %v815
    %1206 = vmatprep.subr.bf16.mxu0 %v826
    %1207 = vmatpush1.bf16.msra.mxu0 %v825
    %1208 = vmatprep.subr.bf16.mxu0 %v836
    %1209 = vmatpush1.bf16.msra.mxu0 %v835
    %1210 = vmatprep.subr.bf16.mxu0 %v846
    %1211 = vmatpush1.bf16.msra.mxu0 %v845
    %1212 = vmatprep.subr.bf16.mxu0 %v856
    %1213 = vmatpush1.bf16.msra.mxu0 %v855
    %1214 = vmatprep.subr.bf16.mxu0 %v866
    %1215 = vmatpush1.bf16.msra.mxu0 %v865
    %1216 = vmatprep.subr.bf16.mxu0 %v876
    %1217 = vmatpush1.bf16.msra.mxu0 %v875
    %1218 = vmatprep.subr.bf16.mxu0 %v886
    %1219 = vmatpush1.bf16.msra.mxu0 %v885
    %1220 = vmatprep.subr.bf16.mxu0 %v896
    %1221 = vmatpush1.bf16.msra.mxu0 %v895
    %1222 = vmatprep.subr.bf16.mxu0 %v906
    %1223 = vmatpush1.bf16.msra.mxu0 %v905
    %1224 = vmatprep.mubr.bf16.mxu0 %v266
    %1225 = vmatmul.mubr.bf16.gmra.mrb[0].mxu0 %v265
    %v1226 = vpop.f32.mrb[0].mxu0
    %v1227 = vadd.f32 %v239, %v1226
    %v1228 = vpop.f32.mrb[0].mxu0
    %v1229 = vadd.f32 %v243, %v1228
    %v1230 = vpop.f32.mrb[0].mxu0
    %v1231 = vpop.f32.mrb[0].mxu0
    %1232 = vdwg.mxu0
    %1233 = vmatprep.subr.bf16.mxu0 %v758
    %1234 = vmatpush1.bf16.msra.mxu0 %v757
    %1235 = vmatprep.subr.bf16.mxu0 %v768
    %1236 = vmatpush1.bf16.msra.mxu0 %v767
    %1237 = vmatprep.subr.bf16.mxu0 %v778
    %1238 = vmatpush1.bf16.msra.mxu0 %v777
    %1239 = vmatprep.subr.bf16.mxu0 %v788
    %1240 = vmatpush1.bf16.msra.mxu0 %v787
    %1241 = vmatprep.subr.bf16.mxu0 %v798
    %1242 = vmatpush1.bf16.msra.mxu0 %v797
    %1243 = vmatprep.subr.bf16.mxu0 %v808
    %1244 = vmatpush1.bf16.msra.mxu0 %v807
    %1245 = vmatprep.subr.bf16.mxu0 %v818
    %1246 = vmatpush1.bf16.msra.mxu0 %v817
    %1247 = vmatprep.subr.bf16.mxu0 %v828
    %1248 = vmatpush1.bf16.msra.mxu0 %v827
    %1249 = vmatprep.subr.bf16.mxu0 %v838
    %1250 = vmatpush1.bf16.msra.mxu0 %v837
    %1251 = vmatprep.subr.bf16.mxu0 %v848
    %1252 = vmatpush1.bf16.msra.mxu0 %v847
    %1253 = vmatprep.subr.bf16.mxu0 %v858
    %1254 = vmatpush1.bf16.msra.mxu0 %v857
    %1255 = vmatprep.subr.bf16.mxu0 %v868
    %1256 = vmatpush1.bf16.msra.mxu0 %v867
    %1257 = vmatprep.subr.bf16.mxu0 %v878
    %1258 = vmatpush1.bf16.msra.mxu0 %v877
    %1259 = vmatprep.subr.bf16.mxu0 %v888
    %1260 = vmatpush1.bf16.msra.mxu0 %v887
    %1261 = vmatprep.subr.bf16.mxu0 %v898
    %1262 = vmatpush1.bf16.msra.mxu0 %v897
    %1263 = vmatprep.subr.bf16.mxu0 %v908
    %1264 = vmatpush1.bf16.msra.mxu0 %v907
    %1265 = vmatprep.mubr.bf16.mxu0 %v266
    %1266 = vmatmul.mubr.bf16.gmra.mrb[0].mxu0 %v265
    %v1267 = vpop.f32.mrb[0].mxu0
    %v1268 = vadd.f32 %v247, %v1267
    %v1269 = vpop.f32.mrb[0].mxu0
    %v1270 = vadd.f32 %v251, %v1269
    %v1271 = vpop.f32.mrb[0].mxu0
    %v1272 = vpop.f32.mrb[0].mxu0
    %1273 = vdwg.mxu0
    %v1274 = vadd.f32 %v1104, %v1106
    %v1275 = vadd.f32 %v1274, %v1145
    %v1276 = vadd.f32 %v1275, %v1147
    %v1277 = vadd.f32 %v1276, %v1186
    %1278 = vadd.xlane.f32.xlu0 %v1277
    %v1279 = vpop.xlane.xlu0 %1278
    %v1280 = vrot.slane %v1279, 4
    %v1281 = vadd.f32 %v1279, %v1280
    %v1282 = vmul.f32 %v1104, %v1104
    %v1283 = vmul.f32 %v1106, %v1106
    %v1284 = vmul.f32 %v1145, %v1145
    %v1285 = vmul.f32 %v1147, %v1147
    %v1286 = vmul.f32 %v1186, %v1186
    %v1287 = vadd.f32 %v1282, %v1283
    %v1288 = vadd.f32 %v1287, %v1284
    %v1289 = vadd.f32 %v1288, %v1285
    %v1290 = vadd.f32 %v1289, %v1286
    %1291 = vadd.xlane.f32.xlu0 %v1290
    %v1292 = vpop.xlane.xlu0 %1291
    %v1293 = vrot.slane %v1292, 4
    %v1294 = vadd.f32 %v1292, %v1293
    %v1295 = vmul.f32 %v1281, 0.0013020834
    %v1296 = vmul.f32 %v1294, 0.0013020834
    %v1297 = vmul.f32 %v1295, %v1295
    %v1298 = vsub.f32 %v1296, %v1297
    %v1299 = vadd.f32 %v1298, 1e-05
    %v1300 = vrsqrt.pop %v1299
    %v1301 = vmul.f32 %v46, %v1300
    %v1302 = vmul.f32 %v1295, %v1301
    %1304 = vrot.lane.b32.xlu0 %v1302, 1
    %v1305 = vpop.permute.xlu0 %1304
    %v1307 = vsub.f32 %v46, %v1305
    %1309 = vset.pattern.permute.xlu0 0
    %1310 = vperm.xlu0 %1309, %v1301
    %v1311 = vpop.permute.xlu0 %1310
    %v1313 = vmul.f32 %v1104, %v1311
    %v1314 = vmul.f32 %v1106, %v1311
    %v1315 = vmul.f32 %v1145, %v1311
    %v1316 = vmul.f32 %v1147, %v1311
    %v1317 = vmul.f32 %v1186, %v1311
    %v1318 = vld [vmem:[%s4] sm:$0x1f]
    %1320 = vset.pattern.permute.xlu0 1
    %1321 = vperm.xlu0 %1320, %v1307
    %v1322 = vpop.permute.xlu0 %1321
    %v1325 = vlaneseq
    %v1326 = vshrl.u32 %v1325, 7
    %v1327 = vsub.s32 0, %v1326
    %v1328 = vrot.slane %v1318, %v1327
    %v1329 = vlaneseq
    %v1330 = vshrl.u32 %v1329, 7
    %v1331 = vsub.s32 1, %v1330
    %v1332 = vrot.slane %v1318, %v1331
    %v1333 = vlaneseq
    %v1334 = vshrl.u32 %v1333, 7
    %v1335 = vsub.s32 2, %v1334
    %v1336 = vrot.slane %v1318, %v1335
    %v1337 = vlaneseq
    %v1338 = vshrl.u32 %v1337, 7
    %v1339 = vsub.s32 3, %v1338
    %v1340 = vrot.slane %v1318, %v1339
    %v1341 = vlaneseq
    %v1342 = vshrl.u32 %v1341, 7
    %v1343 = vsub.s32 4, %v1342
    %v1344 = vrot.slane %v1318, %v1343
    %v1350 = vmul.f32 %v1322, %v1328
    %v1351 = vmul.f32 %v1322, %v1332
    %v1352 = vmul.f32 %v1322, %v1336
    %v1353 = vmul.f32 %v1322, %v1340
    %v1354 = vmul.f32 %v1322, %v1344
    %v1355 = vadd.f32 %v1313, %v1350
    %v1356 = vadd.f32 %v1314, %v1351
    %v1357 = vadd.f32 %v1315, %v1352
    %v1358 = vadd.f32 %v1316, %v1353
    %v1359 = vadd.f32 %v1317, %v1354
    %v1360 = vadd.f32 %v1188, %v1227
    %v1361 = vadd.f32 %v1360, %v1229
    %v1362 = vadd.f32 %v1361, %v1268
    %v1363 = vadd.f32 %v1362, %v1270
    %1364 = vadd.xlane.f32.xlu0 %v1363
    %v1365 = vpop.xlane.xlu0 %1364
    %v1366 = vrot.slane %v1365, 4
    %v1367 = vadd.f32 %v1365, %v1366
    %v1368 = vmul.f32 %v1188, %v1188
    %v1369 = vmul.f32 %v1227, %v1227
    %v1370 = vmul.f32 %v1229, %v1229
    %v1371 = vmul.f32 %v1268, %v1268
    %v1372 = vmul.f32 %v1270, %v1270
    %v1373 = vadd.f32 %v1368, %v1369
    %v1374 = vadd.f32 %v1373, %v1370
    %v1375 = vadd.f32 %v1374, %v1371
    %v1376 = vadd.f32 %v1375, %v1372
    %1377 = vadd.xlane.f32.xlu0 %v1376
    %v1378 = vpop.xlane.xlu0 %1377
    %v1379 = vrot.slane %v1378, 4
    %v1380 = vadd.f32 %v1378, %v1379
    %v1381 = vmul.f32 %v1367, 0.0013020834
    %v1382 = vmul.f32 %v1380, 0.0013020834
    %v1383 = vmul.f32 %v1381, %v1381
    %v1384 = vsub.f32 %v1382, %v1383
    %v1385 = vadd.f32 %v1384, 1e-05
    %v1386 = vrsqrt.pop %v1385
    %1388 = vrot.lane.b32.xlu0 %v1386, 2
    %v1389 = vpop.permute.xlu0 %1388
    %v1391 = vmul.f32 %v46, %v1389
    %1393 = vrot.lane.b32.xlu0 %v1391, 126
    %v1394 = vpop.permute.xlu0 %1393
    %v1396 = vmul.f32 %v1381, %v1394
    %1398 = vrot.lane.b32.xlu0 %v1396, 3
    %v1399 = vpop.permute.xlu0 %1398
    %v1401 = vsub.f32 %v46, %v1399
    %1402 = vset.pattern.permute.xlu0 2
    %1403 = vperm.xlu0 %1402, %v1391
    %v1404 = vpop.permute.xlu0 %1403
    %v1406 = vmul.f32 %v1188, %v1404
    %v1407 = vmul.f32 %v1227, %v1404
    %v1408 = vmul.f32 %v1229, %v1404
    %v1409 = vmul.f32 %v1268, %v1404
    %v1410 = vmul.f32 %v1270, %v1404
    %v1411 = vld [vmem:[%s5] sm:$0x1f]
    %1413 = vset.pattern.permute.xlu0 3
    %1414 = vperm.xlu0 %1413, %v1401
    %v1415 = vpop.permute.xlu0 %1414
    %v1418 = vlaneseq
    %v1419 = vshrl.u32 %v1418, 7
    %v1420 = vsub.s32 0, %v1419
    %v1421 = vrot.slane %v1411, %v1420
    %v1422 = vlaneseq
    %v1423 = vshrl.u32 %v1422, 7
    %v1424 = vsub.s32 1, %v1423
    %v1425 = vrot.slane %v1411, %v1424
    %v1426 = vlaneseq
    %v1427 = vshrl.u32 %v1426, 7
    %v1428 = vsub.s32 2, %v1427
    %v1429 = vrot.slane %v1411, %v1428
    %v1430 = vlaneseq
    %v1431 = vshrl.u32 %v1430, 7
    %v1432 = vsub.s32 3, %v1431
    %v1433 = vrot.slane %v1411, %v1432
    %v1434 = vlaneseq
    %v1435 = vshrl.u32 %v1434, 7
    %v1436 = vsub.s32 4, %v1435
    %v1437 = vrot.slane %v1411, %v1436
    %v1443 = vmul.f32 %v1415, %v1421
    %v1444 = vmul.f32 %v1415, %v1425
    %v1445 = vmul.f32 %v1415, %v1429
    %v1446 = vmul.f32 %v1415, %v1433
    %v1447 = vmul.f32 %v1415, %v1437
    %v1448 = vadd.f32 %v1406, %v1443
    %v1449 = vadd.f32 %v1407, %v1444
    %v1450 = vadd.f32 %v1408, %v1445
    %v1451 = vadd.f32 %v1409, %v1446
    %v1452 = vadd.f32 %v1410, %v1447
    %v1453 = vadd.f32 %v1355, %v1448
    %v1454 = vadd.f32 %v1356, %v1449
    %v1455 = vadd.f32 %v1357, %v1450
    %v1456 = vadd.f32 %v1358, %v1451
    %v1457 = vadd.f32 %v1359, %v1452
    %v1458 = vld [vmem:[%s7] sm:$0xff]
    %v1459 = vmul.f32 %v1458, %v1453
    %v1460 = vmul.f32 %v1458, %v1454
    %v1461 = vmul.f32 %v1458, %v1455
    %1462 = vrot.lane.b32.xlu0 %v1453, 127
    %v1463 = vpop.permute.xlu0 %1462
    %1464 = vrot.lane.b32.xlu0 %v1454, 127
    %v1465 = vpop.permute.xlu0 %1464
    %1466 = vrot.lane.b32.xlu0 %v1455, 127
    %v1467 = vpop.permute.xlu0 %1466
    %v1468 = vlaneseq
    %v1469 = vand.u32 %v1468, 127
    %vm1470 = vcmp.lt.s32.totalorder %v1469, 127
    %v1471 = vsel %vm1470, %v1465, %v1467
    %v1472 = vsel %vm1470, %v1463, %v1465
    %v1473 = vsel %vm1470, %v1467, %v1463
    %v1474 = vld [vmem:[%s7 + $0x8] sm:$0xff]
    %v1475 = vmul.f32 %v1474, %v1472
    %v1476 = vmul.f32 %v1474, %v1471
    %v1477 = vmul.f32 %v1474, %v1473
    %1478 = vrot.lane.b32.xlu0 %v1453, 126
    %v1479 = vpop.permute.xlu0 %1478
    %1480 = vrot.lane.b32.xlu0 %v1454, 126
    %v1481 = vpop.permute.xlu0 %1480
    %1482 = vrot.lane.b32.xlu0 %v1455, 126
    %v1483 = vpop.permute.xlu0 %1482
    %vm1484 = vcmp.lt.s32.totalorder %v1469, 126
    %v1485 = vsel %vm1484, %v1481, %v1483
    %v1486 = vsel %vm1484, %v1479, %v1481
    %v1487 = vsel %vm1484, %v1483, %v1479
    %v1488 = vld [vmem:[%s7 + $0x10] sm:$0xff]
    %v1489 = vmul.f32 %v1488, %v1486
    %v1490 = vmul.f32 %v1488, %v1485
    %v1491 = vmul.f32 %v1488, %v1487
    %1492 = vrot.lane.b32.xlu0 %v1453, 125
    %v1493 = vpop.permute.xlu0 %1492
    %1494 = vrot.lane.b32.xlu0 %v1454, 125
    %v1495 = vpop.permute.xlu0 %1494
    %1496 = vrot.lane.b32.xlu0 %v1455, 125
    %v1497 = vpop.permute.xlu0 %1496
    %vm1498 = vcmp.lt.s32.totalorder %v1469, 125
    %v1499 = vsel %vm1498, %v1495, %v1497
    %v1500 = vsel %vm1498, %v1493, %v1495
    %v1501 = vsel %vm1498, %v1497, %v1493
    %v1502 = vld [vmem:[%s7 + $0x18] sm:$0xff]
    %v1503 = vmul.f32 %v1502, %v1500
    %v1504 = vadd.f32 %v1459, %v1503
    %v1505 = vmul.f32 %v1502, %v1499
    %v1506 = vadd.f32 %v1460, %v1505
    %v1507 = vmul.f32 %v1502, %v1501
    %v1508 = vadd.f32 %v1461, %v1507
    %1509 = vrot.lane.b32.xlu0 %v1453, 124
    %v1510 = vpop.permute.xlu0 %1509
    %1511 = vrot.lane.b32.xlu0 %v1454, 124
    %v1512 = vpop.permute.xlu0 %1511
    %1513 = vrot.lane.b32.xlu0 %v1455, 124
    %v1514 = vpop.permute.xlu0 %1513
    %vm1515 = vcmp.lt.s32.totalorder %v1469, 124
    %v1516 = vsel %vm1515, %v1512, %v1514
    %v1517 = vsel %vm1515, %v1510, %v1512
    %v1518 = vsel %vm1515, %v1514, %v1510
    %v1519 = vld [vmem:[%s7 + $0x20] sm:$0xff]
    %v1520 = vmul.f32 %v1519, %v1517
    %v1521 = vadd.f32 %v1475, %v1520
    %v1522 = vmul.f32 %v1519, %v1516
    %v1523 = vadd.f32 %v1476, %v1522
    %v1524 = vmul.f32 %v1519, %v1518
    %v1525 = vadd.f32 %v1477, %v1524
    %1526 = vrot.lane.b32.xlu0 %v1453, 123
    %v1527 = vpop.permute.xlu0 %1526
    %1528 = vrot.lane.b32.xlu0 %v1454, 123
    %v1529 = vpop.permute.xlu0 %1528
    %1530 = vrot.lane.b32.xlu0 %v1455, 123
    %v1531 = vpop.permute.xlu0 %1530
    %vm1532 = vcmp.lt.s32.totalorder %v1469, 123
    %v1533 = vsel %vm1532, %v1529, %v1531
    %v1534 = vsel %vm1532, %v1527, %v1529
    %v1535 = vsel %vm1532, %v1531, %v1527
    %v1536 = vld [vmem:[%s7 + $0x28] sm:$0xff]
    %v1537 = vmul.f32 %v1536, %v1534
    %v1538 = vadd.f32 %v1489, %v1537
    %v1539 = vmul.f32 %v1536, %v1533
    %v1540 = vadd.f32 %v1490, %v1539
    %v1541 = vmul.f32 %v1536, %v1535
    %v1542 = vadd.f32 %v1491, %v1541
    %1543 = vrot.lane.b32.xlu0 %v1453, 122
    %v1544 = vpop.permute.xlu0 %1543
    %1545 = vrot.lane.b32.xlu0 %v1454, 122
    %v1546 = vpop.permute.xlu0 %1545
    %1547 = vrot.lane.b32.xlu0 %v1455, 122
    %v1548 = vpop.permute.xlu0 %1547
    %vm1549 = vcmp.lt.s32.totalorder %v1469, 122
    %v1550 = vsel %vm1549, %v1546, %v1548
    %v1551 = vsel %vm1549, %v1544, %v1546
    %v1552 = vsel %vm1549, %v1548, %v1544
    %v1553 = vld [vmem:[%s7 + $0x30] sm:$0xff]
    %v1554 = vmul.f32 %v1553, %v1551
    %v1555 = vadd.f32 %v1504, %v1554
    %v1556 = vmul.f32 %v1553, %v1550
    %v1557 = vadd.f32 %v1506, %v1556
    %v1558 = vmul.f32 %v1553, %v1552
    %v1559 = vadd.f32 %v1508, %v1558
    %1560 = vrot.lane.b32.xlu0 %v1453, 121
    %v1561 = vpop.permute.xlu0 %1560
    %1562 = vrot.lane.b32.xlu0 %v1454, 121
    %v1563 = vpop.permute.xlu0 %1562
    %1564 = vrot.lane.b32.xlu0 %v1455, 121
    %v1565 = vpop.permute.xlu0 %1564
    %vm1566 = vcmp.lt.s32.totalorder %v1469, 121
    %v1567 = vsel %vm1566, %v1563, %v1565
    %v1568 = vsel %vm1566, %v1561, %v1563
    %v1569 = vsel %vm1566, %v1565, %v1561
    %v1570 = vld [vmem:[%s7 + $0x38] sm:$0xff]
    %v1571 = vmul.f32 %v1570, %v1568
    %v1572 = vadd.f32 %v1521, %v1571
    %v1573 = vmul.f32 %v1570, %v1567
    %v1574 = vadd.f32 %v1523, %v1573
    %v1575 = vmul.f32 %v1570, %v1569
    %v1576 = vadd.f32 %v1525, %v1575
    %1577 = vrot.lane.b32.xlu0 %v1453, 120
    %v1578 = vpop.permute.xlu0 %1577
    %1579 = vrot.lane.b32.xlu0 %v1454, 120
    %v1580 = vpop.permute.xlu0 %1579
    %1581 = vrot.lane.b32.xlu0 %v1455, 120
    %v1582 = vpop.permute.xlu0 %1581
    %vm1583 = vcmp.lt.s32.totalorder %v1469, 120
    %v1584 = vsel %vm1583, %v1580, %v1582
    %v1585 = vsel %vm1583, %v1578, %v1580
    %v1586 = vsel %vm1583, %v1582, %v1578
    %v1587 = vld [vmem:[%s7 + $0x40] sm:$0xff]
    %v1588 = vmul.f32 %v1587, %v1585
    %v1589 = vadd.f32 %v1538, %v1588
    %v1590 = vmul.f32 %v1587, %v1584
    %v1591 = vadd.f32 %v1540, %v1590
    %v1592 = vmul.f32 %v1587, %v1586
    %v1593 = vadd.f32 %v1542, %v1592
    %1594 = vrot.lane.b32.xlu0 %v1453, 104
    %v1595 = vpop.permute.xlu0 %1594
    %1596 = vrot.lane.b32.xlu0 %v1454, 104
    %v1597 = vpop.permute.xlu0 %1596
    %1598 = vrot.lane.b32.xlu0 %v1455, 104
    %v1599 = vpop.permute.xlu0 %1598
    %1600 = vrot.lane.b32.xlu0 %v1456, 104
    %v1601 = vpop.permute.xlu0 %1600
    %vm1602 = vcmp.lt.s32.totalorder %v1469, 104
    %v1603 = vsel %vm1602, %v1599, %v1601
    %v1604 = vsel %vm1602, %v1597, %v1599
    %v1605 = vsel %vm1602, %v1595, %v1597
    %v1606 = vld [vmem:[%s7 + $0x48] sm:$0xff]
    %v1607 = vmul.f32 %v1606, %v1605
    %v1608 = vadd.f32 %v1555, %v1607
    %v1609 = vmul.f32 %v1606, %v1604
    %v1610 = vadd.f32 %v1557, %v1609
    %v1611 = vmul.f32 %v1606, %v1603
    %v1612 = vadd.f32 %v1559, %v1611
    %1613 = vrot.lane.b32.xlu0 %v1605, 127
    %v1614 = vpop.permute.xlu0 %1613
    %1615 = vrot.lane.b32.xlu0 %v1604, 127
    %v1616 = vpop.permute.xlu0 %1615
    %1617 = vrot.lane.b32.xlu0 %v1603, 127
    %v1618 = vpop.permute.xlu0 %1617
    %v1619 = vsel %vm1470, %v1616, %v1618
    %v1620 = vsel %vm1470, %v1614, %v1616
    %v1621 = vsel %vm1470, %v1618, %v1614
    %v1622 = vld [vmem:[%s7 + $0x50] sm:$0xff]
    %v1623 = vmul.f32 %v1622, %v1620
    %v1624 = vadd.f32 %v1572, %v1623
    %v1625 = vmul.f32 %v1622, %v1619
    %v1626 = vadd.f32 %v1574, %v1625
    %v1627 = vmul.f32 %v1622, %v1621
    %v1628 = vadd.f32 %v1576, %v1627
    %1629 = vrot.lane.b32.xlu0 %v1605, 126
    %v1630 = vpop.permute.xlu0 %1629
    %1631 = vrot.lane.b32.xlu0 %v1604, 126
    %v1632 = vpop.permute.xlu0 %1631
    %1633 = vrot.lane.b32.xlu0 %v1603, 126
    %v1634 = vpop.permute.xlu0 %1633
    %v1635 = vsel %vm1484, %v1632, %v1634
    %v1636 = vsel %vm1484, %v1630, %v1632
    %v1637 = vsel %vm1484, %v1634, %v1630
    %v1638 = vld [vmem:[%s7 + $0x58] sm:$0xff]
    %v1639 = vmul.f32 %v1638, %v1636
    %v1640 = vadd.f32 %v1589, %v1639
    %v1641 = vmul.f32 %v1638, %v1635
    %v1642 = vadd.f32 %v1591, %v1641
    %v1643 = vmul.f32 %v1638, %v1637
    %v1644 = vadd.f32 %v1593, %v1643
    %1645 = vrot.lane.b32.xlu0 %v1605, 125
    %v1646 = vpop.permute.xlu0 %1645
    %1647 = vrot.lane.b32.xlu0 %v1604, 125
    %v1648 = vpop.permute.xlu0 %1647
    %1649 = vrot.lane.b32.xlu0 %v1603, 125
    %v1650 = vpop.permute.xlu0 %1649
    %v1651 = vsel %vm1498, %v1648, %v1650
    %v1652 = vsel %vm1498, %v1646, %v1648
    %v1653 = vsel %vm1498, %v1650, %v1646
    %v1654 = vld [vmem:[%s7 + $0x60] sm:$0xff]
    %v1655 = vmul.f32 %v1654, %v1652
    %v1656 = vadd.f32 %v1608, %v1655
    %v1657 = vmul.f32 %v1654, %v1651
    %v1658 = vadd.f32 %v1610, %v1657
    %v1659 = vmul.f32 %v1654, %v1653
    %v1660 = vadd.f32 %v1612, %v1659
    %1661 = vrot.lane.b32.xlu0 %v1605, 124
    %v1662 = vpop.permute.xlu0 %1661
    %1663 = vrot.lane.b32.xlu0 %v1604, 124
    %v1664 = vpop.permute.xlu0 %1663
    %1665 = vrot.lane.b32.xlu0 %v1603, 124
    %v1666 = vpop.permute.xlu0 %1665
    %v1667 = vsel %vm1515, %v1664, %v1666
    %v1668 = vsel %vm1515, %v1662, %v1664
    %v1669 = vsel %vm1515, %v1666, %v1662
    %v1670 = vld [vmem:[%s7 + $0x68] sm:$0xff]
    %v1671 = vmul.f32 %v1670, %v1668
    %v1672 = vadd.f32 %v1624, %v1671
    %v1673 = vmul.f32 %v1670, %v1667
    %v1674 = vadd.f32 %v1626, %v1673
    %v1675 = vmul.f32 %v1670, %v1669
    %v1676 = vadd.f32 %v1628, %v1675
    %1677 = vrot.lane.b32.xlu0 %v1605, 123
    %v1678 = vpop.permute.xlu0 %1677
    %1679 = vrot.lane.b32.xlu0 %v1604, 123
    %v1680 = vpop.permute.xlu0 %1679
    %1681 = vrot.lane.b32.xlu0 %v1603, 123
    %v1682 = vpop.permute.xlu0 %1681
    %v1683 = vsel %vm1532, %v1680, %v1682
    %v1684 = vsel %vm1532, %v1678, %v1680
    %v1685 = vsel %vm1532, %v1682, %v1678
    %v1686 = vld [vmem:[%s7 + $0x70] sm:$0xff]
    %v1687 = vmul.f32 %v1686, %v1684
    %v1688 = vadd.f32 %v1640, %v1687
    %v1689 = vmul.f32 %v1686, %v1683
    %v1690 = vadd.f32 %v1642, %v1689
    %v1691 = vmul.f32 %v1686, %v1685
    %v1692 = vadd.f32 %v1644, %v1691
    %1693 = vrot.lane.b32.xlu0 %v1605, 122
    %v1694 = vpop.permute.xlu0 %1693
    %1695 = vrot.lane.b32.xlu0 %v1604, 122
    %v1696 = vpop.permute.xlu0 %1695
    %1697 = vrot.lane.b32.xlu0 %v1603, 122
    %v1698 = vpop.permute.xlu0 %1697
    %v1699 = vsel %vm1549, %v1696, %v1698
    %v1700 = vsel %vm1549, %v1694, %v1696
    %v1701 = vsel %vm1549, %v1698, %v1694
    %v1702 = vld [vmem:[%s7 + $0x78] sm:$0xff]
    %v1703 = vmul.f32 %v1702, %v1700
    %v1704 = vadd.f32 %v1656, %v1703
    %v1705 = vmul.f32 %v1702, %v1699
    %v1706 = vadd.f32 %v1658, %v1705
    %v1707 = vmul.f32 %v1702, %v1701
    %v1708 = vadd.f32 %v1660, %v1707
    %1709 = vrot.lane.b32.xlu0 %v1605, 121
    %v1710 = vpop.permute.xlu0 %1709
    %1711 = vrot.lane.b32.xlu0 %v1604, 121
    %v1712 = vpop.permute.xlu0 %1711
    %1713 = vrot.lane.b32.xlu0 %v1603, 121
    %v1714 = vpop.permute.xlu0 %1713
    %v1715 = vsel %vm1566, %v1712, %v1714
    %v1716 = vsel %vm1566, %v1710, %v1712
    %v1717 = vsel %vm1566, %v1714, %v1710
    %v1718 = vld [vmem:[%s7 + $0x80] sm:$0xff]
    %v1719 = vmul.f32 %v1718, %v1716
    %v1720 = vadd.f32 %v1672, %v1719
    %v1721 = vmul.f32 %v1718, %v1715
    %v1722 = vadd.f32 %v1674, %v1721
    %v1723 = vmul.f32 %v1718, %v1717
    %v1724 = vadd.f32 %v1676, %v1723
    %1725 = vrot.lane.b32.xlu0 %v1605, 120
    %v1726 = vpop.permute.xlu0 %1725
    %1727 = vrot.lane.b32.xlu0 %v1604, 120
    %v1728 = vpop.permute.xlu0 %1727
    %1729 = vrot.lane.b32.xlu0 %v1603, 120
    %v1730 = vpop.permute.xlu0 %1729
    %v1731 = vsel %vm1583, %v1728, %v1730
    %v1732 = vsel %vm1583, %v1726, %v1728
    %v1733 = vsel %vm1583, %v1730, %v1726
    %v1734 = vld [vmem:[%s7 + $0x88] sm:$0xff]
    %v1735 = vmul.f32 %v1734, %v1732
    %v1736 = vadd.f32 %v1688, %v1735
    %v1737 = vmul.f32 %v1734, %v1731
    %v1738 = vadd.f32 %v1690, %v1737
    %v1739 = vmul.f32 %v1734, %v1733
    %v1740 = vadd.f32 %v1692, %v1739
    %1741 = vrot.lane.b32.xlu0 %v1453, 80
    %v1742 = vpop.permute.xlu0 %1741
    %1743 = vrot.lane.b32.xlu0 %v1454, 80
    %v1744 = vpop.permute.xlu0 %1743
    %1745 = vrot.lane.b32.xlu0 %v1455, 80
    %v1746 = vpop.permute.xlu0 %1745
    %1747 = vrot.lane.b32.xlu0 %v1456, 80
    %v1748 = vpop.permute.xlu0 %1747
    %vm1749 = vcmp.lt.s32.totalorder %v1469, 80
    %v1750 = vsel %vm1749, %v1746, %v1748
    %v1751 = vsel %vm1749, %v1744, %v1746
    %v1752 = vsel %vm1749, %v1742, %v1744
    %v1753 = vld [vmem:[%s7 + $0x90] sm:$0xff]
    %v1754 = vmul.f32 %v1753, %v1752
    %v1755 = vadd.f32 %v1704, %v1754
    %v1756 = vmul.f32 %v1753, %v1751
    %v1757 = vadd.f32 %v1706, %v1756
    %v1758 = vmul.f32 %v1753, %v1750
    %v1759 = vadd.f32 %v1708, %v1758
    %1760 = vrot.lane.b32.xlu0 %v1752, 127
    %v1761 = vpop.permute.xlu0 %1760
    %1762 = vrot.lane.b32.xlu0 %v1751, 127
    %v1763 = vpop.permute.xlu0 %1762
    %1764 = vrot.lane.b32.xlu0 %v1750, 127
    %v1765 = vpop.permute.xlu0 %1764
    %v1766 = vsel %vm1470, %v1763, %v1765
    %v1767 = vsel %vm1470, %v1761, %v1763
    %v1768 = vsel %vm1470, %v1765, %v1761
    %v1769 = vld [vmem:[%s7 + $0x98] sm:$0xff]
    %v1770 = vmul.f32 %v1769, %v1767
    %v1771 = vadd.f32 %v1720, %v1770
    %v1772 = vmul.f32 %v1769, %v1766
    %v1773 = vadd.f32 %v1722, %v1772
    %v1774 = vmul.f32 %v1769, %v1768
    %v1775 = vadd.f32 %v1724, %v1774
    %1776 = vrot.lane.b32.xlu0 %v1752, 126
    %v1777 = vpop.permute.xlu0 %1776
    %1778 = vrot.lane.b32.xlu0 %v1751, 126
    %v1779 = vpop.permute.xlu0 %1778
    %1780 = vrot.lane.b32.xlu0 %v1750, 126
    %v1781 = vpop.permute.xlu0 %1780
    %v1782 = vsel %vm1484, %v1779, %v1781
    %v1783 = vsel %vm1484, %v1777, %v1779
    %v1784 = vsel %vm1484, %v1781, %v1777
    %v1785 = vld [vmem:[%s7 + $0xa0] sm:$0xff]
    %v1786 = vmul.f32 %v1785, %v1783
    %v1787 = vadd.f32 %v1736, %v1786
    %v1788 = vmul.f32 %v1785, %v1782
    %v1789 = vadd.f32 %v1738, %v1788
    %v1790 = vmul.f32 %v1785, %v1784
    %v1791 = vadd.f32 %v1740, %v1790
    %1792 = vrot.lane.b32.xlu0 %v1752, 125
    %v1793 = vpop.permute.xlu0 %1792
    %1794 = vrot.lane.b32.xlu0 %v1751, 125
    %v1795 = vpop.permute.xlu0 %1794
    %1796 = vrot.lane.b32.xlu0 %v1750, 125
    %v1797 = vpop.permute.xlu0 %1796
    %v1798 = vsel %vm1498, %v1795, %v1797
    %v1799 = vsel %vm1498, %v1793, %v1795
    %v1800 = vsel %vm1498, %v1797, %v1793
    %v1801 = vld [vmem:[%s7 + $0xa8] sm:$0xff]
    %v1802 = vmul.f32 %v1801, %v1799
    %v1803 = vadd.f32 %v1755, %v1802
    %v1804 = vmul.f32 %v1801, %v1798
    %v1805 = vadd.f32 %v1757, %v1804
    %v1806 = vmul.f32 %v1801, %v1800
    %v1807 = vadd.f32 %v1759, %v1806
    %1808 = vrot.lane.b32.xlu0 %v1752, 124
    %v1809 = vpop.permute.xlu0 %1808
    %1810 = vrot.lane.b32.xlu0 %v1751, 124
    %v1811 = vpop.permute.xlu0 %1810
    %1812 = vrot.lane.b32.xlu0 %v1750, 124
    %v1813 = vpop.permute.xlu0 %1812
    %v1814 = vsel %vm1515, %v1811, %v1813
    %v1815 = vsel %vm1515, %v1809, %v1811
    %v1816 = vsel %vm1515, %v1813, %v1809
    %v1817 = vld [vmem:[%s7 + $0xb0] sm:$0xff]
    %v1818 = vmul.f32 %v1817, %v1815
    %v1819 = vadd.f32 %v1771, %v1818
    %v1820 = vmul.f32 %v1817, %v1814
    %v1821 = vadd.f32 %v1773, %v1820
    %v1822 = vmul.f32 %v1817, %v1816
    %v1823 = vadd.f32 %v1775, %v1822
    %1824 = vrot.lane.b32.xlu0 %v1752, 123
    %v1825 = vpop.permute.xlu0 %1824
    %1826 = vrot.lane.b32.xlu0 %v1751, 123
    %v1827 = vpop.permute.xlu0 %1826
    %1828 = vrot.lane.b32.xlu0 %v1750, 123
    %v1829 = vpop.permute.xlu0 %1828
    %v1830 = vsel %vm1532, %v1827, %v1829
    %v1831 = vsel %vm1532, %v1825, %v1827
    %v1832 = vsel %vm1532, %v1829, %v1825
    %v1833 = vld [vmem:[%s7 + $0xb8] sm:$0xff]
    %v1834 = vmul.f32 %v1833, %v1831
    %v1835 = vadd.f32 %v1787, %v1834
    %v1836 = vmul.f32 %v1833, %v1830
    %v1837 = vadd.f32 %v1789, %v1836
    %v1838 = vmul.f32 %v1833, %v1832
    %v1839 = vadd.f32 %v1791, %v1838
    %1840 = vrot.lane.b32.xlu0 %v1752, 122
    %v1841 = vpop.permute.xlu0 %1840
    %1842 = vrot.lane.b32.xlu0 %v1751, 122
    %v1843 = vpop.permute.xlu0 %1842
    %1844 = vrot.lane.b32.xlu0 %v1750, 122
    %v1845 = vpop.permute.xlu0 %1844
    %v1846 = vsel %vm1549, %v1843, %v1845
    %v1847 = vsel %vm1549, %v1841, %v1843
    %v1848 = vsel %vm1549, %v1845, %v1841
    %v1849 = vld [vmem:[%s7 + $0xc0] sm:$0xff]
    %v1850 = vmul.f32 %v1849, %v1847
    %v1851 = vadd.f32 %v1803, %v1850
    %v1852 = vmul.f32 %v1849, %v1846
    %v1853 = vadd.f32 %v1805, %v1852
    %v1854 = vmul.f32 %v1849, %v1848
    %v1855 = vadd.f32 %v1807, %v1854
    %1856 = vrot.lane.b32.xlu0 %v1752, 121
    %v1857 = vpop.permute.xlu0 %1856
    %1858 = vrot.lane.b32.xlu0 %v1751, 121
    %v1859 = vpop.permute.xlu0 %1858
    %1860 = vrot.lane.b32.xlu0 %v1750, 121
    %v1861 = vpop.permute.xlu0 %1860
    %v1862 = vsel %vm1566, %v1859, %v1861
    %v1863 = vsel %vm1566, %v1857, %v1859
    %v1864 = vsel %vm1566, %v1861, %v1857
    %v1865 = vld [vmem:[%s7 + $0xc8] sm:$0xff]
    %v1866 = vmul.f32 %v1865, %v1863
    %v1867 = vadd.f32 %v1819, %v1866
    %v1868 = vmul.f32 %v1865, %v1862
    %v1869 = vadd.f32 %v1821, %v1868
    %v1870 = vmul.f32 %v1865, %v1864
    %v1871 = vadd.f32 %v1823, %v1870
    %1872 = vrot.lane.b32.xlu0 %v1752, 120
    %v1873 = vpop.permute.xlu0 %1872
    %1874 = vrot.lane.b32.xlu0 %v1751, 120
    %v1875 = vpop.permute.xlu0 %1874
    %1876 = vrot.lane.b32.xlu0 %v1750, 120
    %v1877 = vpop.permute.xlu0 %1876
    %v1878 = vsel %vm1583, %v1875, %v1877
    %v1879 = vsel %vm1583, %v1873, %v1875
    %v1880 = vsel %vm1583, %v1877, %v1873
    %v1881 = vld [vmem:[%s7 + $0xd0] sm:$0xff]
    %v1882 = vmul.f32 %v1881, %v1879
    %v1883 = vadd.f32 %v1835, %v1882
    %v1884 = vmul.f32 %v1881, %v1878
    %v1885 = vadd.f32 %v1837, %v1884
    %v1886 = vmul.f32 %v1881, %v1880
    %v1887 = vadd.f32 %v1839, %v1886
    %1888 = vrot.lane.b32.xlu0 %v1453, 56
    %v1889 = vpop.permute.xlu0 %1888
    %1890 = vrot.lane.b32.xlu0 %v1454, 56
    %v1891 = vpop.permute.xlu0 %1890
    %1892 = vrot.lane.b32.xlu0 %v1455, 56
    %v1893 = vpop.permute.xlu0 %1892
    %1894 = vrot.lane.b32.xlu0 %v1456, 56
    %v1895 = vpop.permute.xlu0 %1894
    %vm1896 = vcmp.lt.s32.totalorder %v1469, 56
    %v1897 = vsel %vm1896, %v1893, %v1895
    %v1898 = vsel %vm1896, %v1891, %v1893
    %v1899 = vsel %vm1896, %v1889, %v1891
    %v1900 = vld [vmem:[%s7 + $0xd8] sm:$0xff]
    %v1901 = vmul.f32 %v1900, %v1899
    %v1902 = vadd.f32 %v1851, %v1901
    %v1903 = vmul.f32 %v1900, %v1898
    %v1904 = vadd.f32 %v1853, %v1903
    %v1905 = vmul.f32 %v1900, %v1897
    %v1906 = vadd.f32 %v1855, %v1905
    %1907 = vrot.lane.b32.xlu0 %v1899, 127
    %v1908 = vpop.permute.xlu0 %1907
    %1909 = vrot.lane.b32.xlu0 %v1898, 127
    %v1910 = vpop.permute.xlu0 %1909
    %1911 = vrot.lane.b32.xlu0 %v1897, 127
    %v1912 = vpop.permute.xlu0 %1911
    %v1913 = vsel %vm1470, %v1910, %v1912
    %v1914 = vsel %vm1470, %v1908, %v1910
    %v1915 = vsel %vm1470, %v1912, %v1908
    %v1916 = vld [vmem:[%s7 + $0xe0] sm:$0xff]
    %v1917 = vmul.f32 %v1916, %v1914
    %v1918 = vadd.f32 %v1867, %v1917
    %v1919 = vmul.f32 %v1916, %v1913
    %v1920 = vadd.f32 %v1869, %v1919
    %v1921 = vmul.f32 %v1916, %v1915
    %v1922 = vadd.f32 %v1871, %v1921
    %1923 = vrot.lane.b32.xlu0 %v1899, 126
    %v1924 = vpop.permute.xlu0 %1923
    %1925 = vrot.lane.b32.xlu0 %v1898, 126
    %v1926 = vpop.permute.xlu0 %1925
    %1927 = vrot.lane.b32.xlu0 %v1897, 126
    %v1928 = vpop.permute.xlu0 %1927
    %v1929 = vsel %vm1484, %v1926, %v1928
    %v1930 = vsel %vm1484, %v1924, %v1926
    %v1931 = vsel %vm1484, %v1928, %v1924
    %v1932 = vld [vmem:[%s7 + $0xe8] sm:$0xff]
    %v1933 = vmul.f32 %v1932, %v1930
    %v1934 = vadd.f32 %v1883, %v1933
    %v1935 = vmul.f32 %v1932, %v1929
    %v1936 = vadd.f32 %v1885, %v1935
    %v1937 = vmul.f32 %v1932, %v1931
    %v1938 = vadd.f32 %v1887, %v1937
    %1939 = vrot.lane.b32.xlu0 %v1899, 125
    %v1940 = vpop.permute.xlu0 %1939
    %1941 = vrot.lane.b32.xlu0 %v1898, 125
    %v1942 = vpop.permute.xlu0 %1941
    %1943 = vrot.lane.b32.xlu0 %v1897, 125
    %v1944 = vpop.permute.xlu0 %1943
    %v1945 = vsel %vm1498, %v1942, %v1944
    %v1946 = vsel %vm1498, %v1940, %v1942
    %v1947 = vsel %vm1498, %v1944, %v1940
    %v1948 = vld [vmem:[%s7 + $0xf0] sm:$0xff]
    %v1949 = vmul.f32 %v1948, %v1946
    %v1950 = vadd.f32 %v1902, %v1949
    %v1951 = vmul.f32 %v1948, %v1945
    %v1952 = vadd.f32 %v1904, %v1951
    %v1953 = vmul.f32 %v1948, %v1947
    %v1954 = vadd.f32 %v1906, %v1953
    %1955 = vrot.lane.b32.xlu0 %v1899, 124
    %v1956 = vpop.permute.xlu0 %1955
    %1957 = vrot.lane.b32.xlu0 %v1898, 124
    %v1958 = vpop.permute.xlu0 %1957
    %1959 = vrot.lane.b32.xlu0 %v1897, 124
    %v1960 = vpop.permute.xlu0 %1959
    %v1961 = vsel %vm1515, %v1958, %v1960
    %v1962 = vsel %vm1515, %v1956, %v1958
    %v1963 = vsel %vm1515, %v1960, %v1956
    %v1964 = vld [vmem:[%s7 + $0xf8] sm:$0xff]
    %v1965 = vmul.f32 %v1964, %v1962
    %v1966 = vadd.f32 %v1918, %v1965
    %v1967 = vmul.f32 %v1964, %v1961
    %v1968 = vadd.f32 %v1920, %v1967
    %v1969 = vmul.f32 %v1964, %v1963
    %v1970 = vadd.f32 %v1922, %v1969
    %1971 = vrot.lane.b32.xlu0 %v1899, 123
    %v1972 = vpop.permute.xlu0 %1971
    %1973 = vrot.lane.b32.xlu0 %v1898, 123
    %v1974 = vpop.permute.xlu0 %1973
    %1975 = vrot.lane.b32.xlu0 %v1897, 123
    %v1976 = vpop.permute.xlu0 %1975
    %v1977 = vsel %vm1532, %v1974, %v1976
    %v1978 = vsel %vm1532, %v1972, %v1974
    %v1979 = vsel %vm1532, %v1976, %v1972
    %v1980 = vld [vmem:[%s7 + $0x100] sm:$0xff]
    %v1981 = vmul.f32 %v1980, %v1978
    %v1982 = vadd.f32 %v1934, %v1981
    %v1983 = vmul.f32 %v1980, %v1977
    %v1984 = vadd.f32 %v1936, %v1983
    %v1985 = vmul.f32 %v1980, %v1979
    %v1986 = vadd.f32 %v1938, %v1985
    %1987 = vrot.lane.b32.xlu0 %v1899, 122
    %v1988 = vpop.permute.xlu0 %1987
    %1989 = vrot.lane.b32.xlu0 %v1898, 122
    %v1990 = vpop.permute.xlu0 %1989
    %1991 = vrot.lane.b32.xlu0 %v1897, 122
    %v1992 = vpop.permute.xlu0 %1991
    %v1993 = vsel %vm1549, %v1990, %v1992
    %v1994 = vsel %vm1549, %v1988, %v1990
    %v1995 = vsel %vm1549, %v1992, %v1988
    %v1996 = vld [vmem:[%s7 + $0x108] sm:$0xff]
    %v1997 = vmul.f32 %v1996, %v1994
    %v1998 = vadd.f32 %v1950, %v1997
    %v1999 = vmul.f32 %v1996, %v1993
    %v2000 = vadd.f32 %v1952, %v1999
    %v2001 = vmul.f32 %v1996, %v1995
    %v2002 = vadd.f32 %v1954, %v2001
    %2003 = vrot.lane.b32.xlu0 %v1899, 121
    %v2004 = vpop.permute.xlu0 %2003
    %2005 = vrot.lane.b32.xlu0 %v1898, 121
    %v2006 = vpop.permute.xlu0 %2005
    %2007 = vrot.lane.b32.xlu0 %v1897, 121
    %v2008 = vpop.permute.xlu0 %2007
    %v2009 = vsel %vm1566, %v2006, %v2008
    %v2010 = vsel %vm1566, %v2004, %v2006
    %v2011 = vsel %vm1566, %v2008, %v2004
    %v2012 = vld [vmem:[%s7 + $0x110] sm:$0xff]
    %v2013 = vmul.f32 %v2012, %v2010
    %v2014 = vadd.f32 %v1966, %v2013
    %v2015 = vmul.f32 %v2012, %v2009
    %v2016 = vadd.f32 %v1968, %v2015
    %v2017 = vmul.f32 %v2012, %v2011
    %v2018 = vadd.f32 %v1970, %v2017
    %2019 = vrot.lane.b32.xlu0 %v1899, 120
    %v2020 = vpop.permute.xlu0 %2019
    %2021 = vrot.lane.b32.xlu0 %v1898, 120
    %v2022 = vpop.permute.xlu0 %2021
    %2023 = vrot.lane.b32.xlu0 %v1897, 120
    %v2024 = vpop.permute.xlu0 %2023
    %v2025 = vsel %vm1583, %v2022, %v2024
    %v2026 = vsel %vm1583, %v2020, %v2022
    %v2027 = vsel %vm1583, %v2024, %v2020
    %v2028 = vld [vmem:[%s7 + $0x118] sm:$0xff]
    %v2029 = vmul.f32 %v2028, %v2026
    %v2030 = vadd.f32 %v1982, %v2029
    %v2031 = vmul.f32 %v2028, %v2025
    %v2032 = vadd.f32 %v1984, %v2031
    %v2033 = vmul.f32 %v2028, %v2027
    %v2034 = vadd.f32 %v1986, %v2033
    %2035 = vrot.lane.b32.xlu0 %v1453, 32
    %v2036 = vpop.permute.xlu0 %2035
    %2037 = vrot.lane.b32.xlu0 %v1454, 32
    %v2038 = vpop.permute.xlu0 %2037
    %2039 = vrot.lane.b32.xlu0 %v1455, 32
    %v2040 = vpop.permute.xlu0 %2039
    %2041 = vrot.lane.b32.xlu0 %v1456, 32
    %v2042 = vpop.permute.xlu0 %2041
    %vm2043 = vcmp.lt.s32.totalorder %v1469, 32
    %v2044 = vsel %vm2043, %v2040, %v2042
    %v2045 = vsel %vm2043, %v2038, %v2040
    %v2046 = vsel %vm2043, %v2036, %v2038
    %v2047 = vld [vmem:[%s7 + $0x120] sm:$0xff]
    %v2048 = vmul.f32 %v2047, %v2046
    %v2049 = vadd.f32 %v1998, %v2048
    %v2050 = vmul.f32 %v2047, %v2045
    %v2051 = vadd.f32 %v2000, %v2050
    %v2052 = vmul.f32 %v2047, %v2044
    %v2053 = vadd.f32 %v2002, %v2052
    %2054 = vrot.lane.b32.xlu0 %v2046, 127
    %v2055 = vpop.permute.xlu0 %2054
    %2056 = vrot.lane.b32.xlu0 %v2045, 127
    %v2057 = vpop.permute.xlu0 %2056
    %2058 = vrot.lane.b32.xlu0 %v2044, 127
    %v2059 = vpop.permute.xlu0 %2058
    %v2060 = vsel %vm1470, %v2057, %v2059
    %v2061 = vsel %vm1470, %v2055, %v2057
    %v2062 = vsel %vm1470, %v2059, %v2055
    %v2063 = vld [vmem:[%s7 + $0x128] sm:$0xff]
    %v2064 = vmul.f32 %v2063, %v2061
    %v2065 = vadd.f32 %v2014, %v2064
    %v2066 = vmul.f32 %v2063, %v2060
    %v2067 = vadd.f32 %v2016, %v2066
    %v2068 = vmul.f32 %v2063, %v2062
    %v2069 = vadd.f32 %v2018, %v2068
    %2070 = vrot.lane.b32.xlu0 %v2046, 126
    %v2071 = vpop.permute.xlu0 %2070
    %2072 = vrot.lane.b32.xlu0 %v2045, 126
    %v2073 = vpop.permute.xlu0 %2072
    %2074 = vrot.lane.b32.xlu0 %v2044, 126
    %v2075 = vpop.permute.xlu0 %2074
    %v2076 = vsel %vm1484, %v2073, %v2075
    %v2077 = vsel %vm1484, %v2071, %v2073
    %v2078 = vsel %vm1484, %v2075, %v2071
    %v2079 = vld [vmem:[%s7 + $0x130] sm:$0xff]
    %v2080 = vmul.f32 %v2079, %v2077
    %v2081 = vadd.f32 %v2030, %v2080
    %v2082 = vmul.f32 %v2079, %v2076
    %v2083 = vadd.f32 %v2032, %v2082
    %v2084 = vmul.f32 %v2079, %v2078
    %v2085 = vadd.f32 %v2034, %v2084
    %2086 = vrot.lane.b32.xlu0 %v2046, 125
    %v2087 = vpop.permute.xlu0 %2086
    %2088 = vrot.lane.b32.xlu0 %v2045, 125
    %v2089 = vpop.permute.xlu0 %2088
    %2090 = vrot.lane.b32.xlu0 %v2044, 125
    %v2091 = vpop.permute.xlu0 %2090
    %v2092 = vsel %vm1498, %v2089, %v2091
    %v2093 = vsel %vm1498, %v2087, %v2089
    %v2094 = vsel %vm1498, %v2091, %v2087
    %v2095 = vld [vmem:[%s7 + $0x138] sm:$0xff]
    %v2096 = vmul.f32 %v2095, %v2093
    %v2097 = vadd.f32 %v2049, %v2096
    %v2098 = vmul.f32 %v2095, %v2092
    %v2099 = vadd.f32 %v2051, %v2098
    %v2100 = vmul.f32 %v2095, %v2094
    %v2101 = vadd.f32 %v2053, %v2100
    %2102 = vrot.lane.b32.xlu0 %v2046, 124
    %v2103 = vpop.permute.xlu0 %2102
    %2104 = vrot.lane.b32.xlu0 %v2045, 124
    %v2105 = vpop.permute.xlu0 %2104
    %2106 = vrot.lane.b32.xlu0 %v2044, 124
    %v2107 = vpop.permute.xlu0 %2106
    %v2108 = vsel %vm1515, %v2105, %v2107
    %v2109 = vsel %vm1515, %v2103, %v2105
    %v2110 = vsel %vm1515, %v2107, %v2103
    %v2111 = vld [vmem:[%s7 + $0x140] sm:$0xff]
    %v2112 = vmul.f32 %v2111, %v2109
    %v2113 = vadd.f32 %v2065, %v2112
    %v2114 = vmul.f32 %v2111, %v2108
    %v2115 = vadd.f32 %v2067, %v2114
    %v2116 = vmul.f32 %v2111, %v2110
    %v2117 = vadd.f32 %v2069, %v2116
    %2118 = vrot.lane.b32.xlu0 %v2046, 123
    %v2119 = vpop.permute.xlu0 %2118
    %2120 = vrot.lane.b32.xlu0 %v2045, 123
    %v2121 = vpop.permute.xlu0 %2120
    %2122 = vrot.lane.b32.xlu0 %v2044, 123
    %v2123 = vpop.permute.xlu0 %2122
    %v2124 = vsel %vm1532, %v2121, %v2123
    %v2125 = vsel %vm1532, %v2119, %v2121
    %v2126 = vsel %vm1532, %v2123, %v2119
    %v2127 = vld [vmem:[%s7 + $0x148] sm:$0xff]
    %v2128 = vmul.f32 %v2127, %v2125
    %v2129 = vadd.f32 %v2081, %v2128
    %v2130 = vmul.f32 %v2127, %v2124
    %v2131 = vadd.f32 %v2083, %v2130
    %v2132 = vmul.f32 %v2127, %v2126
    %v2133 = vadd.f32 %v2085, %v2132
    %2134 = vrot.lane.b32.xlu0 %v2046, 122
    %v2135 = vpop.permute.xlu0 %2134
    %2136 = vrot.lane.b32.xlu0 %v2045, 122
    %v2137 = vpop.permute.xlu0 %2136
    %2138 = vrot.lane.b32.xlu0 %v2044, 122
    %v2139 = vpop.permute.xlu0 %2138
    %v2140 = vsel %vm1549, %v2137, %v2139
    %v2141 = vsel %vm1549, %v2135, %v2137
    %v2142 = vsel %vm1549, %v2139, %v2135
    %v2143 = vld [vmem:[%s7 + $0x150] sm:$0xff]
    %v2144 = vmul.f32 %v2143, %v2141
    %v2145 = vadd.f32 %v2097, %v2144
    %v2146 = vmul.f32 %v2143, %v2140
    %v2147 = vadd.f32 %v2099, %v2146
    %v2148 = vmul.f32 %v2143, %v2142
    %v2149 = vadd.f32 %v2101, %v2148
    %2150 = vrot.lane.b32.xlu0 %v2046, 121
    %v2151 = vpop.permute.xlu0 %2150
    %2152 = vrot.lane.b32.xlu0 %v2045, 121
    %v2153 = vpop.permute.xlu0 %2152
    %2154 = vrot.lane.b32.xlu0 %v2044, 121
    %v2155 = vpop.permute.xlu0 %2154
    %v2156 = vsel %vm1566, %v2153, %v2155
    %v2157 = vsel %vm1566, %v2151, %v2153
    %v2158 = vsel %vm1566, %v2155, %v2151
    %v2159 = vld [vmem:[%s7 + $0x158] sm:$0xff]
    %v2160 = vmul.f32 %v2159, %v2157
    %v2161 = vadd.f32 %v2113, %v2160
    %v2162 = vmul.f32 %v2159, %v2156
    %v2163 = vadd.f32 %v2115, %v2162
    %v2164 = vmul.f32 %v2159, %v2158
    %v2165 = vadd.f32 %v2117, %v2164
    %2166 = vrot.lane.b32.xlu0 %v2046, 120
    %v2167 = vpop.permute.xlu0 %2166
    %2168 = vrot.lane.b32.xlu0 %v2045, 120
    %v2169 = vpop.permute.xlu0 %2168
    %2170 = vrot.lane.b32.xlu0 %v2044, 120
    %v2171 = vpop.permute.xlu0 %2170
    %v2172 = vsel %vm1583, %v2169, %v2171
    %v2173 = vsel %vm1583, %v2167, %v2169
    %v2174 = vsel %vm1583, %v2171, %v2167
    %v2175 = vld [vmem:[%s7 + $0x160] sm:$0xff]
    %v2176 = vmul.f32 %v2175, %v2173
    %v2177 = vadd.f32 %v2129, %v2176
    %v2178 = vmul.f32 %v2175, %v2172
    %v2179 = vadd.f32 %v2131, %v2178
    %v2180 = vmul.f32 %v2175, %v2174
    %v2181 = vadd.f32 %v2133, %v2180
    %2182 = vrot.lane.b32.xlu0 %v1453, 8
    %v2183 = vpop.permute.xlu0 %2182
    %2184 = vrot.lane.b32.xlu0 %v1454, 8
    %v2185 = vpop.permute.xlu0 %2184
    %2186 = vrot.lane.b32.xlu0 %v1455, 8
    %v2187 = vpop.permute.xlu0 %2186
    %2188 = vrot.lane.b32.xlu0 %v1456, 8
    %v2189 = vpop.permute.xlu0 %2188
    %vm2190 = vcmp.lt.s32.totalorder %v1469, 8
    %v2191 = vsel %vm2190, %v2187, %v2189
    %v2192 = vsel %vm2190, %v2185, %v2187
    %v2193 = vsel %vm2190, %v2183, %v2185
    %v2194 = vld [vmem:[%s7 + $0x168] sm:$0xff]
    %v2195 = vmul.f32 %v2194, %v2193
    %v2196 = vadd.f32 %v2145, %v2195
    %v2197 = vmul.f32 %v2194, %v2192
    %v2198 = vadd.f32 %v2147, %v2197
    %v2199 = vmul.f32 %v2194, %v2191
    %v2200 = vadd.f32 %v2149, %v2199
    %2201 = vrot.lane.b32.xlu0 %v2193, 127
    %v2202 = vpop.permute.xlu0 %2201
    %2203 = vrot.lane.b32.xlu0 %v2192, 127
    %v2204 = vpop.permute.xlu0 %2203
    %2205 = vrot.lane.b32.xlu0 %v2191, 127
    %v2206 = vpop.permute.xlu0 %2205
    %v2207 = vsel %vm1470, %v2204, %v2206
    %v2208 = vsel %vm1470, %v2202, %v2204
    %v2209 = vsel %vm1470, %v2206, %v2202
    %v2210 = vld [vmem:[%s7 + $0x170] sm:$0xff]
    %v2211 = vmul.f32 %v2210, %v2208
    %v2212 = vadd.f32 %v2161, %v2211
    %v2213 = vmul.f32 %v2210, %v2207
    %v2214 = vadd.f32 %v2163, %v2213
    %v2215 = vmul.f32 %v2210, %v2209
    %v2216 = vadd.f32 %v2165, %v2215
    %2217 = vrot.lane.b32.xlu0 %v2193, 126
    %v2218 = vpop.permute.xlu0 %2217
    %2219 = vrot.lane.b32.xlu0 %v2192, 126
    %v2220 = vpop.permute.xlu0 %2219
    %2221 = vrot.lane.b32.xlu0 %v2191, 126
    %v2222 = vpop.permute.xlu0 %2221
    %v2223 = vsel %vm1484, %v2220, %v2222
    %v2224 = vsel %vm1484, %v2218, %v2220
    %v2225 = vsel %vm1484, %v2222, %v2218
    %v2226 = vld [vmem:[%s7 + $0x178] sm:$0xff]
    %v2227 = vmul.f32 %v2226, %v2224
    %v2228 = vadd.f32 %v2177, %v2227
    %v2229 = vmul.f32 %v2226, %v2223
    %v2230 = vadd.f32 %v2179, %v2229
    %v2231 = vmul.f32 %v2226, %v2225
    %v2232 = vadd.f32 %v2181, %v2231
    %2233 = vrot.lane.b32.xlu0 %v2193, 125
    %v2234 = vpop.permute.xlu0 %2233
    %2235 = vrot.lane.b32.xlu0 %v2192, 125
    %v2236 = vpop.permute.xlu0 %2235
    %2237 = vrot.lane.b32.xlu0 %v2191, 125
    %v2238 = vpop.permute.xlu0 %2237
    %v2239 = vsel %vm1498, %v2236, %v2238
    %v2240 = vsel %vm1498, %v2234, %v2236
    %v2241 = vsel %vm1498, %v2238, %v2234
    %v2242 = vld [vmem:[%s7 + $0x180] sm:$0xff]
    %v2243 = vmul.f32 %v2242, %v2240
    %v2244 = vadd.f32 %v2196, %v2243
    %v2245 = vmul.f32 %v2242, %v2239
    %v2246 = vadd.f32 %v2198, %v2245
    %v2247 = vmul.f32 %v2242, %v2241
    %v2248 = vadd.f32 %v2200, %v2247
    %2249 = vrot.lane.b32.xlu0 %v2193, 124
    %v2250 = vpop.permute.xlu0 %2249
    %2251 = vrot.lane.b32.xlu0 %v2192, 124
    %v2252 = vpop.permute.xlu0 %2251
    %2253 = vrot.lane.b32.xlu0 %v2191, 124
    %v2254 = vpop.permute.xlu0 %2253
    %v2255 = vsel %vm1515, %v2252, %v2254
    %v2256 = vsel %vm1515, %v2250, %v2252
    %v2257 = vsel %vm1515, %v2254, %v2250
    %v2258 = vld [vmem:[%s7 + $0x188] sm:$0xff]
    %v2259 = vmul.f32 %v2258, %v2256
    %v2260 = vadd.f32 %v2212, %v2259
    %v2261 = vmul.f32 %v2258, %v2255
    %v2262 = vadd.f32 %v2214, %v2261
    %v2263 = vmul.f32 %v2258, %v2257
    %v2264 = vadd.f32 %v2216, %v2263
    %2265 = vrot.lane.b32.xlu0 %v2193, 123
    %v2266 = vpop.permute.xlu0 %2265
    %2267 = vrot.lane.b32.xlu0 %v2192, 123
    %v2268 = vpop.permute.xlu0 %2267
    %2269 = vrot.lane.b32.xlu0 %v2191, 123
    %v2270 = vpop.permute.xlu0 %2269
    %v2271 = vsel %vm1532, %v2268, %v2270
    %v2272 = vsel %vm1532, %v2266, %v2268
    %v2273 = vsel %vm1532, %v2270, %v2266
    %v2274 = vld [vmem:[%s7 + $0x190] sm:$0xff]
    %v2275 = vmul.f32 %v2274, %v2272
    %v2276 = vadd.f32 %v2228, %v2275
    %v2277 = vmul.f32 %v2274, %v2271
    %v2278 = vadd.f32 %v2230, %v2277
    %v2279 = vmul.f32 %v2274, %v2273
    %v2280 = vadd.f32 %v2232, %v2279
    %2281 = vrot.lane.b32.xlu0 %v2193, 122
    %v2282 = vpop.permute.xlu0 %2281
    %2283 = vrot.lane.b32.xlu0 %v2192, 122
    %v2284 = vpop.permute.xlu0 %2283
    %2285 = vrot.lane.b32.xlu0 %v2191, 122
    %v2286 = vpop.permute.xlu0 %2285
    %v2287 = vsel %vm1549, %v2284, %v2286
    %v2288 = vsel %vm1549, %v2282, %v2284
    %v2289 = vsel %vm1549, %v2286, %v2282
    %v2290 = vld [vmem:[%s7 + $0x198] sm:$0xff]
    %v2291 = vmul.f32 %v2290, %v2288
    %v2292 = vadd.f32 %v2244, %v2291
    %v2293 = vmul.f32 %v2290, %v2287
    %v2294 = vadd.f32 %v2246, %v2293
    %v2295 = vmul.f32 %v2290, %v2289
    %v2296 = vadd.f32 %v2248, %v2295
    %2297 = vrot.lane.b32.xlu0 %v2193, 121
    %v2298 = vpop.permute.xlu0 %2297
    %2299 = vrot.lane.b32.xlu0 %v2192, 121
    %v2300 = vpop.permute.xlu0 %2299
    %2301 = vrot.lane.b32.xlu0 %v2191, 121
    %v2302 = vpop.permute.xlu0 %2301
    %v2303 = vsel %vm1566, %v2300, %v2302
    %v2304 = vsel %vm1566, %v2298, %v2300
    %v2305 = vsel %vm1566, %v2302, %v2298
    %v2306 = vld [vmem:[%s7 + $0x1a0] sm:$0xff]
    %v2307 = vmul.f32 %v2306, %v2304
    %v2308 = vadd.f32 %v2260, %v2307
    %v2309 = vmul.f32 %v2306, %v2303
    %v2310 = vadd.f32 %v2262, %v2309
    %v2311 = vmul.f32 %v2306, %v2305
    %v2312 = vadd.f32 %v2264, %v2311
    %2313 = vrot.lane.b32.xlu0 %v2193, 120
    %v2314 = vpop.permute.xlu0 %2313
    %2315 = vrot.lane.b32.xlu0 %v2192, 120
    %v2316 = vpop.permute.xlu0 %2315
    %2317 = vrot.lane.b32.xlu0 %v2191, 120
    %v2318 = vpop.permute.xlu0 %2317
    %v2319 = vsel %vm1583, %v2316, %v2318
    %v2320 = vsel %vm1583, %v2314, %v2316
    %v2321 = vsel %vm1583, %v2318, %v2314
    %v2322 = vld [vmem:[%s7 + $0x1a8] sm:$0xff]
    %v2323 = vmul.f32 %v2322, %v2320
    %v2324 = vadd.f32 %v2276, %v2323
    %v2325 = vmul.f32 %v2322, %v2319
    %v2326 = vadd.f32 %v2278, %v2325
    %v2327 = vmul.f32 %v2322, %v2321
    %v2328 = vadd.f32 %v2280, %v2327
    %2329 = vrot.lane.b32.xlu0 %v1454, 112
    %v2330 = vpop.permute.xlu0 %2329
    %2331 = vrot.lane.b32.xlu0 %v1455, 112
    %v2332 = vpop.permute.xlu0 %2331
    %2333 = vrot.lane.b32.xlu0 %v1456, 112
    %v2334 = vpop.permute.xlu0 %2333
    %2335 = vrot.lane.b32.xlu0 %v1457, 112
    %v2336 = vpop.permute.xlu0 %2335
    %vm2337 = vcmp.lt.s32.totalorder %v1469, 112
    %v2338 = vsel %vm2337, %v2334, %v2336
    %v2339 = vsel %vm2337, %v2332, %v2334
    %v2340 = vsel %vm2337, %v2330, %v2332
    %v2341 = vld [vmem:[%s7 + $0x1b0] sm:$0xff]
    %v2342 = vmul.f32 %v2341, %v2340
    %v2343 = vadd.f32 %v2292, %v2342
    %v2344 = vmul.f32 %v2341, %v2339
    %v2345 = vadd.f32 %v2294, %v2344
    %v2346 = vmul.f32 %v2341, %v2338
    %v2347 = vadd.f32 %v2296, %v2346
    %2348 = vrot.lane.b32.xlu0 %v2340, 127
    %v2349 = vpop.permute.xlu0 %2348
    %2350 = vrot.lane.b32.xlu0 %v2339, 127
    %v2351 = vpop.permute.xlu0 %2350
    %2352 = vrot.lane.b32.xlu0 %v2338, 127
    %v2353 = vpop.permute.xlu0 %2352
    %v2354 = vsel %vm1470, %v2351, %v2353
    %v2355 = vsel %vm1470, %v2349, %v2351
    %v2356 = vsel %vm1470, %v2353, %v2349
    %v2357 = vld [vmem:[%s7 + $0x1b8] sm:$0xff]
    %v2358 = vmul.f32 %v2357, %v2355
    %v2359 = vadd.f32 %v2308, %v2358
    %v2360 = vmul.f32 %v2357, %v2354
    %v2361 = vadd.f32 %v2310, %v2360
    %v2362 = vmul.f32 %v2357, %v2356
    %v2363 = vadd.f32 %v2312, %v2362
    %2364 = vrot.lane.b32.xlu0 %v2340, 126
    %v2365 = vpop.permute.xlu0 %2364
    %2366 = vrot.lane.b32.xlu0 %v2339, 126
    %v2367 = vpop.permute.xlu0 %2366
    %2368 = vrot.lane.b32.xlu0 %v2338, 126
    %v2369 = vpop.permute.xlu0 %2368
    %v2370 = vsel %vm1484, %v2367, %v2369
    %v2371 = vsel %vm1484, %v2365, %v2367
    %v2372 = vsel %vm1484, %v2369, %v2365
    %v2373 = vld [vmem:[%s7 + $0x1c0] sm:$0xff]
    %v2374 = vmul.f32 %v2373, %v2371
    %v2375 = vadd.f32 %v2324, %v2374
    %v2376 = vmul.f32 %v2373, %v2370
    %v2377 = vadd.f32 %v2326, %v2376
    %v2378 = vmul.f32 %v2373, %v2372
    %v2379 = vadd.f32 %v2328, %v2378
    %2380 = vrot.lane.b32.xlu0 %v2340, 125
    %v2381 = vpop.permute.xlu0 %2380
    %2382 = vrot.lane.b32.xlu0 %v2339, 125
    %v2383 = vpop.permute.xlu0 %2382
    %2384 = vrot.lane.b32.xlu0 %v2338, 125
    %v2385 = vpop.permute.xlu0 %2384
    %v2386 = vsel %vm1498, %v2383, %v2385
    %v2387 = vsel %vm1498, %v2381, %v2383
    %v2388 = vsel %vm1498, %v2385, %v2381
    %v2389 = vld [vmem:[%s7 + $0x1c8] sm:$0xff]
    %v2390 = vmul.f32 %v2389, %v2387
    %v2391 = vadd.f32 %v2343, %v2390
    %v2392 = vmul.f32 %v2389, %v2386
    %v2393 = vadd.f32 %v2345, %v2392
    %v2394 = vmul.f32 %v2389, %v2388
    %v2395 = vadd.f32 %v2347, %v2394
    %2396 = vrot.lane.b32.xlu0 %v2340, 124
    %v2397 = vpop.permute.xlu0 %2396
    %2398 = vrot.lane.b32.xlu0 %v2339, 124
    %v2399 = vpop.permute.xlu0 %2398
    %2400 = vrot.lane.b32.xlu0 %v2338, 124
    %v2401 = vpop.permute.xlu0 %2400
    %v2402 = vsel %vm1515, %v2399, %v2401
    %v2403 = vsel %vm1515, %v2397, %v2399
    %v2404 = vsel %vm1515, %v2401, %v2397
    %v2405 = vld [vmem:[%s7 + $0x1d0] sm:$0xff]
    %v2406 = vmul.f32 %v2405, %v2403
    %v2407 = vadd.f32 %v2359, %v2406
    %v2408 = vmul.f32 %v2405, %v2402
    %v2409 = vadd.f32 %v2361, %v2408
    %v2410 = vmul.f32 %v2405, %v2404
    %v2411 = vadd.f32 %v2363, %v2410
    %2412 = vrot.lane.b32.xlu0 %v2340, 123
    %v2413 = vpop.permute.xlu0 %2412
    %2414 = vrot.lane.b32.xlu0 %v2339, 123
    %v2415 = vpop.permute.xlu0 %2414
    %2416 = vrot.lane.b32.xlu0 %v2338, 123
    %v2417 = vpop.permute.xlu0 %2416
    %v2418 = vsel %vm1532, %v2415, %v2417
    %v2419 = vsel %vm1532, %v2413, %v2415
    %v2420 = vsel %vm1532, %v2417, %v2413
    %v2421 = vld [vmem:[%s7 + $0x1d8] sm:$0xff]
    %v2422 = vmul.f32 %v2421, %v2419
    %v2423 = vadd.f32 %v2375, %v2422
    %v2424 = vmul.f32 %v2421, %v2418
    %v2425 = vadd.f32 %v2377, %v2424
    %v2426 = vmul.f32 %v2421, %v2420
    %v2427 = vadd.f32 %v2379, %v2426
    %2428 = vrot.lane.b32.xlu0 %v2340, 122
    %v2429 = vpop.permute.xlu0 %2428
    %2430 = vrot.lane.b32.xlu0 %v2339, 122
    %v2431 = vpop.permute.xlu0 %2430
    %2432 = vrot.lane.b32.xlu0 %v2338, 122
    %v2433 = vpop.permute.xlu0 %2432
    %v2434 = vsel %vm1549, %v2431, %v2433
    %v2435 = vsel %vm1549, %v2429, %v2431
    %v2436 = vsel %vm1549, %v2433, %v2429
    %v2437 = vld [vmem:[%s7 + $0x1e0] sm:$0xff]
    %v2438 = vmul.f32 %v2437, %v2435
    %v2439 = vadd.f32 %v2391, %v2438
    %v2440 = vmul.f32 %v2437, %v2434
    %v2441 = vadd.f32 %v2393, %v2440
    %v2442 = vmul.f32 %v2437, %v2436
    %v2443 = vadd.f32 %v2395, %v2442
    %2444 = vrot.lane.b32.xlu0 %v2340, 121
    %v2445 = vpop.permute.xlu0 %2444
    %2446 = vrot.lane.b32.xlu0 %v2339, 121
    %v2447 = vpop.permute.xlu0 %2446
    %2448 = vrot.lane.b32.xlu0 %v2338, 121
    %v2449 = vpop.permute.xlu0 %2448
    %v2450 = vsel %vm1566, %v2447, %v2449
    %v2451 = vsel %vm1566, %v2445, %v2447
    %v2452 = vsel %vm1566, %v2449, %v2445
    %v2453 = vld [vmem:[%s7 + $0x1e8] sm:$0xff]
    %v2454 = vmul.f32 %v2453, %v2451
    %v2455 = vadd.f32 %v2407, %v2454
    %v2456 = vmul.f32 %v2453, %v2450
    %v2457 = vadd.f32 %v2409, %v2456
    %v2458 = vmul.f32 %v2453, %v2452
    %v2459 = vadd.f32 %v2411, %v2458
    %2460 = vrot.lane.b32.xlu0 %v2340, 120
    %v2461 = vpop.permute.xlu0 %2460
    %2462 = vrot.lane.b32.xlu0 %v2339, 120
    %v2463 = vpop.permute.xlu0 %2462
    %2464 = vrot.lane.b32.xlu0 %v2338, 120
    %v2465 = vpop.permute.xlu0 %2464
    %v2466 = vsel %vm1583, %v2463, %v2465
    %v2467 = vsel %vm1583, %v2461, %v2463
    %v2468 = vsel %vm1583, %v2465, %v2461
    %v2469 = vld [vmem:[%s7 + $0x1f0] sm:$0xff]
    %v2470 = vmul.f32 %v2469, %v2467
    %v2471 = vadd.f32 %v2423, %v2470
    %v2472 = vmul.f32 %v2469, %v2466
    %v2473 = vadd.f32 %v2425, %v2472
    %v2474 = vmul.f32 %v2469, %v2468
    %v2475 = vadd.f32 %v2427, %v2474
    %2476 = vrot.lane.b32.xlu0 %v1454, 88
    %v2477 = vpop.permute.xlu0 %2476
    %2478 = vrot.lane.b32.xlu0 %v1455, 88
    %v2479 = vpop.permute.xlu0 %2478
    %2480 = vrot.lane.b32.xlu0 %v1456, 88
    %v2481 = vpop.permute.xlu0 %2480
    %2482 = vrot.lane.b32.xlu0 %v1457, 88
    %v2483 = vpop.permute.xlu0 %2482
    %vm2484 = vcmp.lt.s32.totalorder %v1469, 88
    %v2485 = vsel %vm2484, %v2481, %v2483
    %v2486 = vsel %vm2484, %v2479, %v2481
    %v2487 = vsel %vm2484, %v2477, %v2479
    %v2488 = vld [vmem:[%s7 + $0x1f8] sm:$0xff]
    %v2489 = vmul.f32 %v2488, %v2487
    %v2490 = vadd.f32 %v2439, %v2489
    %v2491 = vmul.f32 %v2488, %v2486
    %v2492 = vadd.f32 %v2441, %v2491
    %v2493 = vmul.f32 %v2488, %v2485
    %v2494 = vadd.f32 %v2443, %v2493
    %2495 = vrot.lane.b32.xlu0 %v2487, 127
    %v2496 = vpop.permute.xlu0 %2495
    %2497 = vrot.lane.b32.xlu0 %v2486, 127
    %v2498 = vpop.permute.xlu0 %2497
    %2499 = vrot.lane.b32.xlu0 %v2485, 127
    %v2500 = vpop.permute.xlu0 %2499
    %v2501 = vsel %vm1470, %v2498, %v2500
    %v2502 = vsel %vm1470, %v2496, %v2498
    %v2503 = vsel %vm1470, %v2500, %v2496
    %v2504 = vld [vmem:[%s7 + $0x200] sm:$0xff]
    %v2505 = vmul.f32 %v2504, %v2502
    %v2506 = vadd.f32 %v2455, %v2505
    %v2507 = vmul.f32 %v2504, %v2501
    %v2508 = vadd.f32 %v2457, %v2507
    %v2509 = vmul.f32 %v2504, %v2503
    %v2510 = vadd.f32 %v2459, %v2509
    %2511 = vrot.lane.b32.xlu0 %v2487, 126
    %v2512 = vpop.permute.xlu0 %2511
    %2513 = vrot.lane.b32.xlu0 %v2486, 126
    %v2514 = vpop.permute.xlu0 %2513
    %2515 = vrot.lane.b32.xlu0 %v2485, 126
    %v2516 = vpop.permute.xlu0 %2515
    %v2517 = vsel %vm1484, %v2514, %v2516
    %v2518 = vsel %vm1484, %v2512, %v2514
    %v2519 = vsel %vm1484, %v2516, %v2512
    %v2520 = vld [vmem:[%s7 + $0x208] sm:$0xff]
    %v2521 = vmul.f32 %v2520, %v2518
    %v2522 = vadd.f32 %v2471, %v2521
    %v2523 = vmul.f32 %v2520, %v2517
    %v2524 = vadd.f32 %v2473, %v2523
    %v2525 = vmul.f32 %v2520, %v2519
    %v2526 = vadd.f32 %v2475, %v2525
    %2527 = vrot.lane.b32.xlu0 %v2487, 125
    %v2528 = vpop.permute.xlu0 %2527
    %2529 = vrot.lane.b32.xlu0 %v2486, 125
    %v2530 = vpop.permute.xlu0 %2529
    %2531 = vrot.lane.b32.xlu0 %v2485, 125
    %v2532 = vpop.permute.xlu0 %2531
    %v2533 = vsel %vm1498, %v2530, %v2532
    %v2534 = vsel %vm1498, %v2528, %v2530
    %v2535 = vsel %vm1498, %v2532, %v2528
    %v2536 = vld [vmem:[%s7 + $0x210] sm:$0xff]
    %v2537 = vmul.f32 %v2536, %v2534
    %v2538 = vadd.f32 %v2490, %v2537
    %v2539 = vmul.f32 %v2536, %v2533
    %v2540 = vadd.f32 %v2492, %v2539
    %v2541 = vmul.f32 %v2536, %v2535
    %v2542 = vadd.f32 %v2494, %v2541
    %2543 = vrot.lane.b32.xlu0 %v2487, 124
    %v2544 = vpop.permute.xlu0 %2543
    %2545 = vrot.lane.b32.xlu0 %v2486, 124
    %v2546 = vpop.permute.xlu0 %2545
    %2547 = vrot.lane.b32.xlu0 %v2485, 124
    %v2548 = vpop.permute.xlu0 %2547
    %v2549 = vsel %vm1515, %v2546, %v2548
    %v2550 = vsel %vm1515, %v2544, %v2546
    %v2551 = vsel %vm1515, %v2548, %v2544
    %v2552 = vld [vmem:[%s7 + $0x218] sm:$0xff]
    %v2553 = vmul.f32 %v2552, %v2550
    %v2554 = vadd.f32 %v2506, %v2553
    %v2555 = vmul.f32 %v2552, %v2549
    %v2556 = vadd.f32 %v2508, %v2555
    %v2557 = vmul.f32 %v2552, %v2551
    %v2558 = vadd.f32 %v2510, %v2557
    %2559 = vrot.lane.b32.xlu0 %v2487, 123
    %v2560 = vpop.permute.xlu0 %2559
    %2561 = vrot.lane.b32.xlu0 %v2486, 123
    %v2562 = vpop.permute.xlu0 %2561
    %2563 = vrot.lane.b32.xlu0 %v2485, 123
    %v2564 = vpop.permute.xlu0 %2563
    %v2565 = vsel %vm1532, %v2562, %v2564
    %v2566 = vsel %vm1532, %v2560, %v2562
    %v2567 = vsel %vm1532, %v2564, %v2560
    %v2568 = vld [vmem:[%s7 + $0x220] sm:$0xff]
    %v2569 = vmul.f32 %v2568, %v2566
    %v2570 = vadd.f32 %v2522, %v2569
    %v2571 = vmul.f32 %v2568, %v2565
    %v2572 = vadd.f32 %v2524, %v2571
    %v2573 = vmul.f32 %v2568, %v2567
    %v2574 = vadd.f32 %v2526, %v2573
    %2575 = vrot.lane.b32.xlu0 %v2487, 122
    %v2576 = vpop.permute.xlu0 %2575
    %2577 = vrot.lane.b32.xlu0 %v2486, 122
    %v2578 = vpop.permute.xlu0 %2577
    %2579 = vrot.lane.b32.xlu0 %v2485, 122
    %v2580 = vpop.permute.xlu0 %2579
    %v2581 = vsel %vm1549, %v2578, %v2580
    %v2582 = vsel %vm1549, %v2576, %v2578
    %v2583 = vsel %vm1549, %v2580, %v2576
    %v2584 = vld [vmem:[%s7 + $0x228] sm:$0xff]
    %v2585 = vmul.f32 %v2584, %v2582
    %v2586 = vadd.f32 %v2538, %v2585
    %v2587 = vmul.f32 %v2584, %v2581
    %v2588 = vadd.f32 %v2540, %v2587
    %v2589 = vmul.f32 %v2584, %v2583
    %v2590 = vadd.f32 %v2542, %v2589
    %2591 = vrot.lane.b32.xlu0 %v2487, 121
    %v2592 = vpop.permute.xlu0 %2591
    %2593 = vrot.lane.b32.xlu0 %v2486, 121
    %v2594 = vpop.permute.xlu0 %2593
    %2595 = vrot.lane.b32.xlu0 %v2485, 121
    %v2596 = vpop.permute.xlu0 %2595
    %v2597 = vsel %vm1566, %v2594, %v2596
    %v2598 = vsel %vm1566, %v2592, %v2594
    %v2599 = vsel %vm1566, %v2596, %v2592
    %v2600 = vld [vmem:[%s7 + $0x230] sm:$0xff]
    %v2601 = vmul.f32 %v2600, %v2598
    %v2602 = vadd.f32 %v2554, %v2601
    %v2603 = vmul.f32 %v2600, %v2597
    %v2604 = vadd.f32 %v2556, %v2603
    %v2605 = vmul.f32 %v2600, %v2599
    %v2606 = vadd.f32 %v2558, %v2605
    %2607 = vrot.lane.b32.xlu0 %v2487, 120
    %v2608 = vpop.permute.xlu0 %2607
    %2609 = vrot.lane.b32.xlu0 %v2486, 120
    %v2610 = vpop.permute.xlu0 %2609
    %2611 = vrot.lane.b32.xlu0 %v2485, 120
    %v2612 = vpop.permute.xlu0 %2611
    %v2613 = vsel %vm1583, %v2610, %v2612
    %v2614 = vsel %vm1583, %v2608, %v2610
    %v2615 = vsel %vm1583, %v2612, %v2608
    %v2616 = vld [vmem:[%s7 + $0x238] sm:$0xff]
    %v2617 = vmul.f32 %v2616, %v2614
    %v2618 = vadd.f32 %v2570, %v2617
    %v2619 = vmul.f32 %v2616, %v2613
    %v2620 = vadd.f32 %v2572, %v2619
    %v2621 = vmul.f32 %v2616, %v2615
    %v2622 = vadd.f32 %v2574, %v2621
    %2623 = vrot.lane.b32.xlu0 %v1454, 64
    %v2624 = vpop.permute.xlu0 %2623
    %2625 = vrot.lane.b32.xlu0 %v1455, 64
    %v2626 = vpop.permute.xlu0 %2625
    %2627 = vrot.lane.b32.xlu0 %v1456, 64
    %v2628 = vpop.permute.xlu0 %2627
    %2629 = vrot.lane.b32.xlu0 %v1457, 64
    %v2630 = vpop.permute.xlu0 %2629
    %vm2631 = vcmp.lt.s32.totalorder %v1469, 64
    %v2632 = vsel %vm2631, %v2628, %v2630
    %v2633 = vsel %vm2631, %v2626, %v2628
    %v2634 = vsel %vm2631, %v2624, %v2626
    %v2635 = vld [vmem:[%s7 + $0x240] sm:$0xff]
    %v2636 = vmul.f32 %v2635, %v2634
    %v2637 = vadd.f32 %v2586, %v2636
    %v2638 = vmul.f32 %v2635, %v2633
    %v2639 = vadd.f32 %v2588, %v2638
    %v2640 = vmul.f32 %v2635, %v2632
    %v2641 = vadd.f32 %v2590, %v2640
    %2642 = vrot.lane.b32.xlu0 %v2634, 127
    %v2643 = vpop.permute.xlu0 %2642
    %2644 = vrot.lane.b32.xlu0 %v2633, 127
    %v2645 = vpop.permute.xlu0 %2644
    %2646 = vrot.lane.b32.xlu0 %v2632, 127
    %v2647 = vpop.permute.xlu0 %2646
    %v2648 = vsel %vm1470, %v2645, %v2647
    %v2649 = vsel %vm1470, %v2643, %v2645
    %v2650 = vsel %vm1470, %v2647, %v2643
    %v2651 = vld [vmem:[%s7 + $0x248] sm:$0xff]
    %v2652 = vmul.f32 %v2651, %v2649
    %v2653 = vadd.f32 %v2602, %v2652
    %v2654 = vmul.f32 %v2651, %v2648
    %v2655 = vadd.f32 %v2604, %v2654
    %v2656 = vmul.f32 %v2651, %v2650
    %v2657 = vadd.f32 %v2606, %v2656
    %2658 = vrot.lane.b32.xlu0 %v2634, 126
    %v2659 = vpop.permute.xlu0 %2658
    %2660 = vrot.lane.b32.xlu0 %v2633, 126
    %v2661 = vpop.permute.xlu0 %2660
    %2662 = vrot.lane.b32.xlu0 %v2632, 126
    %v2663 = vpop.permute.xlu0 %2662
    %v2664 = vsel %vm1484, %v2661, %v2663
    %v2665 = vsel %vm1484, %v2659, %v2661
    %v2666 = vsel %vm1484, %v2663, %v2659
    %v2667 = vld [vmem:[%s7 + $0x250] sm:$0xff]
    %v2668 = vmul.f32 %v2667, %v2665
    %v2669 = vadd.f32 %v2618, %v2668
    %v2670 = vmul.f32 %v2667, %v2664
    %v2671 = vadd.f32 %v2620, %v2670
    %v2672 = vmul.f32 %v2667, %v2666
    %v2673 = vadd.f32 %v2622, %v2672
    %2674 = vrot.lane.b32.xlu0 %v2634, 125
    %v2675 = vpop.permute.xlu0 %2674
    %2676 = vrot.lane.b32.xlu0 %v2633, 125
    %v2677 = vpop.permute.xlu0 %2676
    %2678 = vrot.lane.b32.xlu0 %v2632, 125
    %v2679 = vpop.permute.xlu0 %2678
    %v2680 = vsel %vm1498, %v2677, %v2679
    %v2681 = vsel %vm1498, %v2675, %v2677
    %v2682 = vsel %vm1498, %v2679, %v2675
    %v2683 = vld [vmem:[%s7 + $0x258] sm:$0xff]
    %v2684 = vmul.f32 %v2683, %v2681
    %v2685 = vadd.f32 %v2637, %v2684
    %v2686 = vmul.f32 %v2683, %v2680
    %v2687 = vadd.f32 %v2639, %v2686
    %v2688 = vmul.f32 %v2683, %v2682
    %v2689 = vadd.f32 %v2641, %v2688
    %2690 = vrot.lane.b32.xlu0 %v2634, 124
    %v2691 = vpop.permute.xlu0 %2690
    %2692 = vrot.lane.b32.xlu0 %v2633, 124
    %v2693 = vpop.permute.xlu0 %2692
    %2694 = vrot.lane.b32.xlu0 %v2632, 124
    %v2695 = vpop.permute.xlu0 %2694
    %v2696 = vsel %vm1515, %v2693, %v2695
    %v2697 = vsel %vm1515, %v2691, %v2693
    %v2698 = vsel %vm1515, %v2695, %v2691
    %v2699 = vld [vmem:[%s7 + $0x260] sm:$0xff]
    %v2700 = vmul.f32 %v2699, %v2697
    %v2701 = vadd.f32 %v2653, %v2700
    %v2702 = vmul.f32 %v2699, %v2696
    %v2703 = vadd.f32 %v2655, %v2702
    %v2704 = vmul.f32 %v2699, %v2698
    %v2705 = vadd.f32 %v2657, %v2704
    %2706 = vrot.lane.b32.xlu0 %v2634, 123
    %v2707 = vpop.permute.xlu0 %2706
    %2708 = vrot.lane.b32.xlu0 %v2633, 123
    %v2709 = vpop.permute.xlu0 %2708
    %2710 = vrot.lane.b32.xlu0 %v2632, 123
    %v2711 = vpop.permute.xlu0 %2710
    %v2712 = vsel %vm1532, %v2709, %v2711
    %v2713 = vsel %vm1532, %v2707, %v2709
    %v2714 = vsel %vm1532, %v2711, %v2707
    %v2715 = vld [vmem:[%s7 + $0x268] sm:$0xff]
    %v2716 = vmul.f32 %v2715, %v2713
    %v2717 = vadd.f32 %v2669, %v2716
    %v2718 = vmul.f32 %v2715, %v2712
    %v2719 = vadd.f32 %v2671, %v2718
    %v2720 = vmul.f32 %v2715, %v2714
    %v2721 = vadd.f32 %v2673, %v2720
    %2722 = vrot.lane.b32.xlu0 %v2634, 122
    %v2723 = vpop.permute.xlu0 %2722
    %2724 = vrot.lane.b32.xlu0 %v2633, 122
    %v2725 = vpop.permute.xlu0 %2724
    %2726 = vrot.lane.b32.xlu0 %v2632, 122
    %v2727 = vpop.permute.xlu0 %2726
    %v2728 = vsel %vm1549, %v2725, %v2727
    %v2729 = vsel %vm1549, %v2723, %v2725
    %v2730 = vsel %vm1549, %v2727, %v2723
    %v2731 = vld [vmem:[%s7 + $0x270] sm:$0xff]
    %v2732 = vmul.f32 %v2731, %v2729
    %v2733 = vadd.f32 %v2685, %v2732
    %v2734 = vmul.f32 %v2731, %v2728
    %v2735 = vadd.f32 %v2687, %v2734
    %v2736 = vmul.f32 %v2731, %v2730
    %v2737 = vadd.f32 %v2689, %v2736
    %2738 = vrot.lane.b32.xlu0 %v2634, 121
    %v2739 = vpop.permute.xlu0 %2738
    %2740 = vrot.lane.b32.xlu0 %v2633, 121
    %v2741 = vpop.permute.xlu0 %2740
    %2742 = vrot.lane.b32.xlu0 %v2632, 121
    %v2743 = vpop.permute.xlu0 %2742
    %v2744 = vsel %vm1566, %v2741, %v2743
    %v2745 = vsel %vm1566, %v2739, %v2741
    %v2746 = vsel %vm1566, %v2743, %v2739
    %v2747 = vld [vmem:[%s7 + $0x278] sm:$0xff]
    %v2748 = vmul.f32 %v2747, %v2745
    %v2749 = vadd.f32 %v2701, %v2748
    %v2750 = vmul.f32 %v2747, %v2744
    %v2751 = vadd.f32 %v2703, %v2750
    %v2752 = vmul.f32 %v2747, %v2746
    %v2753 = vadd.f32 %v2705, %v2752
    %2754 = vrot.lane.b32.xlu0 %v2634, 120
    %v2755 = vpop.permute.xlu0 %2754
    %2756 = vrot.lane.b32.xlu0 %v2633, 120
    %v2757 = vpop.permute.xlu0 %2756
    %2758 = vrot.lane.b32.xlu0 %v2632, 120
    %v2759 = vpop.permute.xlu0 %2758
    %v2760 = vsel %vm1583, %v2757, %v2759
    %v2761 = vsel %vm1583, %v2755, %v2757
    %v2762 = vsel %vm1583, %v2759, %v2755
    %v2763 = vld [vmem:[%s7 + $0x280] sm:$0xff]
    %v2764 = vmul.f32 %v2763, %v2761
    %v2765 = vadd.f32 %v2717, %v2764
    %v2766 = vmul.f32 %v2763, %v2760
    %v2767 = vadd.f32 %v2719, %v2766
    %v2768 = vmul.f32 %v2763, %v2762
    %v2769 = vadd.f32 %v2721, %v2768
    %v2770 = vadd.f32 %v2733, %v2749
    %v2771 = vadd.f32 %v2770, %v2765
    %v2772 = vadd.f32 %v2735, %v2751
    %v2773 = vadd.f32 %v2772, %v2767
    %v2774 = vadd.f32 %v2737, %v2753
    %v2775 = vadd.f32 %v2774, %v2769
    %v2776 = vld [vmem:[%s6] sm:$0x7]
    %v2778 = vlaneseq
    %v2779 = vshrl.u32 %v2778, 7
    %v2780 = vsub.s32 0, %v2779
    %v2781 = vrot.slane %v2776, %v2780
    %v2782 = vlaneseq
    %v2783 = vshrl.u32 %v2782, 7
    %v2784 = vsub.s32 1, %v2783
    %v2785 = vrot.slane %v2776, %v2784
    %v2786 = vlaneseq
    %v2787 = vshrl.u32 %v2786, 7
    %v2788 = vsub.s32 2, %v2787
    %v2789 = vrot.slane %v2776, %v2788
    %v2793 = vmul.f32 %v2771, %v2781
    %v2794 = vmul.f32 %v2773, %v2785
    %v2795 = vmul.f32 %v2775, %v2789
    %v2796 = vadd.f32 %v2793, %v2794
    %v2797 = vadd.f32 %v2796, %v2795
    %2798 = vadd.xlane.f32.xlu0 %v2797
    %v2799 = vpop.xlane.xlu0 %2798
    %v2800 = vrot.slane %v2799, 4
    %v2801 = vadd.f32 %v2799, %v2800
    %v2802 = vmul.f32 %v2793, %v2793
    %v2803 = vmul.f32 %v2794, %v2794
    %v2804 = vmul.f32 %v2795, %v2795
    %v2805 = vadd.f32 %v2802, %v2803
    %v2806 = vadd.f32 %v2805, %v2804
    %2807 = vadd.xlane.f32.xlu0 %v2806
    %v2808 = vpop.xlane.xlu0 %2807
    %v2809 = vrot.slane %v2808, 4
    %v2810 = vadd.f32 %v2808, %v2809
    %v2811 = vmul.f32 %v2801, 0.001953125
    %v2812 = vmul.f32 %v2810, 0.001953125
    %v2813 = vmul.f32 %v2811, %v2811
    %v2814 = vsub.f32 %v2812, %v2813
    %v2815 = vadd.f32 %v2814, 1e-05
    %v2816 = vrsqrt.pop %v2815
    %2818 = vrot.lane.b32.xlu0 %v2816, 4
    %v2819 = vpop.permute.xlu0 %2818
    %v2821 = vmul.f32 %v46, %v2819
    %2823 = vrot.lane.b32.xlu0 %v2821, 124
    %v2824 = vpop.permute.xlu0 %2823
    %v2826 = vmul.f32 %v2811, %v2824
    %2828 = vrot.lane.b32.xlu0 %v2826, 5
    %v2829 = vpop.permute.xlu0 %2828
    %v2831 = vsub.f32 %v46, %v2829
    %2832 = vset.pattern.permute.xlu0 4
    %2833 = vperm.xlu0 %2832, %v2821
    %v2834 = vpop.permute.xlu0 %2833
    %v2836 = vmul.f32 %v2771, %v2834
    %v2837 = vmul.f32 %v2773, %v2834
    %v2838 = vmul.f32 %v2775, %v2834
    %2840 = vset.pattern.permute.xlu0 5
    %2841 = vperm.xlu0 %2840, %v2831
    %v2842 = vpop.permute.xlu0 %2841
    %v2844 = vadd.f32 %v2836, %v2842
    %v2845 = vadd.f32 %v2837, %v2842
    %v2846 = vadd.f32 %v2838, %v2842
    %v2847 = vld [vmem:[%s1] sm:$0xff]
    %v2848 = vld [vmem:[%s1 + $0x8] sm:$0xff]
    %v2849 = vld [vmem:[%s1 + $0x10] sm:$0xff]
    %v2850 = vadd.f32 %v2844, %v2847
    %v2851 = vadd.f32 %v2845, %v2848
    %v2852 = vadd.f32 %v2846, %v2849
    %v2853 = vmul.f32 %v2850, 0.5
    %v2854 = vmul.f32 %v2851, 0.5
    %v2855 = vmul.f32 %v2852, 0.5
    %v2856 = vmul.f32 %v2850, %v2850
    %v2857 = vmul.f32 %v2851, %v2851
    %v2858 = vmul.f32 %v2852, %v2852
    %v2859 = vmul.f32 %v2856, %v2850
    %v2860 = vmul.f32 %v2857, %v2851
    %v2861 = vmul.f32 %v2858, %v2852
    %v2862 = vmul.f32 %v2859, 0.044715
    %v2863 = vmul.f32 %v2860, 0.044715
    %v2864 = vmul.f32 %v2861, 0.044715
    %v2865 = vadd.f32 %v2850, %v2862
    %v2866 = vadd.f32 %v2851, %v2863
    %v2867 = vadd.f32 %v2852, %v2864
    %v2868 = vmul.f32 %v2865, 0.7978846
    %v2869 = vmul.f32 %v2866, 0.7978846
    %v2870 = vmul.f32 %v2867, 0.7978846
    %v2871 = vtanh.pop %v2868
    %v2872 = vtanh.pop %v2869
    %v2873 = vtanh.pop %v2870
    %v2874 = vadd.f32 %v2871, 1.0
    %v2875 = vadd.f32 %v2872, 1.0
    %v2876 = vadd.f32 %v2873, 1.0
    %v2877 = vmul.f32 %v2853, %v2874
    %v2878 = vmul.f32 %v2854, %v2875
    %v2879 = vmul.f32 %v2855, %v2876
    %2880 = vst [vmem:[%s9] sm:$0xff] %v2877
    %2881 = vst [vmem:[%s9 + $0x8] sm:$0xff] %v2878
    %2882 = vst [vmem:[%s9 + $0x10] sm:$0xff] %v2879
    // Predicated region
    $region42: #{shuffle_plug_padding2_forward.1} parent=1 // pred_check
      _
    $region43: #{shuffle_plug_padding2_forward.1} parent=1 // pred_check_branch
      %2884 = sbr.rel (0) target = $region45
    $region44: #{shuffle_plug_padding2_forward.1} parent=1 // pred_region
      _
    $region45: #{shuffle_plug_padding2_forward.1} parent=1 // pred_fallthru
      _
    // Predicated region
    $region46: #{shuffle_plug_padding2_forward.1} parent=1 // pred_check
      _
    $region47: #{shuffle_plug_padding2_forward.1} parent=1 // pred_check_branch
      %2886 = sbr.rel (0) target = $region49
    $region48: #{shuffle_plug_padding2_forward.1} parent=1 // pred_region
      _
    $region49: #{shuffle_plug_padding2_forward.1} parent=1 // pred_fallthru
      _
    %2887 = vsyncpa [#allocation3], 1

</llo_original>
